<compile_context>
chip_gen: v5e
topology: v5e:2x2
jax: 0.10.0
libtpu: 0.0.40
codegen_flags: <defaults>
</compile_context>

<pallas_src>
import jax
import jax.numpy as jnp
from jax import lax
from jax.experimental import pallas as pl
from jax.experimental.pallas import tpu as pltpu

BN_EPS = 1e-5
LANE = 128


def _round_up(x, m):
    return (x + m - 1) // m * m


def _pad_features(f):
    """Pad feature width to 128; to a multiple of 256 when wide enough (v6e/v7x MXU)."""
    fp = _round_up(f, LANE)
    if fp >= 256:
        fp = _round_up(f, 256)
    return fp


def _choose_tm(m, cap=512):
    """M-tile: as large as possible, but keep >=2 grid steps for v7x megacore."""
    mp = _round_up(m, 16)
    tm = min(cap, mp)
    if tm == mp and mp >= 64:
        tm = _round_up(mp // 2, 16)
    return tm


# ----------------------------- Pallas kernels ------------------------------

def _mm_stats_kernel(a_ref, b_ref, o_ref, st_ref):
    """out = a @ b (bf16 in, f32 MXU acc) + fused per-column sum / sum-of-sq.

    st block: rows 0-3 hold the column sums, rows 4-7 the column sums of
    squares (one lane-dense (8, Fp) store instead of two broadcast outputs).
    """
    acc = jnp.dot(a_ref[...], b_ref[...], preferred_element_type=jnp.float32)
    o_ref[...] = acc.astype(o_ref.dtype)
    col_sum = jnp.sum(acc, axis=0, keepdims=True)            # (1, Fp)
    col_ssq = jnp.sum(acc * acc, axis=0, keepdims=True)      # (1, Fp)
    rows = lax.broadcasted_iota(jnp.int32, (8, acc.shape[1]), 0)
    st_ref[...] = jnp.where(rows < 4,
                            jnp.broadcast_to(col_sum, (8, acc.shape[1])),
                            jnp.broadcast_to(col_ssq, (8, acc.shape[1])))


def _mm_bias_tanh_kernel(a_ref, b_ref, bias_ref, o_ref):
    """out = tanh(a @ b + bias) — fused epilogue for the final conv layer."""
    acc = jnp.dot(a_ref[...], b_ref[...], preferred_element_type=jnp.float32)
    o_ref[...] = jnp.tanh(acc + bias_ref[...]).astype(o_ref.dtype)


def _affine_relu_kernel(x_ref, s_ref, b_ref, o_ref):
    """out = relu(x * scale + shift) — BatchNorm apply + ReLU (f32 math)."""
    y = x_ref[...].astype(jnp.float32) * s_ref[...] + b_ref[...]
    o_ref[...] = jnp.maximum(y, 0.0).astype(o_ref.dtype)


# ------------------------------- wrappers -----------------------------------

def pallas_matmul_stats(a, b, tm_cap=512, out_dtype=jnp.bfloat16):
    """(M, K) @ (K, Fp), Fp % 128 == 0.  Returns (out[Mp, Fp], colsum, colssq)."""
    m, k = a.shape
    kb, fp = b.shape
    assert k == kb and fp % LANE == 0
    tm = _choose_tm(m, tm_cap)
    mp = _round_up(m, tm)
    nt = mp // tm
    a_p = a if mp == m else jnp.pad(a, ((0, mp - m), (0, 0)))
    out, st = pl.pallas_call(
        _mm_stats_kernel,
        out_shape=(jax.ShapeDtypeStruct((mp, fp), out_dtype),
                   jax.ShapeDtypeStruct((nt * 8, fp), jnp.float32)),
        grid=(nt,),
        in_specs=[pl.BlockSpec((tm, k), lambda i: (i, 0)),
                  pl.BlockSpec((k, fp), lambda i: (0, 0))],
        out_specs=(pl.BlockSpec((tm, fp), lambda i: (i, 0)),
                   pl.BlockSpec((8, fp), lambda i: (i, 0))),
        compiler_params=pltpu.CompilerParams(
            dimension_semantics=("parallel",)),
    )(a_p, b)
    st = st.reshape(nt, 8, fp)
    colsum = st[:, 0, :].sum(axis=0)          # tiny cross-tile reduction in XLA
    colssq = st[:, 4, :].sum(axis=0)
    return out, colsum, colssq


def pallas_matmul_bias_tanh(a, b, bias_row, tm_cap=512, out_dtype=jnp.bfloat16):
    """tanh((M, K) @ (K, Fp) + bias) with the epilogue fused into the matmul."""
    m, k = a.shape
    kb, fp = b.shape
    assert k == kb and fp % LANE == 0
    tm = _choose_tm(m, tm_cap)
    mp = _round_up(m, tm)
    a_p = a if mp == m else jnp.pad(a, ((0, mp - m), (0, 0)))
    return pl.pallas_call(
        _mm_bias_tanh_kernel,
        out_shape=jax.ShapeDtypeStruct((mp, fp), out_dtype),
        grid=(mp // tm,),
        in_specs=[pl.BlockSpec((tm, k), lambda i: (i, 0)),
                  pl.BlockSpec((k, fp), lambda i: (0, 0)),
                  pl.BlockSpec((1, fp), lambda i: (0, 0))],
        out_specs=pl.BlockSpec((tm, fp), lambda i: (i, 0)),
        compiler_params=pltpu.CompilerParams(
            dimension_semantics=("parallel",)),
    )(a_p, b, bias_row)


def pallas_affine_relu(x, scale_row, shift_row, tm_cap=512, out_dtype=jnp.bfloat16):
    """y = relu(x * scale + shift); x is (M, Fp) lane-dense."""
    m, fp = x.shape
    assert fp % LANE == 0
    tm = _choose_tm(m, tm_cap)
    mp = _round_up(m, tm)
    x_p = x if mp == m else jnp.pad(x, ((0, mp - m), (0, 0)))
    return pl.pallas_call(
        _affine_relu_kernel,
        out_shape=jax.ShapeDtypeStruct((mp, fp), out_dtype),
        grid=(mp // tm,),
        in_specs=[pl.BlockSpec((tm, fp), lambda i: (i, 0)),
                  pl.BlockSpec((1, fp), lambda i: (0, 0)),
                  pl.BlockSpec((1, fp), lambda i: (0, 0))],
        out_specs=pl.BlockSpec((tm, fp), lambda i: (i, 0)),
        compiler_params=pltpu.CompilerParams(
            dimension_semantics=("parallel",)),
    )(x_p, scale_row, shift_row)


# ----------------------- plain-JAX glue (layout only) -----------------------
# TODO(synk): im2col extraction / parity interleave stay as XLA layout glue;
# moving them into the Pallas pipeline needs a manual halo-DMA gather.

def _im2col3x3(x_nhwc):
    """Shared stride-1 3x3 im2col (pad 1); K ordered (dy, dx, cin)."""
    n, h, w, c = x_nhwc.shape
    xp = jnp.pad(x_nhwc, ((0, 0), (1, 1), (1, 1), (0, 0)))
    cols = [xp[:, dy:dy + h, dx:dx + w, :] for dy in range(3) for dx in range(3)]
    patches = jnp.stack(cols, axis=3)                      # (N, H, W, 9, C)
    return patches.reshape(n * h * w, 9 * c)


def _merged_weight(w):
    """Merged matrix for ConvTranspose2d(5, 2, pad=2, out_pad=1).

    w: (Cin, Cout, 5, 5) PyTorch layout.  Rows ordered (dy, dx, cin) matching
    `_im2col3x3`; columns ordered (parity p = 2*ry + rx, cout).  Output pixel
    (2i+ry, 2j+rx) uses tap w[..., ky=ry+2-2dy, kx=rx+2-2dx] (zero if invalid).
    """
    cin, cout, kh, kw = w.shape
    taps = []
    for dy in (-1, 0, 1):
        for dx in (-1, 0, 1):
            per_par = []
            for ry in (0, 1):
                for rx in (0, 1):
                    ky = ry + 2 - 2 * dy
                    kx = rx + 2 - 2 * dx
                    if 0 <= ky < kh and 0 <= kx < kw:
                        per_par.append(w[:, :, ky, kx])
                    else:
                        per_par.append(jnp.zeros((cin, cout), w.dtype))
            taps.append(jnp.stack(per_par, axis=1))        # (Cin, 4, Cout)
    wmat = jnp.stack(taps, axis=0)                         # (9, Cin, 4, Cout)
    return wmat.reshape(9 * cin, 4 * cout)


def _interleave(y2, n, h, w, cout):
    """(N*H*W, 4*Cout) parity-major -> full-resolution NHWC (N, 2H, 2W, Cout)."""
    y = y2.reshape(n, h, w, 2, 2, cout)                    # (..., ry, rx, c)
    y = y.transpose(0, 1, 3, 2, 4, 5)                      # (n, h, ry, w, rx, c)
    return y.reshape(n, 2 * h, 2 * w, cout)


def _bn_scale_shift(colsum, colssq, count, gamma, beta):
    """Training-mode BN (biased variance) from fused sums."""
    mean = colsum / count
    var = jnp.maximum(colssq / count - mean * mean, 0.0)
    scale = gamma * lax.rsqrt(var + BN_EPS)
    shift = beta - mean * scale
    return scale, shift


def dconv_block(x_nhwc, w_packed, cout, gamma=None, beta=None, bias_row=None,
                act="bn_relu"):
    """ConvTranspose2d(5, 2, pad=2, out_pad=1) as ONE matmul over a 3x3 im2col."""
    n, h, w, cin = x_nhwc.shape
    m = n * h * w
    kp, fp = w_packed.shape
    patches = _im2col3x3(x_nhwc)                           # (M, 9*Cin) bf16
    if kp != 9 * cin:
        patches = jnp.pad(patches, ((0, 0), (0, kp - 9 * cin)))
    if act == "bias_tanh":
        out = pallas_matmul_bias_tanh(patches, w_packed, bias_row)
    else:
        out, colsum, colssq = pallas_matmul_stats(patches, w_packed)
        cs = colsum[:4 * cout].reshape(4, cout).sum(axis=0)
        css = colssq[:4 * cout].reshape(4, cout).sum(axis=0)
        scale, shift = _bn_scale_shift(cs, css, jnp.float32(4 * m), gamma, beta)
        scale4 = jnp.pad(jnp.tile(scale, 4), (0, fp - 4 * cout)).reshape(1, fp)
        shift4 = jnp.pad(jnp.tile(shift, 4), (0, fp - 4 * cout)).reshape(1, fp)
        out = pallas_affine_relu(out, scale4.astype(jnp.float32),
                                 shift4.astype(jnp.float32))
    return _interleave(out[:m, :4 * cout], n, h, w, cout)


def l1_block(packed, x, dim):
    """Linear(in_dim, dim*8*4*4, bias=False) + BatchNorm1d + ReLU -> NHWC (N,4,4,dim*8)."""
    n = x.shape[0]
    wp = packed["l1_w"]                       # (in_dim_pad, Fp) bf16
    kp, fp = wp.shape
    f1 = dim * 8 * 16
    a = x.astype(jnp.bfloat16)
    if kp != x.shape[1]:
        a = jnp.pad(a, ((0, 0), (0, kp - x.shape[1])))
    out, colsum, colssq = pallas_matmul_stats(a, wp)
    scale, shift = _bn_scale_shift(colsum[:f1], colssq[:f1], jnp.float32(n),
                                   packed["l1_gamma"], packed["l1_beta"])
    scale = jnp.pad(scale, (0, fp - f1)).reshape(1, fp)
    shift = jnp.pad(shift, (0, fp - f1)).reshape(1, fp)
    y = pallas_affine_relu(out, scale, shift)
    y = y[:n, :f1].reshape(n, dim * 8, 4, 4)  # PyTorch .view(N, C, 4, 4)
    return y.transpose(0, 2, 3, 1)            # NHWC


# ----------------------------- model ----------------------------------------

def init_params(key, in_dim, dim):
    """Raw parameters in PyTorch layout / dtype (matches weights_init)."""
    ks = jax.random.split(key, 12)
    p = {}
    feat = dim * 8 * 4 * 4
    p["l1_w"] = 0.02 * jax.random.normal(ks[0], (in_dim, feat), jnp.float32)
    p["l1_gamma"] = 1.0 + 0.02 * jax.random.normal(ks[1], (feat,), jnp.float32)
    p["l1_beta"] = jnp.zeros((feat,), jnp.float32)
    chans = [dim * 8, dim * 4, dim * 2, dim, 3]
    for i in range(4):
        cin, cout = chans[i], chans[i + 1]
        p[f"conv{i}_w"] = 0.02 * jax.random.normal(
            ks[2 + 2 * i], (cin, cout, 5, 5), jnp.float32)   # ConvTranspose layout
        if i < 3:
            p[f"bn{i}_gamma"] = 1.0 + 0.02 * jax.random.normal(
                ks[3 + 2 * i], (cout,), jnp.float32)
            p[f"bn{i}_beta"] = jnp.zeros((cout,), jnp.float32)
    p["conv3_b"] = 0.02 * jax.random.normal(ks[11], (3,), jnp.float32)
    return p


def pack_params(params, in_dim, dim):
    """One-time conversion to matmul-ready (merged, padded, bf16) matrices."""
    pk = {}
    feat = dim * 8 * 16
    kp = _round_up(in_dim, 16)
    fp = _pad_features(feat)
    pk["l1_w"] = jnp.pad(params["l1_w"],
                         ((0, kp - in_dim), (0, fp - feat))).astype(jnp.bfloat16)
    pk["l1_gamma"] = params["l1_gamma"]
    pk["l1_beta"] = params["l1_beta"]
    chans = [dim * 8, dim * 4, dim * 2, dim, 3]
    for i in range(4):
        cin, cout = chans[i], chans[i + 1]
        wm = _merged_weight(params[f"conv{i}_w"])            # (9*Cin, 4*Cout)
        kpi = _round_up(9 * cin, 16)
        fpi = _pad_features(4 * cout)
        pk[f"conv{i}_w"] = jnp.pad(
            wm, ((0, kpi - 9 * cin), (0, fpi - 4 * cout))).astype(jnp.bfloat16)
        if i < 3:
            pk[f"bn{i}_gamma"] = params[f"bn{i}_gamma"]
            pk[f"bn{i}_beta"] = params[f"bn{i}_beta"]
    fpi3 = _pad_features(12)
    pk["conv3_b"] = jnp.pad(jnp.tile(params["conv3_b"], 4),
                            (0, fpi3 - 12)).astype(jnp.float32).reshape(1, fpi3)
    return pk


def generator_forward(packed, x, dim):
    chans = [dim * 8, dim * 4, dim * 2, dim, 3]
    y = l1_block(packed, x, dim)                             # (N, 4, 4, dim*8)
    for i in range(3):
        y = dconv_block(y, packed[f"conv{i}_w"], chans[i + 1],
                        gamma=packed[f"bn{i}_gamma"],
                        beta=packed[f"bn{i}_beta"], act="bn_relu")
    y = dconv_block(y, packed["conv3_w"], 3, bias_row=packed["conv3_b"],
                    act="bias_tanh")                         # (N, 64, 64, 3) bf16
    return y.astype(jnp.float32).transpose(0, 3, 1, 2)       # NCHW at boundary


# ------------------------- pure-JAX f32 references ---------------------------

def _conv_transpose_ref(x_nhwc, w, bias=None):
    """PyTorch ConvTranspose2d(5, 2, pad=2, out_pad=1) via dilated conv (f32)."""
    out = lax.conv_general_dilated(
        x_nhwc, jnp.flip(w, (2, 3)),
        window_strides=(1, 1), padding=((2, 3), (2, 3)),
        lhs_dilation=(2, 2), rhs_dilation=(1, 1),
        dimension_numbers=("NHWC", "IOHW", "NHWC"),
        precision=lax.Precision.HIGHEST)
    if bias is not None:
        out = out + bias
    return out


def _merged_conv_f32(x_nhwc, w):
    """Merged-parity decomposition in plain f32 (no Pallas) for exact checking."""
    n, h, wd, _ = x_nhwc.shape
    cout = w.shape[1]
    out = jnp.dot(_im2col3x3(x_nhwc), _merged_weight(w),
                  precision=lax.Precision.HIGHEST)
    return _interleave(out, n, h, wd, cout)


def reference_forward(params, x, dim):
    """Full-precision reference of the PyTorch Generator forward (training-mode BN)."""
    n = x.shape[0]
    y = jnp.dot(x, params["l1_w"], precision=lax.Precision.HIGHEST)
    mean, var = y.mean(axis=0), y.var(axis=0)
    y = jnp.maximum((y - mean) * params["l1_gamma"] * lax.rsqrt(var + BN_EPS)
                    + params["l1_beta"], 0.0)
    y = y.reshape(n, dim * 8, 4, 4).transpose(0, 2, 3, 1)
    for i in range(3):
        y = _conv_transpose_ref(y, params[f"conv{i}_w"])
        mean, var = y.mean(axis=(0, 1, 2)), y.var(axis=(0, 1, 2))
        y = jnp.maximum((y - mean) * params[f"bn{i}_gamma"] * lax.rsqrt(var + BN_EPS)
                        + params[f"bn{i}_beta"], 0.0)
    y = jnp.tanh(_conv_transpose_ref(y, params["conv3_w"], params["conv3_b"]))
    return y.transpose(0, 3, 1, 2)


if __name__ == "__main__":
    key = jax.random.PRNGKey(0)
    k_param, k_x, k_t1, k_t2 = jax.random.split(key, 4)
    batch, in_dim, dim = 2, 32, 8       # small dim; output is still (N, 3, 64, 64)
    params = init_params(k_param, in_dim, dim)
    packed = pack_params(params, in_dim, dim)   # pre-packed bf16 matmul weights
    x = jax.random.normal(k_x, (batch, in_dim), jnp.float32)

    # Exact f32 check of the merged-parity ConvTranspose2d decomposition.
    xt = jax.random.normal(k_t1, (2, 4, 6, 8), jnp.float32)
    wt = 0.1 * jax.random.normal(k_t2, (8, 4, 5, 5), jnp.float32)
    dec_err = float(jnp.max(jnp.abs(_merged_conv_f32(xt, wt)
                                    - _conv_transpose_ref(xt, wt))))
    assert dec_err < 2e-4, dec_err

    # Run the Pallas generator and compare against the f32 reference.
    fwd = jax.jit(lambda p, z: generator_forward(p, z, dim))
    y = jax.block_until_ready(fwd(packed, x))
    assert y.shape == (batch, 3, 64, 64), y.shape
    assert bool(jnp.all(jnp.isfinite(y)))
    assert bool(jnp.all(jnp.abs(y) <= 1.0 + 1e-5))           # tanh range
    y_ref = jax.jit(lambda p, z: reference_forward(p, z, dim))(params, x)
    max_diff = float(jnp.max(jnp.abs(y - y_ref)))            # bf16 vs f32 path
    assert max_diff < 0.1, max_diff
    print("KERNEL_OK")
</pallas_src>

<mosaic_0001>
module attributes {stable_mosaic.version = 11 : i64} {
  func.func @_mm_stats_kernel(%arg0: i32, %arg1: memref<16x32xbf16, #tpu.memory_space<vmem>>, %arg2: memref<32x1024xbf16, #tpu.memory_space<vmem>>, %arg3: memref<16x1024xbf16, #tpu.memory_space<vmem>>, %arg4: memref<8x1024xf32, #tpu.memory_space<vmem>>) attributes {dimension_semantics = [#tpu.dimension_semantics<parallel>], iteration_bounds = array<i64: 1>, scalar_prefetch = 0 : i64, scratch_operands = 0 : i64, tpu.core_type = #tpu.core_type<tc>, window_params = [{transform_indices = @transform_0, window_bounds = array<i64: 16, 32>}, {pipeline_mode = #tpu.pipeline_mode<synchronous>, transform_indices = @transform_1, window_bounds = array<i64: 32, 1024>}, {transform_indices = @transform_2, window_bounds = array<i64: 16, 1024>}, {transform_indices = @transform_3, window_bounds = array<i64: 8, 1024>}]} {
    %c0 = arith.constant 0 : index
    %c0_0 = arith.constant 0 : index
    %0 = vector.load %arg1[%c0, %c0_0] : memref<16x32xbf16, #tpu.memory_space<vmem>>, vector<16x32xbf16>
    %c0_1 = arith.constant 0 : index
    %c0_2 = arith.constant 0 : index
    %1 = vector.load %arg2[%c0_1, %c0_2] : memref<32x1024xbf16, #tpu.memory_space<vmem>>, vector<32x1024xbf16>
    %cst = arith.constant dense<0.000000e+00> : vector<16x1024xf32>
    %2 = tpu.matmul %0, %1, %cst {dimension_numbers = #tpu.dot_dimension_numbers<[1], [0], [0], [1], [0, 0, 1, 1], [], []>} : vector<16x32xbf16>, vector<32x1024xbf16>, vector<16x1024xf32> -> vector<16x1024xf32>
    %3 = arith.truncf %2 : vector<16x1024xf32> to vector<16x1024xbf16>
    %c0_3 = arith.constant 0 : index
    %c0_4 = arith.constant 0 : index
    %4 = vector.load %arg3[%c0_3, %c0_4] : memref<16x1024xbf16, #tpu.memory_space<vmem>>, vector<16x1024xbf16>
    tpu.vector_store %arg3[%c0_3, %c0_4], %3 {strides = array<i32>} : memref<16x1024xbf16, #tpu.memory_space<vmem>>, vector<16x1024xbf16>,
    %cst_5 = arith.constant dense<0.000000e+00> : vector<1024xf32>
    %5 = vector.multi_reduction <add>, %2, %cst_5 [0] : vector<16x1024xf32> to vector<1024xf32>
    %6 = vector.shape_cast %5 : vector<1024xf32> to vector<1x1024xf32>
    %7 = arith.mulf %2, %2 : vector<16x1024xf32>
    %cst_6 = arith.constant dense<0.000000e+00> : vector<1024xf32>
    %8 = vector.multi_reduction <add>, %7, %cst_6 [0] : vector<16x1024xf32> to vector<1024xf32>
    %9 = vector.shape_cast %8 : vector<1024xf32> to vector<1x1024xf32>
    %10 = tpu.iota {dimensions = array<i32: 0>} : vector<8x1024xi32>
    %c4_i32 = arith.constant 4 : i32
    %11 = vector.broadcast %c4_i32 : i32 to vector<8x1024xi32>
    %12 = arith.cmpi slt, %10, %11 : vector<8x1024xi32>
    %13 = vector.shape_cast %6 : vector<1x1024xf32> to vector<1x1024xf32>
    %14 = vector.broadcast %13 : vector<1x1024xf32> to vector<8x1024xf32>
    %15 = vector.shape_cast %9 : vector<1x1024xf32> to vector<1x1024xf32>
    %16 = vector.broadcast %15 : vector<1x1024xf32> to vector<8x1024xf32>
    %17 = arith.select %12, %14, %16 : vector<8x1024xi1>, vector<8x1024xf32>
    %c0_7 = arith.constant 0 : index
    %c0_8 = arith.constant 0 : index
    %18 = vector.load %arg4[%c0_7, %c0_8] : memref<8x1024xf32, #tpu.memory_space<vmem>>, vector<8x1024xf32>
    tpu.vector_store %arg4[%c0_7, %c0_8], %17 {strides = array<i32>} : memref<8x1024xf32, #tpu.memory_space<vmem>>, vector<8x1024xf32>,
    return
  }
  func.func @transform_0(%arg0: i32) -> (i32, i32) {
    %c0_i32 = arith.constant 0 : i32
    %c0_i32_0 = arith.constant 0 : i32
    return %arg0, %c0_i32 : i32, i32
  }
  func.func @transform_1(%arg0: i32) -> (i32, i32) {
    %c0_i32 = arith.constant 0 : i32
    %c0_i32_0 = arith.constant 0 : i32
    %c0_i32_1 = arith.constant 0 : i32
    return %c0_i32, %c0_i32_0 : i32, i32
  }
  func.func @transform_2(%arg0: i32) -> (i32, i32) {
    %c0_i32 = arith.constant 0 : i32
    %c0_i32_0 = arith.constant 0 : i32
    return %arg0, %c0_i32 : i32, i32
  }
  func.func @transform_3(%arg0: i32) -> (i32, i32) {
    %c0_i32 = arith.constant 0 : i32
    %c0_i32_0 = arith.constant 0 : i32
    return %arg0, %c0_i32 : i32, i32
  }
}

module attributes {stable_mosaic.version = 11 : i64} {
  func.func @_affine_relu_kernel(%arg0: i32, %arg1: memref<16x1024xbf16, #tpu.memory_space<vmem>>, %arg2: memref<1x1024xf32, #tpu.memory_space<vmem>>, %arg3: memref<1x1024xf32, #tpu.memory_space<vmem>>, %arg4: memref<16x1024xbf16, #tpu.memory_space<vmem>>) attributes {dimension_semantics = [#tpu.dimension_semantics<parallel>], iteration_bounds = array<i64: 1>, scalar_prefetch = 0 : i64, scratch_operands = 0 : i64, tpu.core_type = #tpu.core_type<tc>, window_params = [{transform_indices = @transform_0, window_bounds = array<i64: 16, 1024>}, {pipeline_mode = #tpu.pipeline_mode<synchronous>, transform_indices = @transform_1, window_bounds = array<i64: 1, 1024>}, {pipeline_mode = #tpu.pipeline_mode<synchronous>, transform_indices = @transform_2, window_bounds = array<i64: 1, 1024>}, {transform_indices = @transform_3, window_bounds = array<i64: 16, 1024>}]} {
    %c0 = arith.constant 0 : index
    %c0_0 = arith.constant 0 : index
    %0 = vector.load %arg1[%c0, %c0_0] : memref<16x1024xbf16, #tpu.memory_space<vmem>>, vector<16x1024xbf16>
    %1 = arith.extf %0 : vector<16x1024xbf16> to vector<16x1024xf32>
    %c0_1 = arith.constant 0 : index
    %c0_2 = arith.constant 0 : index
    %2 = vector.load %arg2[%c0_1, %c0_2] : memref<1x1024xf32, #tpu.memory_space<vmem>>, vector<1x1024xf32>
    %3 = vector.broadcast %2 : vector<1x1024xf32> to vector<16x1024xf32>
    %4 = arith.mulf %1, %3 : vector<16x1024xf32>
    %c0_3 = arith.constant 0 : index
    %c0_4 = arith.constant 0 : index
    %5 = vector.load %arg3[%c0_3, %c0_4] : memref<1x1024xf32, #tpu.memory_space<vmem>>, vector<1x1024xf32>
    %6 = vector.broadcast %5 : vector<1x1024xf32> to vector<16x1024xf32>
    %7 = arith.addf %4, %6 : vector<16x1024xf32>
    %cst = arith.constant 0.000000e+00 : f32
    %8 = vector.broadcast %cst : f32 to vector<16x1024xf32>
    %9 = arith.maximumf %7, %8 : vector<16x1024xf32>
    %10 = arith.truncf %9 : vector<16x1024xf32> to vector<16x1024xbf16>
    %c0_5 = arith.constant 0 : index
    %c0_6 = arith.constant 0 : index
    %11 = vector.load %arg4[%c0_5, %c0_6] : memref<16x1024xbf16, #tpu.memory_space<vmem>>, vector<16x1024xbf16>
    tpu.vector_store %arg4[%c0_5, %c0_6], %10 {strides = array<i32>} : memref<16x1024xbf16, #tpu.memory_space<vmem>>, vector<16x1024xbf16>,
    return
  }
  func.func @transform_0(%arg0: i32) -> (i32, i32) {
    %c0_i32 = arith.constant 0 : i32
    %c0_i32_0 = arith.constant 0 : i32
    return %arg0, %c0_i32 : i32, i32
  }
  func.func @transform_1(%arg0: i32) -> (i32, i32) {
    %c0_i32 = arith.constant 0 : i32
    %c0_i32_0 = arith.constant 0 : i32
    %c0_i32_1 = arith.constant 0 : i32
    return %c0_i32, %c0_i32_0 : i32, i32
  }
  func.func @transform_2(%arg0: i32) -> (i32, i32) {
    %c0_i32 = arith.constant 0 : i32
    %c0_i32_0 = arith.constant 0 : i32
    %c0_i32_1 = arith.constant 0 : i32
    return %c0_i32, %c0_i32_0 : i32, i32
  }
  func.func @transform_3(%arg0: i32) -> (i32, i32) {
    %c0_i32 = arith.constant 0 : i32
    %c0_i32_0 = arith.constant 0 : i32
    return %arg0, %c0_i32 : i32, i32
  }
}

module attributes {stable_mosaic.version = 11 : i64} {
  func.func @_mm_stats_kernel(%arg0: i32, %arg1: memref<32x576xbf16, #tpu.memory_space<vmem>>, %arg2: memref<576x128xbf16, #tpu.memory_space<vmem>>, %arg3: memref<32x128xbf16, #tpu.memory_space<vmem>>, %arg4: memref<8x128xf32, #tpu.memory_space<vmem>>) attributes {dimension_semantics = [#tpu.dimension_semantics<parallel>], iteration_bounds = array<i64: 1>, scalar_prefetch = 0 : i64, scratch_operands = 0 : i64, tpu.core_type = #tpu.core_type<tc>, window_params = [{transform_indices = @transform_0, window_bounds = array<i64: 32, 576>}, {pipeline_mode = #tpu.pipeline_mode<synchronous>, transform_indices = @transform_1, window_bounds = array<i64: 576, 128>}, {transform_indices = @transform_2, window_bounds = array<i64: 32, 128>}, {transform_indices = @transform_3, window_bounds = array<i64: 8, 128>}]} {
    %c0 = arith.constant 0 : index
    %c0_0 = arith.constant 0 : index
    %0 = vector.load %arg1[%c0, %c0_0] : memref<32x576xbf16, #tpu.memory_space<vmem>>, vector<32x576xbf16>
    %c0_1 = arith.constant 0 : index
    %c0_2 = arith.constant 0 : index
    %1 = vector.load %arg2[%c0_1, %c0_2] : memref<576x128xbf16, #tpu.memory_space<vmem>>, vector<576x128xbf16>
    %cst = arith.constant dense<0.000000e+00> : vector<32x128xf32>
    %2 = tpu.matmul %0, %1, %cst {dimension_numbers = #tpu.dot_dimension_numbers<[1], [0], [0], [1], [0, 0, 1, 1], [], []>} : vector<32x576xbf16>, vector<576x128xbf16>, vector<32x128xf32> -> vector<32x128xf32>
    %3 = arith.truncf %2 : vector<32x128xf32> to vector<32x128xbf16>
    %c0_3 = arith.constant 0 : index
    %c0_4 = arith.constant 0 : index
    %4 = vector.load %arg3[%c0_3, %c0_4] : memref<32x128xbf16, #tpu.memory_space<vmem>>, vector<32x128xbf16>
    tpu.vector_store %arg3[%c0_3, %c0_4], %3 {strides = array<i32>} : memref<32x128xbf16, #tpu.memory_space<vmem>>, vector<32x128xbf16>,
    %cst_5 = arith.constant dense<0.000000e+00> : vector<128xf32>
    %5 = vector.multi_reduction <add>, %2, %cst_5 [0] : vector<32x128xf32> to vector<128xf32>
    %6 = vector.shape_cast %5 : vector<128xf32> to vector<1x128xf32>
    %7 = arith.mulf %2, %2 : vector<32x128xf32>
    %cst_6 = arith.constant dense<0.000000e+00> : vector<128xf32>
    %8 = vector.multi_reduction <add>, %7, %cst_6 [0] : vector<32x128xf32> to vector<128xf32>
    %9 = vector.shape_cast %8 : vector<128xf32> to vector<1x128xf32>
    %10 = tpu.iota {dimensions = array<i32: 0>} : vector<8x128xi32>
    %c4_i32 = arith.constant 4 : i32
    %11 = vector.broadcast %c4_i32 : i32 to vector<8x128xi32>
    %12 = arith.cmpi slt, %10, %11 : vector<8x128xi32>
    %13 = vector.shape_cast %6 : vector<1x128xf32> to vector<1x128xf32>
    %14 = vector.broadcast %13 : vector<1x128xf32> to vector<8x128xf32>
    %15 = vector.shape_cast %9 : vector<1x128xf32> to vector<1x128xf32>
    %16 = vector.broadcast %15 : vector<1x128xf32> to vector<8x128xf32>
    %17 = arith.select %12, %14, %16 : vector<8x128xi1>, vector<8x128xf32>
    %c0_7 = arith.constant 0 : index
    %c0_8 = arith.constant 0 : index
    %18 = vector.load %arg4[%c0_7, %c0_8] : memref<8x128xf32, #tpu.memory_space<vmem>>, vector<8x128xf32>
    tpu.vector_store %arg4[%c0_7, %c0_8], %17 {strides = array<i32>} : memref<8x128xf32, #tpu.memory_space<vmem>>, vector<8x128xf32>,
    return
  }
  func.func @transform_0(%arg0: i32) -> (i32, i32) {
    %c0_i32 = arith.constant 0 : i32
    %c0_i32_0 = arith.constant 0 : i32
    return %arg0, %c0_i32 : i32, i32
  }
  func.func @transform_1(%arg0: i32) -> (i32, i32) {
    %c0_i32 = arith.constant 0 : i32
    %c0_i32_0 = arith.constant 0 : i32
    %c0_i32_1 = arith.constant 0 : i32
    return %c0_i32, %c0_i32_0 : i32, i32
  }
  func.func @transform_2(%arg0: i32) -> (i32, i32) {
    %c0_i32 = arith.constant 0 : i32
    %c0_i32_0 = arith.constant 0 : i32
    return %arg0, %c0_i32 : i32, i32
  }
  func.func @transform_3(%arg0: i32) -> (i32, i32) {
    %c0_i32 = arith.constant 0 : i32
    %c0_i32_0 = arith.constant 0 : i32
    return %arg0, %c0_i32 : i32, i32
  }
}

module attributes {stable_mosaic.version = 11 : i64} {
  func.func @_affine_relu_kernel(%arg0: i32, %arg1: memref<32x128xbf16, #tpu.memory_space<vmem>>, %arg2: memref<1x128xf32, #tpu.memory_space<vmem>>, %arg3: memref<1x128xf32, #tpu.memory_space<vmem>>, %arg4: memref<32x128xbf16, #tpu.memory_space<vmem>>) attributes {dimension_semantics = [#tpu.dimension_semantics<parallel>], iteration_bounds = array<i64: 1>, scalar_prefetch = 0 : i64, scratch_operands = 0 : i64, tpu.core_type = #tpu.core_type<tc>, window_params = [{transform_indices = @transform_0, window_bounds = array<i64: 32, 128>}, {pipeline_mode = #tpu.pipeline_mode<synchronous>, transform_indices = @transform_1, window_bounds = array<i64: 1, 128>}, {pipeline_mode = #tpu.pipeline_mode<synchronous>, transform_indices = @transform_2, window_bounds = array<i64: 1, 128>}, {transform_indices = @transform_3, window_bounds = array<i64: 32, 128>}]} {
    %c0 = arith.constant 0 : index
    %c0_0 = arith.constant 0 : index
    %0 = vector.load %arg1[%c0, %c0_0] : memref<32x128xbf16, #tpu.memory_space<vmem>>, vector<32x128xbf16>
    %1 = arith.extf %0 : vector<32x128xbf16> to vector<32x128xf32>
    %c0_1 = arith.constant 0 : index
    %c0_2 = arith.constant 0 : index
    %2 = vector.load %arg2[%c0_1, %c0_2] : memref<1x128xf32, #tpu.memory_space<vmem>>, vector<1x128xf32>
    %3 = vector.broadcast %2 : vector<1x128xf32> to vector<32x128xf32>
    %4 = arith.mulf %1, %3 : vector<32x128xf32>
    %c0_3 = arith.constant 0 : index
    %c0_4 = arith.constant 0 : index
    %5 = vector.load %arg3[%c0_3, %c0_4] : memref<1x128xf32, #tpu.memory_space<vmem>>, vector<1x128xf32>
    %6 = vector.broadcast %5 : vector<1x128xf32> to vector<32x128xf32>
    %7 = arith.addf %4, %6 : vector<32x128xf32>
    %cst = arith.constant 0.000000e+00 : f32
    %8 = vector.broadcast %cst : f32 to vector<32x128xf32>
    %9 = arith.maximumf %7, %8 : vector<32x128xf32>
    %10 = arith.truncf %9 : vector<32x128xf32> to vector<32x128xbf16>
    %c0_5 = arith.constant 0 : index
    %c0_6 = arith.constant 0 : index
    %11 = vector.load %arg4[%c0_5, %c0_6] : memref<32x128xbf16, #tpu.memory_space<vmem>>, vector<32x128xbf16>
    tpu.vector_store %arg4[%c0_5, %c0_6], %10 {strides = array<i32>} : memref<32x128xbf16, #tpu.memory_space<vmem>>, vector<32x128xbf16>,
    return
  }
  func.func @transform_0(%arg0: i32) -> (i32, i32) {
    %c0_i32 = arith.constant 0 : i32
    %c0_i32_0 = arith.constant 0 : i32
    return %arg0, %c0_i32 : i32, i32
  }
  func.func @transform_1(%arg0: i32) -> (i32, i32) {
    %c0_i32 = arith.constant 0 : i32
    %c0_i32_0 = arith.constant 0 : i32
    %c0_i32_1 = arith.constant 0 : i32
    return %c0_i32, %c0_i32_0 : i32, i32
  }
  func.func @transform_2(%arg0: i32) -> (i32, i32) {
    %c0_i32 = arith.constant 0 : i32
    %c0_i32_0 = arith.constant 0 : i32
    %c0_i32_1 = arith.constant 0 : i32
    return %c0_i32, %c0_i32_0 : i32, i32
  }
  func.func @transform_3(%arg0: i32) -> (i32, i32) {
    %c0_i32 = arith.constant 0 : i32
    %c0_i32_0 = arith.constant 0 : i32
    return %arg0, %c0_i32 : i32, i32
  }
}

module attributes {stable_mosaic.version = 11 : i64} {
  func.func @_mm_stats_kernel(%arg0: i32, %arg1: memref<64x288xbf16, #tpu.memory_space<vmem>>, %arg2: memref<288x128xbf16, #tpu.memory_space<vmem>>, %arg3: memref<64x128xbf16, #tpu.memory_space<vmem>>, %arg4: memref<8x128xf32, #tpu.memory_space<vmem>>) attributes {dimension_semantics = [#tpu.dimension_semantics<parallel>], iteration_bounds = array<i64: 2>, scalar_prefetch = 0 : i64, scratch_operands = 0 : i64, tpu.core_type = #tpu.core_type<tc>, window_params = [{transform_indices = @transform_0, window_bounds = array<i64: 64, 288>}, {pipeline_mode = #tpu.pipeline_mode<synchronous>, transform_indices = @transform_1, window_bounds = array<i64: 288, 128>}, {transform_indices = @transform_2, window_bounds = array<i64: 64, 128>}, {transform_indices = @transform_3, window_bounds = array<i64: 8, 128>}]} {
    %c0 = arith.constant 0 : index
    %c0_0 = arith.constant 0 : index
    %0 = vector.load %arg1[%c0, %c0_0] : memref<64x288xbf16, #tpu.memory_space<vmem>>, vector<64x288xbf16>
    %c0_1 = arith.constant 0 : index
    %c0_2 = arith.constant 0 : index
    %1 = vector.load %arg2[%c0_1, %c0_2] : memref<288x128xbf16, #tpu.memory_space<vmem>>, vector<288x128xbf16>
    %cst = arith.constant dense<0.000000e+00> : vector<64x128xf32>
    %2 = tpu.matmul %0, %1, %cst {dimension_numbers = #tpu.dot_dimension_numbers<[1], [0], [0], [1], [0, 0, 1, 1], [], []>} : vector<64x288xbf16>, vector<288x128xbf16>, vector<64x128xf32> -> vector<64x128xf32>
    %3 = arith.truncf %2 : vector<64x128xf32> to vector<64x128xbf16>
    %c0_3 = arith.constant 0 : index
    %c0_4 = arith.constant 0 : index
    %4 = vector.load %arg3[%c0_3, %c0_4] : memref<64x128xbf16, #tpu.memory_space<vmem>>, vector<64x128xbf16>
    tpu.vector_store %arg3[%c0_3, %c0_4], %3 {strides = array<i32>} : memref<64x128xbf16, #tpu.memory_space<vmem>>, vector<64x128xbf16>,
    %cst_5 = arith.constant dense<0.000000e+00> : vector<128xf32>
    %5 = vector.multi_reduction <add>, %2, %cst_5 [0] : vector<64x128xf32> to vector<128xf32>
    %6 = vector.shape_cast %5 : vector<128xf32> to vector<1x128xf32>
    %7 = arith.mulf %2, %2 : vector<64x128xf32>
    %cst_6 = arith.constant dense<0.000000e+00> : vector<128xf32>
    %8 = vector.multi_reduction <add>, %7, %cst_6 [0] : vector<64x128xf32> to vector<128xf32>
    %9 = vector.shape_cast %8 : vector<128xf32> to vector<1x128xf32>
    %10 = tpu.iota {dimensions = array<i32: 0>} : vector<8x128xi32>
    %c4_i32 = arith.constant 4 : i32
    %11 = vector.broadcast %c4_i32 : i32 to vector<8x128xi32>
    %12 = arith.cmpi slt, %10, %11 : vector<8x128xi32>
    %13 = vector.shape_cast %6 : vector<1x128xf32> to vector<1x128xf32>
    %14 = vector.broadcast %13 : vector<1x128xf32> to vector<8x128xf32>
    %15 = vector.shape_cast %9 : vector<1x128xf32> to vector<1x128xf32>
    %16 = vector.broadcast %15 : vector<1x128xf32> to vector<8x128xf32>
    %17 = arith.select %12, %14, %16 : vector<8x128xi1>, vector<8x128xf32>
    %c0_7 = arith.constant 0 : index
    %c0_8 = arith.constant 0 : index
    %18 = vector.load %arg4[%c0_7, %c0_8] : memref<8x128xf32, #tpu.memory_space<vmem>>, vector<8x128xf32>
    tpu.vector_store %arg4[%c0_7, %c0_8], %17 {strides = array<i32>} : memref<8x128xf32, #tpu.memory_space<vmem>>, vector<8x128xf32>,
    return
  }
  func.func @transform_0(%arg0: i32) -> (i32, i32) {
    %c0_i32 = arith.constant 0 : i32
    %c0_i32_0 = arith.constant 0 : i32
    return %arg0, %c0_i32 : i32, i32
  }
  func.func @transform_1(%arg0: i32) -> (i32, i32) {
    %c0_i32 = arith.constant 0 : i32
    %c0_i32_0 = arith.constant 0 : i32
    %c0_i32_1 = arith.constant 0 : i32
    return %c0_i32, %c0_i32_0 : i32, i32
  }
  func.func @transform_2(%arg0: i32) -> (i32, i32) {
    %c0_i32 = arith.constant 0 : i32
    %c0_i32_0 = arith.constant 0 : i32
    return %arg0, %c0_i32 : i32, i32
  }
  func.func @transform_3(%arg0: i32) -> (i32, i32) {
    %c0_i32 = arith.constant 0 : i32
    %c0_i32_0 = arith.constant 0 : i32
    return %arg0, %c0_i32 : i32, i32
  }
}

module attributes {stable_mosaic.version = 11 : i64} {
  func.func @_affine_relu_kernel(%arg0: i32, %arg1: memref<64x128xbf16, #tpu.memory_space<vmem>>, %arg2: memref<1x128xf32, #tpu.memory_space<vmem>>, %arg3: memref<1x128xf32, #tpu.memory_space<vmem>>, %arg4: memref<64x128xbf16, #tpu.memory_space<vmem>>) attributes {dimension_semantics = [#tpu.dimension_semantics<parallel>], iteration_bounds = array<i64: 2>, scalar_prefetch = 0 : i64, scratch_operands = 0 : i64, tpu.core_type = #tpu.core_type<tc>, window_params = [{transform_indices = @transform_0, window_bounds = array<i64: 64, 128>}, {pipeline_mode = #tpu.pipeline_mode<synchronous>, transform_indices = @transform_1, window_bounds = array<i64: 1, 128>}, {pipeline_mode = #tpu.pipeline_mode<synchronous>, transform_indices = @transform_2, window_bounds = array<i64: 1, 128>}, {transform_indices = @transform_3, window_bounds = array<i64: 64, 128>}]} {
    %c0 = arith.constant 0 : index
    %c0_0 = arith.constant 0 : index
    %0 = vector.load %arg1[%c0, %c0_0] : memref<64x128xbf16, #tpu.memory_space<vmem>>, vector<64x128xbf16>
    %1 = arith.extf %0 : vector<64x128xbf16> to vector<64x128xf32>
    %c0_1 = arith.constant 0 : index
    %c0_2 = arith.constant 0 : index
    %2 = vector.load %arg2[%c0_1, %c0_2] : memref<1x128xf32, #tpu.memory_space<vmem>>, vector<1x128xf32>
    %3 = vector.broadcast %2 : vector<1x128xf32> to vector<64x128xf32>
    %4 = arith.mulf %1, %3 : vector<64x128xf32>
    %c0_3 = arith.constant 0 : index
    %c0_4 = arith.constant 0 : index
    %5 = vector.load %arg3[%c0_3, %c0_4] : memref<1x128xf32, #tpu.memory_space<vmem>>, vector<1x128xf32>
    %6 = vector.broadcast %5 : vector<1x128xf32> to vector<64x128xf32>
    %7 = arith.addf %4, %6 : vector<64x128xf32>
    %cst = arith.constant 0.000000e+00 : f32
    %8 = vector.broadcast %cst : f32 to vector<64x128xf32>
    %9 = arith.maximumf %7, %8 : vector<64x128xf32>
    %10 = arith.truncf %9 : vector<64x128xf32> to vector<64x128xbf16>
    %c0_5 = arith.constant 0 : index
    %c0_6 = arith.constant 0 : index
    %11 = vector.load %arg4[%c0_5, %c0_6] : memref<64x128xbf16, #tpu.memory_space<vmem>>, vector<64x128xbf16>
    tpu.vector_store %arg4[%c0_5, %c0_6], %10 {strides = array<i32>} : memref<64x128xbf16, #tpu.memory_space<vmem>>, vector<64x128xbf16>,
    return
  }
  func.func @transform_0(%arg0: i32) -> (i32, i32) {
    %c0_i32 = arith.constant 0 : i32
    %c0_i32_0 = arith.constant 0 : i32
    return %arg0, %c0_i32 : i32, i32
  }
  func.func @transform_1(%arg0: i32) -> (i32, i32) {
    %c0_i32 = arith.constant 0 : i32
    %c0_i32_0 = arith.constant 0 : i32
    %c0_i32_1 = arith.constant 0 : i32
    return %c0_i32, %c0_i32_0 : i32, i32
  }
  func.func @transform_2(%arg0: i32) -> (i32, i32) {
    %c0_i32 = arith.constant 0 : i32
    %c0_i32_0 = arith.constant 0 : i32
    %c0_i32_1 = arith.constant 0 : i32
    return %c0_i32, %c0_i32_0 : i32, i32
  }
  func.func @transform_3(%arg0: i32) -> (i32, i32) {
    %c0_i32 = arith.constant 0 : i32
    %c0_i32_0 = arith.constant 0 : i32
    return %arg0, %c0_i32 : i32, i32
  }
}

module attributes {stable_mosaic.version = 11 : i64} {
  func.func @_mm_stats_kernel(%arg0: i32, %arg1: memref<256x144xbf16, #tpu.memory_space<vmem>>, %arg2: memref<144x128xbf16, #tpu.memory_space<vmem>>, %arg3: memref<256x128xbf16, #tpu.memory_space<vmem>>, %arg4: memref<8x128xf32, #tpu.memory_space<vmem>>) attributes {dimension_semantics = [#tpu.dimension_semantics<parallel>], iteration_bounds = array<i64: 2>, scalar_prefetch = 0 : i64, scratch_operands = 0 : i64, tpu.core_type = #tpu.core_type<tc>, window_params = [{transform_indices = @transform_0, window_bounds = array<i64: 256, 144>}, {pipeline_mode = #tpu.pipeline_mode<synchronous>, transform_indices = @transform_1, window_bounds = array<i64: 144, 128>}, {transform_indices = @transform_2, window_bounds = array<i64: 256, 128>}, {transform_indices = @transform_3, window_bounds = array<i64: 8, 128>}]} {
    %c0 = arith.constant 0 : index
    %c0_0 = arith.constant 0 : index
    %0 = vector.load %arg1[%c0, %c0_0] : memref<256x144xbf16, #tpu.memory_space<vmem>>, vector<256x144xbf16>
    %c0_1 = arith.constant 0 : index
    %c0_2 = arith.constant 0 : index
    %1 = vector.load %arg2[%c0_1, %c0_2] : memref<144x128xbf16, #tpu.memory_space<vmem>>, vector<144x128xbf16>
    %cst = arith.constant dense<0.000000e+00> : vector<256x128xf32>
    %2 = tpu.matmul %0, %1, %cst {dimension_numbers = #tpu.dot_dimension_numbers<[1], [0], [0], [1], [0, 0, 1, 1], [], []>} : vector<256x144xbf16>, vector<144x128xbf16>, vector<256x128xf32> -> vector<256x128xf32>
    %3 = arith.truncf %2 : vector<256x128xf32> to vector<256x128xbf16>
    %c0_3 = arith.constant 0 : index
    %c0_4 = arith.constant 0 : index
    %4 = vector.load %arg3[%c0_3, %c0_4] : memref<256x128xbf16, #tpu.memory_space<vmem>>, vector<256x128xbf16>
    tpu.vector_store %arg3[%c0_3, %c0_4], %3 {strides = array<i32>} : memref<256x128xbf16, #tpu.memory_space<vmem>>, vector<256x128xbf16>,
    %cst_5 = arith.constant dense<0.000000e+00> : vector<128xf32>
    %5 = vector.multi_reduction <add>, %2, %cst_5 [0] : vector<256x128xf32> to vector<128xf32>
    %6 = vector.shape_cast %5 : vector<128xf32> to vector<1x128xf32>
    %7 = arith.mulf %2, %2 : vector<256x128xf32>
    %cst_6 = arith.constant dense<0.000000e+00> : vector<128xf32>
    %8 = vector.multi_reduction <add>, %7, %cst_6 [0] : vector<256x128xf32> to vector<128xf32>
    %9 = vector.shape_cast %8 : vector<128xf32> to vector<1x128xf32>
    %10 = tpu.iota {dimensions = array<i32: 0>} : vector<8x128xi32>
    %c4_i32 = arith.constant 4 : i32
    %11 = vector.broadcast %c4_i32 : i32 to vector<8x128xi32>
    %12 = arith.cmpi slt, %10, %11 : vector<8x128xi32>
    %13 = vector.shape_cast %6 : vector<1x128xf32> to vector<1x128xf32>
    %14 = vector.broadcast %13 : vector<1x128xf32> to vector<8x128xf32>
    %15 = vector.shape_cast %9 : vector<1x128xf32> to vector<1x128xf32>
    %16 = vector.broadcast %15 : vector<1x128xf32> to vector<8x128xf32>
    %17 = arith.select %12, %14, %16 : vector<8x128xi1>, vector<8x128xf32>
    %c0_7 = arith.constant 0 : index
    %c0_8 = arith.constant 0 : index
    %18 = vector.load %arg4[%c0_7, %c0_8] : memref<8x128xf32, #tpu.memory_space<vmem>>, vector<8x128xf32>
    tpu.vector_store %arg4[%c0_7, %c0_8], %17 {strides = array<i32>} : memref<8x128xf32, #tpu.memory_space<vmem>>, vector<8x128xf32>,
    return
  }
  func.func @transform_0(%arg0: i32) -> (i32, i32) {
    %c0_i32 = arith.constant 0 : i32
    %c0_i32_0 = arith.constant 0 : i32
    return %arg0, %c0_i32 : i32, i32
  }
  func.func @transform_1(%arg0: i32) -> (i32, i32) {
    %c0_i32 = arith.constant 0 : i32
    %c0_i32_0 = arith.constant 0 : i32
    %c0_i32_1 = arith.constant 0 : i32
    return %c0_i32, %c0_i32_0 : i32, i32
  }
  func.func @transform_2(%arg0: i32) -> (i32, i32) {
    %c0_i32 = arith.constant 0 : i32
    %c0_i32_0 = arith.constant 0 : i32
    return %arg0, %c0_i32 : i32, i32
  }
  func.func @transform_3(%arg0: i32) -> (i32, i32) {
    %c0_i32 = arith.constant 0 : i32
    %c0_i32_0 = arith.constant 0 : i32
    return %arg0, %c0_i32 : i32, i32
  }
}

module attributes {stable_mosaic.version = 11 : i64} {
  func.func @_affine_relu_kernel(%arg0: i32, %arg1: memref<256x128xbf16, #tpu.memory_space<vmem>>, %arg2: memref<1x128xf32, #tpu.memory_space<vmem>>, %arg3: memref<1x128xf32, #tpu.memory_space<vmem>>, %arg4: memref<256x128xbf16, #tpu.memory_space<vmem>>) attributes {dimension_semantics = [#tpu.dimension_semantics<parallel>], iteration_bounds = array<i64: 2>, scalar_prefetch = 0 : i64, scratch_operands = 0 : i64, tpu.core_type = #tpu.core_type<tc>, window_params = [{transform_indices = @transform_0, window_bounds = array<i64: 256, 128>}, {pipeline_mode = #tpu.pipeline_mode<synchronous>, transform_indices = @transform_1, window_bounds = array<i64: 1, 128>}, {pipeline_mode = #tpu.pipeline_mode<synchronous>, transform_indices = @transform_2, window_bounds = array<i64: 1, 128>}, {transform_indices = @transform_3, window_bounds = array<i64: 256, 128>}]} {
    %c0 = arith.constant 0 : index
    %c0_0 = arith.constant 0 : index
    %0 = vector.load %arg1[%c0, %c0_0] : memref<256x128xbf16, #tpu.memory_space<vmem>>, vector<256x128xbf16>
    %1 = arith.extf %0 : vector<256x128xbf16> to vector<256x128xf32>
    %c0_1 = arith.constant 0 : index
    %c0_2 = arith.constant 0 : index
    %2 = vector.load %arg2[%c0_1, %c0_2] : memref<1x128xf32, #tpu.memory_space<vmem>>, vector<1x128xf32>
    %3 = vector.broadcast %2 : vector<1x128xf32> to vector<256x128xf32>
    %4 = arith.mulf %1, %3 : vector<256x128xf32>
    %c0_3 = arith.constant 0 : index
    %c0_4 = arith.constant 0 : index
    %5 = vector.load %arg3[%c0_3, %c0_4] : memref<1x128xf32, #tpu.memory_space<vmem>>, vector<1x128xf32>
    %6 = vector.broadcast %5 : vector<1x128xf32> to vector<256x128xf32>
    %7 = arith.addf %4, %6 : vector<256x128xf32>
    %cst = arith.constant 0.000000e+00 : f32
    %8 = vector.broadcast %cst : f32 to vector<256x128xf32>
    %9 = arith.maximumf %7, %8 : vector<256x128xf32>
    %10 = arith.truncf %9 : vector<256x128xf32> to vector<256x128xbf16>
    %c0_5 = arith.constant 0 : index
    %c0_6 = arith.constant 0 : index
    %11 = vector.load %arg4[%c0_5, %c0_6] : memref<256x128xbf16, #tpu.memory_space<vmem>>, vector<256x128xbf16>
    tpu.vector_store %arg4[%c0_5, %c0_6], %10 {strides = array<i32>} : memref<256x128xbf16, #tpu.memory_space<vmem>>, vector<256x128xbf16>,
    return
  }
  func.func @transform_0(%arg0: i32) -> (i32, i32) {
    %c0_i32 = arith.constant 0 : i32
    %c0_i32_0 = arith.constant 0 : i32
    return %arg0, %c0_i32 : i32, i32
  }
  func.func @transform_1(%arg0: i32) -> (i32, i32) {
    %c0_i32 = arith.constant 0 : i32
    %c0_i32_0 = arith.constant 0 : i32
    %c0_i32_1 = arith.constant 0 : i32
    return %c0_i32, %c0_i32_0 : i32, i32
  }
  func.func @transform_2(%arg0: i32) -> (i32, i32) {
    %c0_i32 = arith.constant 0 : i32
    %c0_i32_0 = arith.constant 0 : i32
    %c0_i32_1 = arith.constant 0 : i32
    return %c0_i32, %c0_i32_0 : i32, i32
  }
  func.func @transform_3(%arg0: i32) -> (i32, i32) {
    %c0_i32 = arith.constant 0 : i32
    %c0_i32_0 = arith.constant 0 : i32
    return %arg0, %c0_i32 : i32, i32
  }
}

module attributes {stable_mosaic.version = 11 : i64} {
  func.func @_mm_bias_tanh_kernel(%arg0: i32, %arg1: memref<512x80xbf16, #tpu.memory_space<vmem>>, %arg2: memref<80x128xbf16, #tpu.memory_space<vmem>>, %arg3: memref<1x128xf32, #tpu.memory_space<vmem>>, %arg4: memref<512x128xbf16, #tpu.memory_space<vmem>>) attributes {dimension_semantics = [#tpu.dimension_semantics<parallel>], iteration_bounds = array<i64: 4>, scalar_prefetch = 0 : i64, scratch_operands = 0 : i64, tpu.core_type = #tpu.core_type<tc>, window_params = [{transform_indices = @transform_0, window_bounds = array<i64: 512, 80>}, {pipeline_mode = #tpu.pipeline_mode<synchronous>, transform_indices = @transform_1, window_bounds = array<i64: 80, 128>}, {pipeline_mode = #tpu.pipeline_mode<synchronous>, transform_indices = @transform_2, window_bounds = array<i64: 1, 128>}, {transform_indices = @transform_3, window_bounds = array<i64: 512, 128>}]} {
    %c0 = arith.constant 0 : index
    %c0_0 = arith.constant 0 : index
    %0 = vector.load %arg1[%c0, %c0_0] : memref<512x80xbf16, #tpu.memory_space<vmem>>, vector<512x80xbf16>
    %c0_1 = arith.constant 0 : index
    %c0_2 = arith.constant 0 : index
    %1 = vector.load %arg2[%c0_1, %c0_2] : memref<80x128xbf16, #tpu.memory_space<vmem>>, vector<80x128xbf16>
    %cst = arith.constant dense<0.000000e+00> : vector<512x128xf32>
    %2 = tpu.matmul %0, %1, %cst {dimension_numbers = #tpu.dot_dimension_numbers<[1], [0], [0], [1], [0, 0, 1, 1], [], []>} : vector<512x80xbf16>, vector<80x128xbf16>, vector<512x128xf32> -> vector<512x128xf32>
    %c0_3 = arith.constant 0 : index
    %c0_4 = arith.constant 0 : index
    %3 = vector.load %arg3[%c0_3, %c0_4] : memref<1x128xf32, #tpu.memory_space<vmem>>, vector<1x128xf32>
    %4 = vector.broadcast %3 : vector<1x128xf32> to vector<512x128xf32>
    %5 = arith.addf %2, %4 : vector<512x128xf32>
    %6 = math.tanh %5 : vector<512x128xf32>
    %7 = arith.truncf %6 : vector<512x128xf32> to vector<512x128xbf16>
    %c0_5 = arith.constant 0 : index
    %c0_6 = arith.constant 0 : index
    %8 = vector.load %arg4[%c0_5, %c0_6] : memref<512x128xbf16, #tpu.memory_space<vmem>>, vector<512x128xbf16>
    tpu.vector_store %arg4[%c0_5, %c0_6], %7 {strides = array<i32>} : memref<512x128xbf16, #tpu.memory_space<vmem>>, vector<512x128xbf16>,
    return
  }
  func.func @transform_0(%arg0: i32) -> (i32, i32) {
    %c0_i32 = arith.constant 0 : i32
    %c0_i32_0 = arith.constant 0 : i32
    return %arg0, %c0_i32 : i32, i32
  }
  func.func @transform_1(%arg0: i32) -> (i32, i32) {
    %c0_i32 = arith.constant 0 : i32
    %c0_i32_0 = arith.constant 0 : i32
    %c0_i32_1 = arith.constant 0 : i32
    return %c0_i32, %c0_i32_0 : i32, i32
  }
  func.func @transform_2(%arg0: i32) -> (i32, i32) {
    %c0_i32 = arith.constant 0 : i32
    %c0_i32_0 = arith.constant 0 : i32
    %c0_i32_1 = arith.constant 0 : i32
    return %c0_i32, %c0_i32_0 : i32, i32
  }
  func.func @transform_3(%arg0: i32) -> (i32, i32) {
    %c0_i32 = arith.constant 0 : i32
    %c0_i32_0 = arith.constant 0 : i32
    return %arg0, %c0_i32 : i32, i32
  }
}

</mosaic_0001>

<llo_original>
// kernel: _lambda_.10
$region0: #{_lambda_.10}
  #allocation0 [shape = 'u32[]', space=smem, size = 0x4, offset = 0x4, fixed_abs, tag = 'smem constant byte address 0x4 - core index']
  #allocation1 [shape = 'u32[72,128]{1,0:T(1,128)}', space=vmem, size = 0x9000, scoped, tag = 'internal scratch']
  %s0 = inlined_call_operand.vmem [shape: bf16[16,1024], index: 0, kind: input, shape index: {}]
  %s1 = inlined_call_operand.vmem [shape: f32[1,1024], index: 1, kind: input, shape index: {}]
  %s2 = inlined_call_operand.vmem [shape: f32[1,1024], index: 2, kind: input, shape index: {}]
  %s3 = inlined_call_operand.vmem [shape: bf16[16,1024], index: 3, kind: output, shape index: {}]
  %s4 = sld [smem:[#allocation0]]
  $region22: #{_lambda_.10} parent=0
    _
  %s6 = ssub.s32 1, %s4
  %s7 = scalar_select 0, %s6, %s4
  // Predicated region
  $region2: #{_lambda_.10} parent=0 // pred_check
    _
  $region3: #{_lambda_.10} parent=0 // pred_check_branch
    %9 = sbr.rel (0) target = $region5
  $region4: #{_lambda_.10} parent=0 // pred_region
    _
  $region5: #{_lambda_.10} parent=0 // pred_fallthru
    _
  // Predicated region
  $region6: #{_lambda_.10} parent=0 // pred_check
    _
  $region7: #{_lambda_.10} parent=0 // pred_check_branch
    %11 = sbr.rel (0) target = $region9
  $region8: #{_lambda_.10} parent=0 // pred_region
    _
  $region9: #{_lambda_.10} parent=0 // pred_fallthru
    _
  // Predicated region
  $region10: #{_lambda_.10} parent=0 // pred_check
    _
  $region11: #{_lambda_.10} parent=0 // pred_check_branch
    %13 = sbr.rel (0) target = $region13
  $region12: #{_lambda_.10} parent=0 // pred_region
    _
  $region13: #{_lambda_.10} parent=0 // pred_fallthru
    _
  %v14 = vld [vmem:[%s0] sm:$0xff]
  %v15 = vld [vmem:[%s0 + $0x8] sm:$0xff]
  %v16 = vld [vmem:[%s0 + $0x10] sm:$0xff]
  %v17 = vld [vmem:[%s0 + $0x18] sm:$0xff]
  %v18 = vld [vmem:[%s0 + $0x20] sm:$0xff]
  %v19 = vld [vmem:[%s0 + $0x28] sm:$0xff]
  %v20 = vld [vmem:[%s0 + $0x30] sm:$0xff]
  %v21 = vld [vmem:[%s0 + $0x38] sm:$0xff]
  %v22 = vunpack.c.l.bf16 %v14
  %v23 = vunpack.c.h.bf16 %v14
  %v24 = vunpack.c.l.bf16 %v15
  %v25 = vunpack.c.h.bf16 %v15
  %v26 = vunpack.c.l.bf16 %v16
  %v27 = vunpack.c.h.bf16 %v16
  %v28 = vunpack.c.l.bf16 %v17
  %v29 = vunpack.c.h.bf16 %v17
  %v30 = vunpack.c.l.bf16 %v18
  %v31 = vunpack.c.h.bf16 %v18
  %v32 = vunpack.c.l.bf16 %v19
  %v33 = vunpack.c.h.bf16 %v19
  %v34 = vunpack.c.l.bf16 %v20
  %v35 = vunpack.c.h.bf16 %v20
  %v36 = vunpack.c.l.bf16 %v21
  %v37 = vunpack.c.h.bf16 %v21
  %v38 = vld [vmem:[%s1] sm:$0xff]
  %v40 = vperm.slane %v38, 0
  %v41 = vperm.slane %v38, 1
  %v42 = vperm.slane %v38, 2
  %v43 = vperm.slane %v38, 3
  %v44 = vperm.slane %v38, 4
  %v45 = vperm.slane %v38, 5
  %v46 = vperm.slane %v38, 6
  %v47 = vperm.slane %v38, 7
  %v56 = vmul.f32 %v22, %v40
  %v57 = vmul.f32 %v23, %v41
  %v58 = vmul.f32 %v24, %v42
  %v59 = vmul.f32 %v25, %v43
  %v60 = vmul.f32 %v26, %v44
  %v61 = vmul.f32 %v27, %v45
  %v62 = vmul.f32 %v28, %v46
  %v63 = vmul.f32 %v29, %v47
  %v64 = vmul.f32 %v30, %v40
  %v65 = vmul.f32 %v31, %v41
  %v66 = vmul.f32 %v32, %v42
  %v67 = vmul.f32 %v33, %v43
  %v68 = vmul.f32 %v34, %v44
  %v69 = vmul.f32 %v35, %v45
  %v70 = vmul.f32 %v36, %v46
  %v71 = vmul.f32 %v37, %v47
  %v72 = vld [vmem:[%s2] sm:$0xff]
  %v74 = vperm.slane %v72, 0
  %v75 = vperm.slane %v72, 1
  %v76 = vperm.slane %v72, 2
  %v77 = vperm.slane %v72, 3
  %v78 = vperm.slane %v72, 4
  %v79 = vperm.slane %v72, 5
  %v80 = vperm.slane %v72, 6
  %v81 = vperm.slane %v72, 7
  %v90 = vadd.f32 %v56, %v74
  %v91 = vadd.f32 %v57, %v75
  %v92 = vadd.f32 %v58, %v76
  %v93 = vadd.f32 %v59, %v77
  %v94 = vadd.f32 %v60, %v78
  %v95 = vadd.f32 %v61, %v79
  %v96 = vadd.f32 %v62, %v80
  %v97 = vadd.f32 %v63, %v81
  %v98 = vadd.f32 %v64, %v74
  %v99 = vadd.f32 %v65, %v75
  %v100 = vadd.f32 %v66, %v76
  %v101 = vadd.f32 %v67, %v77
  %v102 = vadd.f32 %v68, %v78
  %v103 = vadd.f32 %v69, %v79
  %v104 = vadd.f32 %v70, %v80
  %v105 = vadd.f32 %v71, %v81
  %v106 = vmax.f32 %v90, 0.0
  %v107 = vmax.f32 %v91, 0.0
  %v108 = vmax.f32 %v92, 0.0
  %v109 = vmax.f32 %v93, 0.0
  %v110 = vmax.f32 %v94, 0.0
  %v111 = vmax.f32 %v95, 0.0
  %v112 = vmax.f32 %v96, 0.0
  %v113 = vmax.f32 %v97, 0.0
  %v114 = vmax.f32 %v98, 0.0
  %v115 = vmax.f32 %v99, 0.0
  %v116 = vmax.f32 %v100, 0.0
  %v117 = vmax.f32 %v101, 0.0
  %v118 = vmax.f32 %v102, 0.0
  %v119 = vmax.f32 %v103, 0.0
  %v120 = vmax.f32 %v104, 0.0
  %v121 = vmax.f32 %v105, 0.0
  %v122 = vpack.c.bf16 %v107, %v106
  %v123 = vpack.c.bf16 %v109, %v108
  %v124 = vpack.c.bf16 %v111, %v110
  %v125 = vpack.c.bf16 %v113, %v112
  %v126 = vpack.c.bf16 %v115, %v114
  %v127 = vpack.c.bf16 %v117, %v116
  %v128 = vpack.c.bf16 %v119, %v118
  %v129 = vpack.c.bf16 %v121, %v120
  %130 = vst [vmem:[%s3] sm:$0xff] %v122
  %131 = vst [vmem:[%s3 + $0x8] sm:$0xff] %v123
  %132 = vst [vmem:[%s3 + $0x10] sm:$0xff] %v124
  %133 = vst [vmem:[%s3 + $0x18] sm:$0xff] %v125
  %134 = vst [vmem:[%s3 + $0x20] sm:$0xff] %v126
  %135 = vst [vmem:[%s3 + $0x28] sm:$0xff] %v127
  %136 = vst [vmem:[%s3 + $0x30] sm:$0xff] %v128
  %137 = vst [vmem:[%s3 + $0x38] sm:$0xff] %v129
  // Predicated region
  $region14: #{_lambda_.10} parent=0 // pred_check
    _
  $region15: #{_lambda_.10} parent=0 // pred_check_branch
    %139 = sbr.rel (0) target = $region17
  $region16: #{_lambda_.10} parent=0 // pred_region
    _
  $region17: #{_lambda_.10} parent=0 // pred_fallthru
    _
  // Predicated region
  $region18: #{_lambda_.10} parent=0 // pred_check
    _
  $region19: #{_lambda_.10} parent=0 // pred_check_branch
    %141 = sbr.rel (0) target = $region21
  $region20: #{_lambda_.10} parent=0 // pred_region
    _
  $region21: #{_lambda_.10} parent=0 // pred_fallthru
    _

// kernel: _lambda_.9
$region0: #{_lambda_.9}
  #allocation0 [shape = 'u32[]', space=smem, size = 0x4, offset = 0x4, fixed_abs, tag = 'smem constant byte address 0x4 - core index']
  #allocation1 [shape = 'u32[72,128]{1,0:T(1,128)}', space=vmem, size = 0x9000, scoped, tag = 'internal scratch']
  %s0 = inlined_call_operand.vmem [shape: bf16[16,32], index: 0, kind: input, shape index: {}]
  %s1 = inlined_call_operand.hbm [shape: bf16[32,1024], index: 1, kind: input, shape index: {}]
  %s2 = inlined_call_operand.vmem [shape: bf16[16,1024], index: 2, kind: output, shape index: {0}]
  %s3 = inlined_call_operand.vmem [shape: f32[8,1024], index: 3, kind: output, shape index: {1}]
  %4 = xla_tuple %s2, %s3
  %s5 = sld [smem:[#allocation0]]
  $region30: #{_lambda_.9} parent=0
    _
  %s7 = ssub.s32 1, %s5
  %s8 = scalar_select 0, %s7, %s5
  $region1: #{_lambda_.9} parent=0
    #allocation2 [shape = 'u8[65536]{0}', space=vmem, size = 0x10000, scoped, tag = 'input window, operand 1, single buffered']
    #allocation3 [shape = 's32[1]{0}', space=sflag, size = 0x4, scoped, tag = 'scoped memory for _lambda_.9']
    %9 = vsyncpa [#allocation3], 0
    // Predicated region
    $region2: #{_lambda_.9} parent=1 // pred_check
      _
    $region3: #{_lambda_.9} parent=1 // pred_check_branch
      %11 = sbr.rel (0) target = $region5
    $region4: #{_lambda_.9} parent=1 // pred_region
      _
    $region5: #{_lambda_.9} parent=1 // pred_fallthru
      _
    // Predicated region
    $region6: #{_lambda_.9} parent=1 // pred_check
      _
    $region7: #{_lambda_.9} parent=1 // pred_check_branch
      %13 = sbr.rel (0) target = $region9
    $region8: #{_lambda_.9} parent=1 // pred_region
      %15 = vsyncadd [#allocation3], 0
      %s16 = sshll.u32 %s1, 4
      %s17 = int_to_ptr.hbm [resolvable:$true] %s16
      %s18 = sshll.u32 [#allocation2], 4
      %s19 = int_to_ptr.vmem [resolvable:$true] %s18
      %24 = dma.hbm_to_vmem [thread:$0]  %s17, 2048, %s19, [#allocation3], 512, 512, 32
    $region9: #{_lambda_.9} parent=1 // pred_fallthru
      _
    // Predicated region
    $region10: #{_lambda_.9} parent=1 // pred_check
      _
    $region11: #{_lambda_.9} parent=1 // pred_check_branch
      %26 = sbr.rel (0) target = $region13
    $region12: #{_lambda_.9} parent=1 // pred_region
      %28 = dma.done [#allocation3], 2048
    $region13: #{_lambda_.9} parent=1 // pred_fallthru
      _
    %v30 = vld [vmem:[%s0] sm:$0xf]
    %v31 = vld [vmem:[%s0 + $0x4] sm:$0xf]
    %v32 = vld [vmem:[#allocation2] sm:$0xff]
    %v33 = vld [vmem:[#allocation2 + $0x8] sm:$0xff]
    %v34 = vld [vmem:[#allocation2 + $0x10] sm:$0xff]
    %v35 = vld [vmem:[#allocation2 + $0x18] sm:$0xff]
    %v36 = vld [vmem:[#allocation2 + $0x20] sm:$0xff]
    %v37 = vld [vmem:[#allocation2 + $0x28] sm:$0xff]
    %v38 = vld [vmem:[#allocation2 + $0x30] sm:$0xff]
    %v39 = vld [vmem:[#allocation2 + $0x38] sm:$0xff]
    %v40 = vld [vmem:[#allocation2 + $0x40] sm:$0xff]
    %v41 = vld [vmem:[#allocation2 + $0x48] sm:$0xff]
    %v42 = vld [vmem:[#allocation2 + $0x50] sm:$0xff]
    %v43 = vld [vmem:[#allocation2 + $0x58] sm:$0xff]
    %v44 = vld [vmem:[#allocation2 + $0x60] sm:$0xff]
    %v45 = vld [vmem:[#allocation2 + $0x68] sm:$0xff]
    %v46 = vld [vmem:[#allocation2 + $0x70] sm:$0xff]
    %v47 = vld [vmem:[#allocation2 + $0x78] sm:$0xff]
    %v50 = vunpack.c.l.b16 %v30
    %v51 = vunpack.c.l.b16 %v31
    %v52 = vpack.c.b16 %v51, %v50
    %v69 = vunpack.c.l.b16 %v32
    %v70 = vunpack.c.h.b16 %v32
    %v71 = vunpack.c.l.b16 %v33
    %v72 = vunpack.c.h.b16 %v33
    %v73 = vunpack.c.l.b16 %v34
    %v74 = vunpack.c.h.b16 %v34
    %v75 = vunpack.c.l.b16 %v35
    %v76 = vunpack.c.h.b16 %v35
    %v77 = vunpack.c.l.b16 %v36
    %v78 = vunpack.c.h.b16 %v36
    %v79 = vunpack.c.l.b16 %v37
    %v80 = vunpack.c.h.b16 %v37
    %v81 = vunpack.c.l.b16 %v38
    %v82 = vunpack.c.h.b16 %v38
    %v83 = vunpack.c.l.b16 %v39
    %v84 = vunpack.c.h.b16 %v39
    %v85 = vunpack.c.l.b16 %v40
    %v86 = vunpack.c.h.b16 %v40
    %v87 = vunpack.c.l.b16 %v41
    %v88 = vunpack.c.h.b16 %v41
    %v89 = vunpack.c.l.b16 %v42
    %v90 = vunpack.c.h.b16 %v42
    %v91 = vunpack.c.l.b16 %v43
    %v92 = vunpack.c.h.b16 %v43
    %v93 = vunpack.c.l.b16 %v44
    %v94 = vunpack.c.h.b16 %v44
    %v95 = vunpack.c.l.b16 %v45
    %v96 = vunpack.c.h.b16 %v45
    %v97 = vunpack.c.l.b16 %v46
    %v98 = vunpack.c.h.b16 %v46
    %v99 = vunpack.c.l.b16 %v47
    %v100 = vunpack.c.h.b16 %v47
    %v101 = vpack.c.b16 %v77, %v69
    %v102 = vpack.c.b16 %v78, %v70
    %v103 = vpack.c.b16 %v79, %v71
    %v104 = vpack.c.b16 %v80, %v72
    %v105 = vpack.c.b16 %v81, %v73
    %v106 = vpack.c.b16 %v82, %v74
    %v107 = vpack.c.b16 %v83, %v75
    %v108 = vpack.c.b16 %v84, %v76
    %v109 = vpack.c.b16 %v93, %v85
    %v110 = vpack.c.b16 %v94, %v86
    %v111 = vpack.c.b16 %v95, %v87
    %v112 = vpack.c.b16 %v96, %v88
    %v113 = vpack.c.b16 %v97, %v89
    %v114 = vpack.c.b16 %v98, %v90
    %v115 = vpack.c.b16 %v99, %v91
    %v116 = vpack.c.b16 %v100, %v92
    %vm133 = vcmask 261120
    %v135 = vsel %vm133, %v52, 0
    %137 = vmatpush.bf16.msra.mxu0 0
    %138 = vmatpush.bf16.msra.mxu0 0
    %139 = vmatpush.bf16.msra.mxu0 0
    %140 = vmatpush.bf16.msra.mxu0 0
    %141 = vmatpush.bf16.msra.mxu0 0
    %142 = vmatpush.bf16.msra.mxu0 0
    %143 = vmatpush.bf16.msra.mxu0 %v109
    %144 = vmatpush.bf16.msra.mxu0 %v101
    %145 = vmatmul.bf16.gmra.mxu0 %v135
    %v146 = vpop.f32.mrf.mxu0
    %v147 = vadd.f32 0.0, %v146
    %v148 = vpop.f32.mrf.mxu0
    %v149 = vadd.f32 0.0, %v148
    %150 = vdwg.mxu0
    %151 = vmatpush.bf16.msra.mxu0 0
    %152 = vmatpush.bf16.msra.mxu0 0
    %153 = vmatpush.bf16.msra.mxu0 0
    %154 = vmatpush.bf16.msra.mxu0 0
    %155 = vmatpush.bf16.msra.mxu0 0
    %156 = vmatpush.bf16.msra.mxu0 0
    %157 = vmatpush.bf16.msra.mxu0 %v110
    %158 = vmatpush.bf16.msra.mxu0 %v102
    %159 = vmatmul.bf16.gmra.mxu0 %v135
    %v160 = vpop.f32.mrf.mxu0
    %v161 = vadd.f32 0.0, %v160
    %v162 = vpop.f32.mrf.mxu0
    %v163 = vadd.f32 0.0, %v162
    %164 = vdwg.mxu0
    %165 = vmatpush.bf16.msra.mxu0 0
    %166 = vmatpush.bf16.msra.mxu0 0
    %167 = vmatpush.bf16.msra.mxu0 0
    %168 = vmatpush.bf16.msra.mxu0 0
    %169 = vmatpush.bf16.msra.mxu0 0
    %170 = vmatpush.bf16.msra.mxu0 0
    %171 = vmatpush.bf16.msra.mxu0 %v111
    %172 = vmatpush.bf16.msra.mxu0 %v103
    %173 = vmatmul.bf16.gmra.mxu0 %v135
    %v174 = vpop.f32.mrf.mxu0
    %v175 = vadd.f32 0.0, %v174
    %v176 = vpop.f32.mrf.mxu0
    %v177 = vadd.f32 0.0, %v176
    %178 = vdwg.mxu0
    %179 = vmatpush.bf16.msra.mxu0 0
    %180 = vmatpush.bf16.msra.mxu0 0
    %181 = vmatpush.bf16.msra.mxu0 0
    %182 = vmatpush.bf16.msra.mxu0 0
    %183 = vmatpush.bf16.msra.mxu0 0
    %184 = vmatpush.bf16.msra.mxu0 0
    %185 = vmatpush.bf16.msra.mxu0 %v112
    %186 = vmatpush.bf16.msra.mxu0 %v104
    %187 = vmatmul.bf16.gmra.mxu0 %v135
    %v188 = vpop.f32.mrf.mxu0
    %v189 = vadd.f32 0.0, %v188
    %v190 = vpop.f32.mrf.mxu0
    %v191 = vadd.f32 0.0, %v190
    %192 = vdwg.mxu0
    %193 = vmatpush.bf16.msra.mxu0 0
    %194 = vmatpush.bf16.msra.mxu0 0
    %195 = vmatpush.bf16.msra.mxu0 0
    %196 = vmatpush.bf16.msra.mxu0 0
    %197 = vmatpush.bf16.msra.mxu0 0
    %198 = vmatpush.bf16.msra.mxu0 0
    %199 = vmatpush.bf16.msra.mxu0 %v113
    %200 = vmatpush.bf16.msra.mxu0 %v105
    %201 = vmatmul.bf16.gmra.mxu0 %v135
    %v202 = vpop.f32.mrf.mxu0
    %v203 = vadd.f32 0.0, %v202
    %v204 = vpop.f32.mrf.mxu0
    %v205 = vadd.f32 0.0, %v204
    %206 = vdwg.mxu0
    %207 = vmatpush.bf16.msra.mxu0 0
    %208 = vmatpush.bf16.msra.mxu0 0
    %209 = vmatpush.bf16.msra.mxu0 0
    %210 = vmatpush.bf16.msra.mxu0 0
    %211 = vmatpush.bf16.msra.mxu0 0
    %212 = vmatpush.bf16.msra.mxu0 0
    %213 = vmatpush.bf16.msra.mxu0 %v114
    %214 = vmatpush.bf16.msra.mxu0 %v106
    %215 = vmatmul.bf16.gmra.mxu0 %v135
    %v216 = vpop.f32.mrf.mxu0
    %v217 = vadd.f32 0.0, %v216
    %v218 = vpop.f32.mrf.mxu0
    %v219 = vadd.f32 0.0, %v218
    %220 = vdwg.mxu0
    %221 = vmatpush.bf16.msra.mxu0 0
    %222 = vmatpush.bf16.msra.mxu0 0
    %223 = vmatpush.bf16.msra.mxu0 0
    %224 = vmatpush.bf16.msra.mxu0 0
    %225 = vmatpush.bf16.msra.mxu0 0
    %226 = vmatpush.bf16.msra.mxu0 0
    %227 = vmatpush.bf16.msra.mxu0 %v115
    %228 = vmatpush.bf16.msra.mxu0 %v107
    %229 = vmatmul.bf16.gmra.mxu0 %v135
    %v230 = vpop.f32.mrf.mxu0
    %v231 = vadd.f32 0.0, %v230
    %v232 = vpop.f32.mrf.mxu0
    %v233 = vadd.f32 0.0, %v232
    %234 = vdwg.mxu0
    %235 = vmatpush.bf16.msra.mxu0 0
    %236 = vmatpush.bf16.msra.mxu0 0
    %237 = vmatpush.bf16.msra.mxu0 0
    %238 = vmatpush.bf16.msra.mxu0 0
    %239 = vmatpush.bf16.msra.mxu0 0
    %240 = vmatpush.bf16.msra.mxu0 0
    %241 = vmatpush.bf16.msra.mxu0 %v116
    %242 = vmatpush.bf16.msra.mxu0 %v108
    %243 = vmatmul.bf16.gmra.mxu0 %v135
    %v244 = vpop.f32.mrf.mxu0
    %v245 = vadd.f32 0.0, %v244
    %v246 = vpop.f32.mrf.mxu0
    %v247 = vadd.f32 0.0, %v246
    %248 = vdwg.mxu0
    %v249 = vpack.c.bf16 %v161, %v147
    %v250 = vpack.c.bf16 %v189, %v175
    %v251 = vpack.c.bf16 %v217, %v203
    %v252 = vpack.c.bf16 %v245, %v231
    %v253 = vpack.c.bf16 %v163, %v149
    %v254 = vpack.c.bf16 %v191, %v177
    %v255 = vpack.c.bf16 %v219, %v205
    %v256 = vpack.c.bf16 %v247, %v233
    %257 = vst [vmem:[%s2] sm:$0xff] %v249
    %258 = vst [vmem:[%s2 + $0x8] sm:$0xff] %v250
    %259 = vst [vmem:[%s2 + $0x10] sm:$0xff] %v251
    %260 = vst [vmem:[%s2 + $0x18] sm:$0xff] %v252
    %261 = vst [vmem:[%s2 + $0x20] sm:$0xff] %v253
    %262 = vst [vmem:[%s2 + $0x28] sm:$0xff] %v254
    %263 = vst [vmem:[%s2 + $0x30] sm:$0xff] %v255
    %264 = vst [vmem:[%s2 + $0x38] sm:$0xff] %v256
    %v265 = vadd.f32 %v147, %v149
    %v266 = vrot.slane %v265, 4
    %v267 = vadd.f32 %v265, %v266
    %v268 = vrot.slane %v267, 2
    %v269 = vadd.f32 %v267, %v268
    %v270 = vrot.slane %v269, 1
    %v271 = vadd.f32 %v269, %v270
    %v272 = vadd.f32 %v161, %v163
    %v273 = vrot.slane %v272, 4
    %v274 = vadd.f32 %v272, %v273
    %v275 = vrot.slane %v274, 2
    %v276 = vadd.f32 %v274, %v275
    %v277 = vrot.slane %v276, 1
    %v278 = vadd.f32 %v276, %v277
    %v279 = vadd.f32 %v175, %v177
    %v280 = vrot.slane %v279, 4
    %v281 = vadd.f32 %v279, %v280
    %v282 = vrot.slane %v281, 2
    %v283 = vadd.f32 %v281, %v282
    %v284 = vrot.slane %v283, 1
    %v285 = vadd.f32 %v283, %v284
    %v286 = vadd.f32 %v189, %v191
    %v287 = vrot.slane %v286, 4
    %v288 = vadd.f32 %v286, %v287
    %v289 = vrot.slane %v288, 2
    %v290 = vadd.f32 %v288, %v289
    %v291 = vrot.slane %v290, 1
    %v292 = vadd.f32 %v290, %v291
    %v293 = vadd.f32 %v203, %v205
    %v294 = vrot.slane %v293, 4
    %v295 = vadd.f32 %v293, %v294
    %v296 = vrot.slane %v295, 2
    %v297 = vadd.f32 %v295, %v296
    %v298 = vrot.slane %v297, 1
    %v299 = vadd.f32 %v297, %v298
    %v300 = vadd.f32 %v217, %v219
    %v301 = vrot.slane %v300, 4
    %v302 = vadd.f32 %v300, %v301
    %v303 = vrot.slane %v302, 2
    %v304 = vadd.f32 %v302, %v303
    %v305 = vrot.slane %v304, 1
    %v306 = vadd.f32 %v304, %v305
    %v307 = vadd.f32 %v231, %v233
    %v308 = vrot.slane %v307, 4
    %v309 = vadd.f32 %v307, %v308
    %v310 = vrot.slane %v309, 2
    %v311 = vadd.f32 %v309, %v310
    %v312 = vrot.slane %v311, 1
    %v313 = vadd.f32 %v311, %v312
    %v314 = vadd.f32 %v245, %v247
    %v315 = vrot.slane %v314, 4
    %v316 = vadd.f32 %v314, %v315
    %v317 = vrot.slane %v316, 2
    %v318 = vadd.f32 %v316, %v317
    %v319 = vrot.slane %v318, 1
    %v320 = vadd.f32 %v318, %v319
    %v321 = vmul.f32 %v147, %v147
    %v322 = vmul.f32 %v161, %v161
    %v323 = vmul.f32 %v175, %v175
    %v324 = vmul.f32 %v189, %v189
    %v325 = vmul.f32 %v203, %v203
    %v326 = vmul.f32 %v217, %v217
    %v327 = vmul.f32 %v231, %v231
    %v328 = vmul.f32 %v245, %v245
    %v329 = vmul.f32 %v149, %v149
    %v330 = vmul.f32 %v163, %v163
    %v331 = vmul.f32 %v177, %v177
    %v332 = vmul.f32 %v191, %v191
    %v333 = vmul.f32 %v205, %v205
    %v334 = vmul.f32 %v219, %v219
    %v335 = vmul.f32 %v233, %v233
    %v336 = vmul.f32 %v247, %v247
    %v337 = vadd.f32 %v321, %v329
    %v338 = vrot.slane %v337, 4
    %v339 = vadd.f32 %v337, %v338
    %v340 = vrot.slane %v339, 2
    %v341 = vadd.f32 %v339, %v340
    %v342 = vrot.slane %v341, 1
    %v343 = vadd.f32 %v341, %v342
    %v344 = vadd.f32 %v322, %v330
    %v345 = vrot.slane %v344, 4
    %v346 = vadd.f32 %v344, %v345
    %v347 = vrot.slane %v346, 2
    %v348 = vadd.f32 %v346, %v347
    %v349 = vrot.slane %v348, 1
    %v350 = vadd.f32 %v348, %v349
    %v351 = vadd.f32 %v323, %v331
    %v352 = vrot.slane %v351, 4
    %v353 = vadd.f32 %v351, %v352
    %v354 = vrot.slane %v353, 2
    %v355 = vadd.f32 %v353, %v354
    %v356 = vrot.slane %v355, 1
    %v357 = vadd.f32 %v355, %v356
    %v358 = vadd.f32 %v324, %v332
    %v359 = vrot.slane %v358, 4
    %v360 = vadd.f32 %v358, %v359
    %v361 = vrot.slane %v360, 2
    %v362 = vadd.f32 %v360, %v361
    %v363 = vrot.slane %v362, 1
    %v364 = vadd.f32 %v362, %v363
    %v365 = vadd.f32 %v325, %v333
    %v366 = vrot.slane %v365, 4
    %v367 = vadd.f32 %v365, %v366
    %v368 = vrot.slane %v367, 2
    %v369 = vadd.f32 %v367, %v368
    %v370 = vrot.slane %v369, 1
    %v371 = vadd.f32 %v369, %v370
    %v372 = vadd.f32 %v326, %v334
    %v373 = vrot.slane %v372, 4
    %v374 = vadd.f32 %v372, %v373
    %v375 = vrot.slane %v374, 2
    %v376 = vadd.f32 %v374, %v375
    %v377 = vrot.slane %v376, 1
    %v378 = vadd.f32 %v376, %v377
    %v379 = vadd.f32 %v327, %v335
    %v380 = vrot.slane %v379, 4
    %v381 = vadd.f32 %v379, %v380
    %v382 = vrot.slane %v381, 2
    %v383 = vadd.f32 %v381, %v382
    %v384 = vrot.slane %v383, 1
    %v385 = vadd.f32 %v383, %v384
    %v386 = vadd.f32 %v328, %v336
    %v387 = vrot.slane %v386, 4
    %v388 = vadd.f32 %v386, %v387
    %v389 = vrot.slane %v388, 2
    %v390 = vadd.f32 %v388, %v389
    %v391 = vrot.slane %v390, 1
    %v392 = vadd.f32 %v390, %v391
    %v393 = vlaneseq
    %v394 = vshrl.u32 %v393, 7
    %vm395 = vcmp.lt.s32.totalorder %v394, 4
    %v396 = vsel %vm395, %v271, %v343
    %v397 = vsel %vm395, %v278, %v350
    %v398 = vsel %vm395, %v285, %v357
    %v399 = vsel %vm395, %v292, %v364
    %v400 = vsel %vm395, %v299, %v371
    %v401 = vsel %vm395, %v306, %v378
    %v402 = vsel %vm395, %v313, %v385
    %v403 = vsel %vm395, %v320, %v392
    %404 = vst [vmem:[%s3] sm:$0xff] %v396
    %405 = vst [vmem:[%s3 + $0x8] sm:$0xff] %v397
    %406 = vst [vmem:[%s3 + $0x10] sm:$0xff] %v398
    %407 = vst [vmem:[%s3 + $0x18] sm:$0xff] %v399
    %408 = vst [vmem:[%s3 + $0x20] sm:$0xff] %v400
    %409 = vst [vmem:[%s3 + $0x28] sm:$0xff] %v401
    %410 = vst [vmem:[%s3 + $0x30] sm:$0xff] %v402
    %411 = vst [vmem:[%s3 + $0x38] sm:$0xff] %v403
    // Predicated region
    $region14: #{_lambda_.9} parent=1 // pred_check
      _
    $region15: #{_lambda_.9} parent=1 // pred_check_branch
      %413 = sbr.rel (0) target = $region17
    $region16: #{_lambda_.9} parent=1 // pred_region
      _
    $region17: #{_lambda_.9} parent=1 // pred_fallthru
      _
    // Predicated region
    $region18: #{_lambda_.9} parent=1 // pred_check
      _
    $region19: #{_lambda_.9} parent=1 // pred_check_branch
      %415 = sbr.rel (0) target = $region21
    $region20: #{_lambda_.9} parent=1 // pred_region
      _
    $region21: #{_lambda_.9} parent=1 // pred_fallthru
      _
    // Predicated region
    $region22: #{_lambda_.9} parent=1 // pred_check
      _
    $region23: #{_lambda_.9} parent=1 // pred_check_branch
      %417 = sbr.rel (0) target = $region25
    $region24: #{_lambda_.9} parent=1 // pred_region
      _
    $region25: #{_lambda_.9} parent=1 // pred_fallthru
      _
    // Predicated region
    $region26: #{_lambda_.9} parent=1 // pred_check
      _
    $region27: #{_lambda_.9} parent=1 // pred_check_branch
      %419 = sbr.rel (0) target = $region29
    $region28: #{_lambda_.9} parent=1 // pred_region
      _
    $region29: #{_lambda_.9} parent=1 // pred_fallthru
      _
    %420 = vsyncpa [#allocation3], 1

// kernel: tile.38
$region0: #{tile.38}
  #allocation0 [shape = 's32[1]{0}', space=sflag, size = 0x4, scoped, tag = 'scoped memory for tile.38']
  %s0 = inlined_call_operand.vmem [shape: f32[32], index: 0, kind: input, shape index: {}]
  %s1 = inlined_call_operand.vmem [shape: f32[4,32], index: 1, kind: output, shape index: {}]
  // Predicated region
  $region2: #{tile.38} parent=0 // pred_check
    _
  $region3: #{tile.38} parent=0 // pred_check_branch
    %3 = sbr.rel (0) target = $region5
  $region4: #{tile.38} parent=0 // pred_region
    _
  $region5: #{tile.38} parent=0 // pred_fallthru
    _
  %v4 = vld [vmem:[%s0] ss:$0 sm:$0xff]
  %5 = vst [vmem:[%s1] sm:$0xf] %v4

// kernel: _lambda_.11
$region0: #{_lambda_.11}
  #allocation0 [shape = 'u32[]', space=smem, size = 0x4, offset = 0x4, fixed_abs, tag = 'smem constant byte address 0x4 - core index']
  #allocation1 [shape = 'u32[72,128]{1,0:T(1,128)}', space=vmem, size = 0x9000, scoped, tag = 'internal scratch']
  %s0 = inlined_call_operand.vmem [shape: bf16[32,576], index: 0, kind: input, shape index: {}]
  %s1 = inlined_call_operand.vmem [shape: bf16[576,128], index: 1, kind: input, shape index: {}]
  %s2 = inlined_call_operand.vmem [shape: bf16[32,128], index: 2, kind: output, shape index: {0}]
  %s3 = inlined_call_operand.vmem [shape: f32[8,128], index: 3, kind: output, shape index: {1}]
  %4 = xla_tuple %s2, %s3
  %s5 = sld [smem:[#allocation0]]
  $region26: #{_lambda_.11} parent=0
    _
  %s7 = ssub.s32 1, %s5
  %s8 = scalar_select 0, %s7, %s5
  // Predicated region
  $region2: #{_lambda_.11} parent=0 // pred_check
    _
  $region3: #{_lambda_.11} parent=0 // pred_check_branch
    %10 = sbr.rel (0) target = $region5
  $region4: #{_lambda_.11} parent=0 // pred_region
    _
  $region5: #{_lambda_.11} parent=0 // pred_fallthru
    _
  // Predicated region
  $region6: #{_lambda_.11} parent=0 // pred_check
    _
  $region7: #{_lambda_.11} parent=0 // pred_check_branch
    %12 = sbr.rel (0) target = $region9
  $region8: #{_lambda_.11} parent=0 // pred_region
    _
  $region9: #{_lambda_.11} parent=0 // pred_fallthru
    _
  %v14 = vld [vmem:[%s0] sm:$0xff]
  %v15 = vld [vmem:[%s0 + $0x8] sm:$0xff]
  %v16 = vld [vmem:[%s0 + $0x10] sm:$0xf]
  %v17 = vld [vmem:[%s0 + $0x14] sm:$0xff]
  %v18 = vld [vmem:[%s0 + $0x1c] sm:$0xff]
  %v19 = vld [vmem:[%s0 + $0x24] sm:$0xf]
  %v20 = vld [vmem:[%s0 + $0x28] sm:$0xff]
  %v21 = vld [vmem:[%s0 + $0x30] sm:$0xff]
  %v22 = vld [vmem:[%s0 + $0x38] sm:$0xf]
  %v23 = vld [vmem:[%s0 + $0x3c] sm:$0xff]
  %v24 = vld [vmem:[%s0 + $0x44] sm:$0xff]
  %v25 = vld [vmem:[%s0 + $0x4c] sm:$0xf]
  %v26 = vld [vmem:[%s1] sm:$0xf]
  %v27 = vld [vmem:[%s1 + $0x4] sm:$0xf]
  %v28 = vld [vmem:[%s1 + $0x8] sm:$0xf]
  %v29 = vld [vmem:[%s1 + $0xc] sm:$0xf]
  %v30 = vld [vmem:[%s1 + $0x10] sm:$0xf]
  %v31 = vld [vmem:[%s1 + $0x14] sm:$0xf]
  %v32 = vld [vmem:[%s1 + $0x18] sm:$0xf]
  %v33 = vld [vmem:[%s1 + $0x1c] sm:$0xf]
  %v34 = vld [vmem:[%s1 + $0x20] sm:$0xf]
  %v35 = vld [vmem:[%s1 + $0x24] sm:$0xf]
  %v36 = vld [vmem:[%s1 + $0x28] sm:$0xf]
  %v37 = vld [vmem:[%s1 + $0x2c] sm:$0xf]
  %v38 = vld [vmem:[%s1 + $0x30] sm:$0xf]
  %v39 = vld [vmem:[%s1 + $0x34] sm:$0xf]
  %v40 = vld [vmem:[%s1 + $0x38] sm:$0xf]
  %v41 = vld [vmem:[%s1 + $0x3c] sm:$0xf]
  %v42 = vld [vmem:[%s1 + $0x40] sm:$0xf]
  %v43 = vld [vmem:[%s1 + $0x44] sm:$0xf]
  %v44 = vld [vmem:[%s1 + $0x48] sm:$0xf]
  %v45 = vld [vmem:[%s1 + $0x4c] sm:$0xf]
  %v46 = vld [vmem:[%s1 + $0x50] sm:$0xf]
  %v47 = vld [vmem:[%s1 + $0x54] sm:$0xf]
  %v48 = vld [vmem:[%s1 + $0x58] sm:$0xf]
  %v49 = vld [vmem:[%s1 + $0x5c] sm:$0xf]
  %v50 = vld [vmem:[%s1 + $0x60] sm:$0xf]
  %v51 = vld [vmem:[%s1 + $0x64] sm:$0xf]
  %v52 = vld [vmem:[%s1 + $0x68] sm:$0xf]
  %v53 = vld [vmem:[%s1 + $0x6c] sm:$0xf]
  %v54 = vld [vmem:[%s1 + $0x70] sm:$0xf]
  %v55 = vld [vmem:[%s1 + $0x74] sm:$0xf]
  %v56 = vld [vmem:[%s1 + $0x78] sm:$0xf]
  %v57 = vld [vmem:[%s1 + $0x7c] sm:$0xf]
  %v58 = vld [vmem:[%s1 + $0x80] sm:$0xf]
  %v59 = vld [vmem:[%s1 + $0x84] sm:$0xf]
  %v60 = vld [vmem:[%s1 + $0x88] sm:$0xf]
  %v61 = vld [vmem:[%s1 + $0x8c] sm:$0xf]
  %v62 = vld [vmem:[%s1 + $0x90] sm:$0xf]
  %v63 = vld [vmem:[%s1 + $0x94] sm:$0xf]
  %v64 = vld [vmem:[%s1 + $0x98] sm:$0xf]
  %v65 = vld [vmem:[%s1 + $0x9c] sm:$0xf]
  %v66 = vld [vmem:[%s1 + $0xa0] sm:$0xf]
  %v67 = vld [vmem:[%s1 + $0xa4] sm:$0xf]
  %v68 = vld [vmem:[%s1 + $0xa8] sm:$0xf]
  %v69 = vld [vmem:[%s1 + $0xac] sm:$0xf]
  %v70 = vld [vmem:[%s1 + $0xb0] sm:$0xf]
  %v71 = vld [vmem:[%s1 + $0xb4] sm:$0xf]
  %v72 = vld [vmem:[%s1 + $0xb8] sm:$0xf]
  %v73 = vld [vmem:[%s1 + $0xbc] sm:$0xf]
  %v74 = vld [vmem:[%s1 + $0xc0] sm:$0xf]
  %v75 = vld [vmem:[%s1 + $0xc4] sm:$0xf]
  %v76 = vld [vmem:[%s1 + $0xc8] sm:$0xf]
  %v77 = vld [vmem:[%s1 + $0xcc] sm:$0xf]
  %v78 = vld [vmem:[%s1 + $0xd0] sm:$0xf]
  %v79 = vld [vmem:[%s1 + $0xd4] sm:$0xf]
  %v80 = vld [vmem:[%s1 + $0xd8] sm:$0xf]
  %v81 = vld [vmem:[%s1 + $0xdc] sm:$0xf]
  %v82 = vld [vmem:[%s1 + $0xe0] sm:$0xf]
  %v83 = vld [vmem:[%s1 + $0xe4] sm:$0xf]
  %v84 = vld [vmem:[%s1 + $0xe8] sm:$0xf]
  %v85 = vld [vmem:[%s1 + $0xec] sm:$0xf]
  %v86 = vld [vmem:[%s1 + $0xf0] sm:$0xf]
  %v87 = vld [vmem:[%s1 + $0xf4] sm:$0xf]
  %v88 = vld [vmem:[%s1 + $0xf8] sm:$0xf]
  %v89 = vld [vmem:[%s1 + $0xfc] sm:$0xf]
  %v90 = vld [vmem:[%s1 + $0x100] sm:$0xf]
  %v91 = vld [vmem:[%s1 + $0x104] sm:$0xf]
  %v92 = vld [vmem:[%s1 + $0x108] sm:$0xf]
  %v93 = vld [vmem:[%s1 + $0x10c] sm:$0xf]
  %v94 = vld [vmem:[%s1 + $0x110] sm:$0xf]
  %v95 = vld [vmem:[%s1 + $0x114] sm:$0xf]
  %v96 = vld [vmem:[%s1 + $0x118] sm:$0xf]
  %v97 = vld [vmem:[%s1 + $0x11c] sm:$0xf]
  %v110 = vunpack.c.l.b16 %v14
  %v111 = vunpack.c.h.b16 %v14
  %v112 = vunpack.c.l.b16 %v15
  %v113 = vunpack.c.h.b16 %v15
  %v114 = vunpack.c.l.b16 %v16
  %v115 = vunpack.c.l.b16 %v17
  %v116 = vunpack.c.h.b16 %v17
  %v117 = vunpack.c.l.b16 %v18
  %v118 = vunpack.c.h.b16 %v18
  %v119 = vunpack.c.l.b16 %v19
  %v120 = vunpack.c.l.b16 %v20
  %v121 = vunpack.c.h.b16 %v20
  %v122 = vunpack.c.l.b16 %v21
  %v123 = vunpack.c.h.b16 %v21
  %v124 = vunpack.c.l.b16 %v22
  %v125 = vunpack.c.l.b16 %v23
  %v126 = vunpack.c.h.b16 %v23
  %v127 = vunpack.c.l.b16 %v24
  %v128 = vunpack.c.h.b16 %v24
  %v129 = vunpack.c.l.b16 %v25
  %v130 = vpack.c.b16 %v115, %v110
  %v131 = vpack.c.b16 %v116, %v111
  %v132 = vpack.c.b16 %v117, %v112
  %v133 = vpack.c.b16 %v118, %v113
  %v134 = vpack.c.b16 %v119, %v114
  %v135 = vpack.c.b16 %v125, %v120
  %v136 = vpack.c.b16 %v126, %v121
  %v137 = vpack.c.b16 %v127, %v122
  %v138 = vpack.c.b16 %v128, %v123
  %v139 = vpack.c.b16 %v129, %v124
  %v220 = vunpack.c.l.b16 %v26
  %v221 = vunpack.c.l.b16 %v27
  %v222 = vunpack.c.l.b16 %v28
  %v223 = vunpack.c.l.b16 %v29
  %v224 = vunpack.c.l.b16 %v30
  %v225 = vunpack.c.l.b16 %v31
  %v226 = vunpack.c.l.b16 %v32
  %v227 = vunpack.c.l.b16 %v33
  %v228 = vunpack.c.l.b16 %v34
  %v229 = vunpack.c.l.b16 %v35
  %v230 = vunpack.c.l.b16 %v36
  %v231 = vunpack.c.l.b16 %v37
  %v232 = vunpack.c.l.b16 %v38
  %v233 = vunpack.c.l.b16 %v39
  %v234 = vunpack.c.l.b16 %v40
  %v235 = vunpack.c.l.b16 %v41
  %v236 = vunpack.c.l.b16 %v42
  %v237 = vunpack.c.l.b16 %v43
  %v238 = vunpack.c.l.b16 %v44
  %v239 = vunpack.c.l.b16 %v45
  %v240 = vunpack.c.l.b16 %v46
  %v241 = vunpack.c.l.b16 %v47
  %v242 = vunpack.c.l.b16 %v48
  %v243 = vunpack.c.l.b16 %v49
  %v244 = vunpack.c.l.b16 %v50
  %v245 = vunpack.c.l.b16 %v51
  %v246 = vunpack.c.l.b16 %v52
  %v247 = vunpack.c.l.b16 %v53
  %v248 = vunpack.c.l.b16 %v54
  %v249 = vunpack.c.l.b16 %v55
  %v250 = vunpack.c.l.b16 %v56
  %v251 = vunpack.c.l.b16 %v57
  %v252 = vunpack.c.l.b16 %v58
  %v253 = vunpack.c.l.b16 %v59
  %v254 = vunpack.c.l.b16 %v60
  %v255 = vunpack.c.l.b16 %v61
  %v256 = vunpack.c.l.b16 %v62
  %v257 = vunpack.c.l.b16 %v63
  %v258 = vunpack.c.l.b16 %v64
  %v259 = vunpack.c.l.b16 %v65
  %v260 = vunpack.c.l.b16 %v66
  %v261 = vunpack.c.l.b16 %v67
  %v262 = vunpack.c.l.b16 %v68
  %v263 = vunpack.c.l.b16 %v69
  %v264 = vunpack.c.l.b16 %v70
  %v265 = vunpack.c.l.b16 %v71
  %v266 = vunpack.c.l.b16 %v72
  %v267 = vunpack.c.l.b16 %v73
  %v268 = vunpack.c.l.b16 %v74
  %v269 = vunpack.c.l.b16 %v75
  %v270 = vunpack.c.l.b16 %v76
  %v271 = vunpack.c.l.b16 %v77
  %v272 = vunpack.c.l.b16 %v78
  %v273 = vunpack.c.l.b16 %v79
  %v274 = vunpack.c.l.b16 %v80
  %v275 = vunpack.c.l.b16 %v81
  %v276 = vunpack.c.l.b16 %v82
  %v277 = vunpack.c.l.b16 %v83
  %v278 = vunpack.c.l.b16 %v84
  %v279 = vunpack.c.l.b16 %v85
  %v280 = vunpack.c.l.b16 %v86
  %v281 = vunpack.c.l.b16 %v87
  %v282 = vunpack.c.l.b16 %v88
  %v283 = vunpack.c.l.b16 %v89
  %v284 = vunpack.c.l.b16 %v90
  %v285 = vunpack.c.l.b16 %v91
  %v286 = vunpack.c.l.b16 %v92
  %v287 = vunpack.c.l.b16 %v93
  %v288 = vunpack.c.l.b16 %v94
  %v289 = vunpack.c.l.b16 %v95
  %v290 = vunpack.c.l.b16 %v96
  %v291 = vunpack.c.l.b16 %v97
  %v292 = vpack.c.b16 %v221, %v220
  %v293 = vpack.c.b16 %v223, %v222
  %v294 = vpack.c.b16 %v225, %v224
  %v295 = vpack.c.b16 %v227, %v226
  %v296 = vpack.c.b16 %v229, %v228
  %v297 = vpack.c.b16 %v231, %v230
  %v298 = vpack.c.b16 %v233, %v232
  %v299 = vpack.c.b16 %v235, %v234
  %v300 = vpack.c.b16 %v237, %v236
  %v301 = vpack.c.b16 %v239, %v238
  %v302 = vpack.c.b16 %v241, %v240
  %v303 = vpack.c.b16 %v243, %v242
  %v304 = vpack.c.b16 %v245, %v244
  %v305 = vpack.c.b16 %v247, %v246
  %v306 = vpack.c.b16 %v249, %v248
  %v307 = vpack.c.b16 %v251, %v250
  %v308 = vpack.c.b16 %v253, %v252
  %v309 = vpack.c.b16 %v255, %v254
  %v310 = vpack.c.b16 %v257, %v256
  %v311 = vpack.c.b16 %v259, %v258
  %v312 = vpack.c.b16 %v261, %v260
  %v313 = vpack.c.b16 %v263, %v262
  %v314 = vpack.c.b16 %v265, %v264
  %v315 = vpack.c.b16 %v267, %v266
  %v316 = vpack.c.b16 %v269, %v268
  %v317 = vpack.c.b16 %v271, %v270
  %v318 = vpack.c.b16 %v273, %v272
  %v319 = vpack.c.b16 %v275, %v274
  %v320 = vpack.c.b16 %v277, %v276
  %v321 = vpack.c.b16 %v279, %v278
  %v322 = vpack.c.b16 %v281, %v280
  %v323 = vpack.c.b16 %v283, %v282
  %v324 = vpack.c.b16 %v285, %v284
  %v325 = vpack.c.b16 %v287, %v286
  %v326 = vpack.c.b16 %v289, %v288
  %v327 = vpack.c.b16 %v291, %v290
  %vm364 = vcmask 523264
  %v366 = vsel %vm364, %v134, 0
  %v369 = vsel %vm364, %v139, 0
  %371 = vmatpush.bf16.msra.mxu0 %v299
  %372 = vmatpush.bf16.msra.mxu0 %v298
  %373 = vmatpush.bf16.msra.mxu0 %v297
  %374 = vmatpush.bf16.msra.mxu0 %v296
  %375 = vmatpush.bf16.msra.mxu0 %v295
  %376 = vmatpush.bf16.msra.mxu0 %v294
  %377 = vmatpush.bf16.msra.mxu0 %v293
  %378 = vmatpush.bf16.msra.mxu0 %v292
  %379 = vmatmul.bf16.gmra.mxu0 %v130
  %v380 = vpop.f32.mrf.mxu0
  %v381 = vadd.f32 0.0, %v380
  %v382 = vpop.f32.mrf.mxu0
  %v383 = vadd.f32 0.0, %v382
  %384 = vmatmul.bf16.gmra.mxu0 %v135
  %v385 = vpop.f32.mrf.mxu0
  %v386 = vadd.f32 0.0, %v385
  %v387 = vpop.f32.mrf.mxu0
  %v388 = vadd.f32 0.0, %v387
  %389 = vdwg.mxu0
  %390 = vmatpush.bf16.msra.mxu0 %v307
  %391 = vmatpush.bf16.msra.mxu0 %v306
  %392 = vmatpush.bf16.msra.mxu0 %v305
  %393 = vmatpush.bf16.msra.mxu0 %v304
  %394 = vmatpush.bf16.msra.mxu0 %v303
  %395 = vmatpush.bf16.msra.mxu0 %v302
  %396 = vmatpush.bf16.msra.mxu0 %v301
  %397 = vmatpush.bf16.msra.mxu0 %v300
  %398 = vmatmul.bf16.gmra.mxu0 %v131
  %v399 = vpop.f32.mrf.mxu0
  %v400 = vadd.f32 %v381, %v399
  %v401 = vpop.f32.mrf.mxu0
  %v402 = vadd.f32 %v383, %v401
  %403 = vmatmul.bf16.gmra.mxu0 %v136
  %v404 = vpop.f32.mrf.mxu0
  %v405 = vadd.f32 %v386, %v404
  %v406 = vpop.f32.mrf.mxu0
  %v407 = vadd.f32 %v388, %v406
  %408 = vdwg.mxu0
  %409 = vmatpush.bf16.msra.mxu0 %v315
  %410 = vmatpush.bf16.msra.mxu0 %v314
  %411 = vmatpush.bf16.msra.mxu0 %v313
  %412 = vmatpush.bf16.msra.mxu0 %v312
  %413 = vmatpush.bf16.msra.mxu0 %v311
  %414 = vmatpush.bf16.msra.mxu0 %v310
  %415 = vmatpush.bf16.msra.mxu0 %v309
  %416 = vmatpush.bf16.msra.mxu0 %v308
  %417 = vmatmul.bf16.gmra.mxu0 %v132
  %v418 = vpop.f32.mrf.mxu0
  %v419 = vadd.f32 %v400, %v418
  %v420 = vpop.f32.mrf.mxu0
  %v421 = vadd.f32 %v402, %v420
  %422 = vmatmul.bf16.gmra.mxu0 %v137
  %v423 = vpop.f32.mrf.mxu0
  %v424 = vadd.f32 %v405, %v423
  %v425 = vpop.f32.mrf.mxu0
  %v426 = vadd.f32 %v407, %v425
  %427 = vdwg.mxu0
  %428 = vmatpush.bf16.msra.mxu0 %v323
  %429 = vmatpush.bf16.msra.mxu0 %v322
  %430 = vmatpush.bf16.msra.mxu0 %v321
  %431 = vmatpush.bf16.msra.mxu0 %v320
  %432 = vmatpush.bf16.msra.mxu0 %v319
  %433 = vmatpush.bf16.msra.mxu0 %v318
  %434 = vmatpush.bf16.msra.mxu0 %v317
  %435 = vmatpush.bf16.msra.mxu0 %v316
  %436 = vmatmul.bf16.gmra.mxu0 %v133
  %v437 = vpop.f32.mrf.mxu0
  %v438 = vadd.f32 %v419, %v437
  %v439 = vpop.f32.mrf.mxu0
  %v440 = vadd.f32 %v421, %v439
  %441 = vmatmul.bf16.gmra.mxu0 %v138
  %v442 = vpop.f32.mrf.mxu0
  %v443 = vadd.f32 %v424, %v442
  %v444 = vpop.f32.mrf.mxu0
  %v445 = vadd.f32 %v426, %v444
  %446 = vdwg.mxu0
  %447 = vmatpush.bf16.msra.mxu0 0
  %448 = vmatpush.bf16.msra.mxu0 0
  %449 = vmatpush.bf16.msra.mxu0 0
  %450 = vmatpush.bf16.msra.mxu0 0
  %451 = vmatpush.bf16.msra.mxu0 %v327
  %452 = vmatpush.bf16.msra.mxu0 %v326
  %453 = vmatpush.bf16.msra.mxu0 %v325
  %454 = vmatpush.bf16.msra.mxu0 %v324
  %455 = vmatmul.bf16.gmra.mxu0 %v366
  %v456 = vpop.f32.mrf.mxu0
  %v457 = vadd.f32 %v438, %v456
  %v458 = vpop.f32.mrf.mxu0
  %v459 = vadd.f32 %v440, %v458
  %460 = vmatmul.bf16.gmra.mxu0 %v369
  %v461 = vpop.f32.mrf.mxu0
  %v462 = vadd.f32 %v443, %v461
  %v463 = vpop.f32.mrf.mxu0
  %v464 = vadd.f32 %v445, %v463
  %465 = vdwg.mxu0
  %v466 = vpack.c.bf16 %v457, %v457
  %v467 = vpack.c.bf16 %v459, %v459
  %v468 = vpack.c.bf16 %v462, %v462
  %v469 = vpack.c.bf16 %v464, %v464
  %470 = vst [vmem:[%s2] sm:$0xf] %v466
  %471 = vst [vmem:[%s2 + $0x4] sm:$0xf] %v467
  %472 = vst [vmem:[%s2 + $0x8] sm:$0xf] %v468
  %473 = vst [vmem:[%s2 + $0xc] sm:$0xf] %v469
  %v474 = vadd.f32 %v457, %v459
  %v475 = vadd.f32 %v474, %v462
  %v476 = vadd.f32 %v475, %v464
  %v477 = vrot.slane %v476, 4
  %v478 = vadd.f32 %v476, %v477
  %v479 = vrot.slane %v478, 2
  %v480 = vadd.f32 %v478, %v479
  %v481 = vrot.slane %v480, 1
  %v482 = vadd.f32 %v480, %v481
  %v483 = vmul.f32 %v457, %v457
  %v484 = vmul.f32 %v459, %v459
  %v485 = vmul.f32 %v462, %v462
  %v486 = vmul.f32 %v464, %v464
  %v487 = vadd.f32 %v483, %v484
  %v488 = vadd.f32 %v487, %v485
  %v489 = vadd.f32 %v488, %v486
  %v490 = vrot.slane %v489, 4
  %v491 = vadd.f32 %v489, %v490
  %v492 = vrot.slane %v491, 2
  %v493 = vadd.f32 %v491, %v492
  %v494 = vrot.slane %v493, 1
  %v495 = vadd.f32 %v493, %v494
  %v496 = vlaneseq
  %v497 = vshrl.u32 %v496, 7
  %vm498 = vcmp.lt.s32.totalorder %v497, 4
  %v499 = vsel %vm498, %v482, %v495
  %500 = vst [vmem:[%s3] sm:$0xff] %v499
  // Predicated region
  $region10: #{_lambda_.11} parent=0 // pred_check
    _
  $region11: #{_lambda_.11} parent=0 // pred_check_branch
    %502 = sbr.rel (0) target = $region13
  $region12: #{_lambda_.11} parent=0 // pred_region
    _
  $region13: #{_lambda_.11} parent=0 // pred_fallthru
    _
  // Predicated region
  $region14: #{_lambda_.11} parent=0 // pred_check
    _
  $region15: #{_lambda_.11} parent=0 // pred_check_branch
    %504 = sbr.rel (0) target = $region17
  $region16: #{_lambda_.11} parent=0 // pred_region
    _
  $region17: #{_lambda_.11} parent=0 // pred_fallthru
    _
  // Predicated region
  $region18: #{_lambda_.11} parent=0 // pred_check
    _
  $region19: #{_lambda_.11} parent=0 // pred_check_branch
    %506 = sbr.rel (0) target = $region21
  $region20: #{_lambda_.11} parent=0 // pred_region
    _
  $region21: #{_lambda_.11} parent=0 // pred_fallthru
    _
  // Predicated region
  $region22: #{_lambda_.11} parent=0 // pred_check
    _
  $region23: #{_lambda_.11} parent=0 // pred_check_branch
    %508 = sbr.rel (0) target = $region25
  $region24: #{_lambda_.11} parent=0 // pred_region
    _
  $region25: #{_lambda_.11} parent=0 // pred_fallthru
    _

// kernel: _lambda_.12
$region0: #{_lambda_.12}
  #allocation0 [shape = 'u32[]', space=smem, size = 0x4, offset = 0x4, fixed_abs, tag = 'smem constant byte address 0x4 - core index']
  #allocation1 [shape = 'u32[72,128]{1,0:T(1,128)}', space=vmem, size = 0x9000, scoped, tag = 'internal scratch']
  %s0 = inlined_call_operand.vmem [shape: bf16[32,128], index: 0, kind: input, shape index: {}]
  %s1 = inlined_call_operand.vmem [shape: f32[1,128], index: 1, kind: input, shape index: {}]
  %s2 = inlined_call_operand.vmem [shape: f32[1,128], index: 2, kind: input, shape index: {}]
  %s3 = inlined_call_operand.vmem [shape: bf16[32,128], index: 3, kind: output, shape index: {}]
  %s4 = sld [smem:[#allocation0]]
  $region22: #{_lambda_.12} parent=0
    _
  %s6 = ssub.s32 1, %s4
  %s7 = scalar_select 0, %s6, %s4
  // Predicated region
  $region2: #{_lambda_.12} parent=0 // pred_check
    _
  $region3: #{_lambda_.12} parent=0 // pred_check_branch
    %9 = sbr.rel (0) target = $region5
  $region4: #{_lambda_.12} parent=0 // pred_region
    _
  $region5: #{_lambda_.12} parent=0 // pred_fallthru
    _
  // Predicated region
  $region6: #{_lambda_.12} parent=0 // pred_check
    _
  $region7: #{_lambda_.12} parent=0 // pred_check_branch
    %11 = sbr.rel (0) target = $region9
  $region8: #{_lambda_.12} parent=0 // pred_region
    _
  $region9: #{_lambda_.12} parent=0 // pred_fallthru
    _
  // Predicated region
  $region10: #{_lambda_.12} parent=0 // pred_check
    _
  $region11: #{_lambda_.12} parent=0 // pred_check_branch
    %13 = sbr.rel (0) target = $region13
  $region12: #{_lambda_.12} parent=0 // pred_region
    _
  $region13: #{_lambda_.12} parent=0 // pred_fallthru
    _
  %v14 = vld [vmem:[%s0] sm:$0xf]
  %v15 = vld [vmem:[%s0 + $0x4] sm:$0xf]
  %v16 = vld [vmem:[%s0 + $0x8] sm:$0xf]
  %v17 = vld [vmem:[%s0 + $0xc] sm:$0xf]
  %v18 = vunpack.c.l.bf16 %v14
  %v19 = vunpack.c.l.bf16 %v15
  %v20 = vunpack.c.l.bf16 %v16
  %v21 = vunpack.c.l.bf16 %v17
  %v22 = vld [vmem:[%s1] sm:$0x1]
  %v24 = vperm.slane %v22, 0
  %v26 = vmul.f32 %v18, %v24
  %v27 = vmul.f32 %v19, %v24
  %v28 = vmul.f32 %v20, %v24
  %v29 = vmul.f32 %v21, %v24
  %v30 = vld [vmem:[%s2] sm:$0x1]
  %v32 = vperm.slane %v30, 0
  %v34 = vadd.f32 %v26, %v32
  %v35 = vadd.f32 %v27, %v32
  %v36 = vadd.f32 %v28, %v32
  %v37 = vadd.f32 %v29, %v32
  %v38 = vmax.f32 %v34, 0.0
  %v39 = vmax.f32 %v35, 0.0
  %v40 = vmax.f32 %v36, 0.0
  %v41 = vmax.f32 %v37, 0.0
  %v42 = vpack.c.bf16 %v38, %v38
  %v43 = vpack.c.bf16 %v39, %v39
  %v44 = vpack.c.bf16 %v40, %v40
  %v45 = vpack.c.bf16 %v41, %v41
  %46 = vst [vmem:[%s3] sm:$0xf] %v42
  %47 = vst [vmem:[%s3 + $0x4] sm:$0xf] %v43
  %48 = vst [vmem:[%s3 + $0x8] sm:$0xf] %v44
  %49 = vst [vmem:[%s3 + $0xc] sm:$0xf] %v45
  // Predicated region
  $region14: #{_lambda_.12} parent=0 // pred_check
    _
  $region15: #{_lambda_.12} parent=0 // pred_check_branch
    %51 = sbr.rel (0) target = $region17
  $region16: #{_lambda_.12} parent=0 // pred_region
    _
  $region17: #{_lambda_.12} parent=0 // pred_fallthru
    _
  // Predicated region
  $region18: #{_lambda_.12} parent=0 // pred_check
    _
  $region19: #{_lambda_.12} parent=0 // pred_check_branch
    %53 = sbr.rel (0) target = $region21
  $region20: #{_lambda_.12} parent=0 // pred_region
    _
  $region21: #{_lambda_.12} parent=0 // pred_fallthru
    _

// kernel: tile.48
$region0: #{tile.48}
  #allocation0 [shape = 's32[1]{0}', space=sflag, size = 0x4, scoped, tag = 'scoped memory for tile.48']
  %s0 = inlined_call_operand.vmem [shape: f32[16], index: 0, kind: input, shape index: {}]
  %s1 = inlined_call_operand.vmem [shape: f32[4,16], index: 1, kind: output, shape index: {}]
  // Predicated region
  $region2: #{tile.48} parent=0 // pred_check
    _
  $region3: #{tile.48} parent=0 // pred_check_branch
    %3 = sbr.rel (0) target = $region5
  $region4: #{tile.48} parent=0 // pred_region
    _
  $region5: #{tile.48} parent=0 // pred_fallthru
    _
  %v4 = vld [vmem:[%s0] ss:$0 sm:$0xff]
  %5 = vst [vmem:[%s1] sm:$0xf] %v4

// kernel: tile.49
$region0: #{tile.49}
  %s0 = inlined_call_operand.vmem [shape: f32[4,16], index: 0, kind: input, shape index: {}]
  %s1 = inlined_call_operand.vmem [shape: f32[64], index: 1, kind: output, shape index: {}]
  $region1: #{tile.49} parent=0
    #allocation0 [shape = 'u8[4096]{0}', space=vmem, size = 0x1000, scoped, tag = 'scoped mem for output reshape']
    #allocation1 [shape = 'u8[4096]{0}', space=vmem, size = 0x1000, scoped, tag = 'scoped mem for input reshape']
    %s3 = ssub.s32 16, 1
    %v4 = vld [vmem:[%s0] sm:%s3]
    %5 = vst [vmem:[#allocation1] sm:%s3] %v4
    %v6 = vld [vmem:[#allocation1] sm:$0x1]
    %vm7 = vcmask 130048
    %8 = vst.msk [vmem:[#allocation0] sm:$0x1] %vm7, %v6
    %s9 = scalar_lea.vmem [#allocation1], 3
    %v10 = vld [vmem:[%s9] sm:$0x1]
    %11 = vrot.lane.b32.xlu0 %v10, 48
    %v12 = vpop.permute.xlu0 %11
    %vm13 = vcmask 523648
    %14 = vst.msk [vmem:[#allocation0] sm:$0x1] %vm13, %v12
    %s15 = scalar_lea.vmem [#allocation1], 2
    %v16 = vld [vmem:[%s15] sm:$0x1]
    %17 = vrot.lane.b32.xlu0 %v16, 32
    %v18 = vpop.permute.xlu0 %17
    %vm19 = vcmask 392448
    %20 = vst.msk [vmem:[#allocation0] sm:$0x1] %vm19, %v18
    %s21 = scalar_lea.vmem [#allocation1], 1
    %v22 = vld [vmem:[%s21] sm:$0x1]
    %23 = vrot.lane.b32.xlu0 %v22, 16
    %v24 = vpop.permute.xlu0 %23
    %vm25 = vcmask 261248
    %26 = vst.msk [vmem:[#allocation0] sm:$0x1] %vm25, %v24
    %s28 = ssub.s32 2, 1
    %v29 = vld [vmem:[#allocation0] sm:%s28]
    %s31 = ssub.s32 2, 1
    %32 = vst [vmem:[%s1] sm:%s31] %v29

// kernel: _lambda_.13
$region0: #{_lambda_.13}
  #allocation0 [shape = 'u32[]', space=smem, size = 0x4, offset = 0x4, fixed_abs, tag = 'smem constant byte address 0x4 - core index']
  #allocation1 [shape = 'u32[72,128]{1,0:T(1,128)}', space=vmem, size = 0x9000, scoped, tag = 'internal scratch']
  %s0 = inlined_call_operand.vmem [shape: bf16[128,288], index: 0, kind: input, shape index: {}]
  %s1 = inlined_call_operand.vmem [shape: bf16[288,128], index: 1, kind: input, shape index: {}]
  %s2 = inlined_call_operand.vmem [shape: bf16[128,128], index: 2, kind: output, shape index: {0}]
  %s3 = inlined_call_operand.vmem [shape: f32[16,128], index: 3, kind: output, shape index: {1}]
  %4 = xla_tuple %s2, %s3
  %s5 = sld [smem:[#allocation0]]
  $region49: #{_lambda_.13} parent=0
    _
  %s7 = ssub.s32 1, %s5
  %s8 = scalar_select 0, %s7, %s5
  loop: start=0, step=1, limit=4
  $region2: #{_lambda_.13} parent=0 // loop_pre_header
    _
  $region3: #{_lambda_.13} parent=0 // loop_header
    %s10 = sphi 0, %s14
    %p11 = scmp.ge.s32.totalorder %s10, 4
    %s20 = sphi 0, %s22
    %s23 = sphi 0, %s20
    %s24 = sphi 0, %s23
    %s40 = sphi 0, %s24
    %s44 = sphi 0, %s44
    %s46 = sphi 0, %s44
    %s47 = sphi 0, %s46
    %s61 = sphi 0, %s47
    %s67 = sphi 0, %s69
    %s70 = sphi 0, %s67
    %s71 = sphi 0, %s70
    %s87 = sphi 0, %s71
    %s93 = sphi 0, %s95
    %s96 = sphi 0, %s93
    %s97 = sphi 0, %s96
    %s113 = sphi 0, %s97
  $region4: #{_lambda_.13} parent=0 // loop_header_branch
    %13 = sbr.rel (%p11) target = $region8
  $region5: #{_lambda_.13} parent=0 // loop_body
    %s15 = ssub.s32 %s10, 1
    %s16 = ssub.s32 %s10, 2
    %s17 = sadd.s32 %s10, 1
    %s18 = ssub.s32 %s10, %s17
    %p19 = scmp.eq.s32.totalorder %s18, 0
    %s21 = sadd.s32 %s20, 1
    %s22 = scalar_select %p19, %s20, %s21
    %p25 = pneg %p19
    %p26 = scmp.eq.s32.totalorder %s10, 1
    %p27 = por %p25, %p26
    %p28 = scmp.ne.s32.totalorder %s20, %s23
    %p29 = scmp.eq.s32.totalorder %s10, 0
    %p30 = por %p28, %p29
    %p31 = scmp.ne.s32.totalorder %s20, %s23
    %p32 = scmp.eq.s32.totalorder %s15, 1
    %p33 = por %p31, %p32
    %p34 = scmp.ne.s32.totalorder %s23, %s24
    %p35 = scmp.eq.s32.totalorder %s15, 0
    %p36 = por %p34, %p35
    %p37 = scmp.ne.s32.totalorder %s23, %s24
    %p38 = scmp.eq.s32.totalorder %s16, 1
    %p39 = por %p37, %p38
    %p41 = scmp.ne.s32.totalorder %s24, %s40
    %p42 = scmp.eq.s32.totalorder %s16, 0
    %p43 = por %p41, %p42
    %s45 = sadd.s32 %s44, 1
    %p48 = scmp.eq.s32.totalorder %s10, 1
    %p49 = scmp.ne.s32.totalorder %s44, %s46
    %p50 = scmp.eq.s32.totalorder %s10, 0
    %p51 = por %p49, %p50
    %p52 = scmp.ne.s32.totalorder %s44, %s46
    %p53 = scmp.eq.s32.totalorder %s15, 1
    %p54 = por %p52, %p53
    %p55 = scmp.ne.s32.totalorder %s46, %s47
    %p56 = scmp.eq.s32.totalorder %s15, 0
    %p57 = por %p55, %p56
    %p58 = scmp.ne.s32.totalorder %s46, %s47
    %p59 = scmp.eq.s32.totalorder %s16, 1
    %p60 = por %p58, %p59
    %p62 = scmp.ne.s32.totalorder %s47, %s61
    %p63 = scmp.eq.s32.totalorder %s16, 0
    %p64 = por %p62, %p63
    %s65 = ssub.s32 %s10, %s17
    %p66 = scmp.eq.s32.totalorder %s65, 0
    %s68 = sadd.s32 %s67, 1
    %s69 = scalar_select %p66, %s67, %s68
    %p72 = pneg %p66
    %p73 = scmp.eq.s32.totalorder %s10, 1
    %p74 = por %p72, %p73
    %p75 = scmp.ne.s32.totalorder %s67, %s70
    %p76 = scmp.eq.s32.totalorder %s10, 0
    %p77 = por %p75, %p76
    %p78 = scmp.ne.s32.totalorder %s67, %s70
    %p79 = scmp.eq.s32.totalorder %s15, 1
    %p80 = por %p78, %p79
    %p81 = scmp.ne.s32.totalorder %s70, %s71
    %p82 = scmp.eq.s32.totalorder %s15, 0
    %p83 = por %p81, %p82
    %p84 = scmp.ne.s32.totalorder %s70, %s71
    %p85 = scmp.eq.s32.totalorder %s16, 1
    %p86 = por %p84, %p85
    %p88 = scmp.ne.s32.totalorder %s71, %s87
    %p89 = scmp.eq.s32.totalorder %s16, 0
    %p90 = por %p88, %p89
    %s91 = ssub.s32 %s10, %s17
    %p92 = scmp.eq.s32.totalorder %s91, 0
    %s94 = sadd.s32 %s93, 1
    %s95 = scalar_select %p92, %s93, %s94
    %p98 = pneg %p92
    %p99 = scmp.eq.s32.totalorder %s10, 1
    %p100 = por %p98, %p99
    %p101 = scmp.ne.s32.totalorder %s93, %s96
    %p102 = scmp.eq.s32.totalorder %s10, 0
    %p103 = por %p101, %p102
    %p104 = scmp.ne.s32.totalorder %s93, %s96
    %p105 = scmp.eq.s32.totalorder %s15, 1
    %p106 = por %p104, %p105
    %p107 = scmp.ne.s32.totalorder %s96, %s97
    %p108 = scmp.eq.s32.totalorder %s15, 0
    %p109 = por %p107, %p108
    %p110 = scmp.ne.s32.totalorder %s96, %s97
    %p111 = scmp.eq.s32.totalorder %s16, 1
    %p112 = por %p110, %p111
    %p114 = scmp.ne.s32.totalorder %s97, %s113
    %p115 = scmp.eq.s32.totalorder %s16, 0
    %p116 = por %p114, %p115
    %p117 = scmp.le.s32.totalorder 1, %s10
    %p118 = scmp.lt.s32.totalorder %s10, 3
    %p119 = pnand %p117, %p118
    %p120 = pneg %p119
    // Predicated region
    $region9: #{_lambda_.13} parent=5 // pred_check
      _
    $region10: #{_lambda_.13} parent=5 // pred_check_branch
      %122 = sbr.rel (%p119) target = $region12
    $region11: #{_lambda_.13} parent=5 // pred_region
      %s123 = ssub.s32 %s10, 1
      // Predicated region
      $region13: #{_lambda_.13} parent=11 // pred_check
        %p124 = pneg %p57
      $region14: #{_lambda_.13} parent=11 // pred_check_branch
        %126 = sbr.rel (%p124) target = $region16
      $region15: #{_lambda_.13} parent=11 // pred_region
        _
      $region16: #{_lambda_.13} parent=11 // pred_fallthru
        _
    $region12: #{_lambda_.13} parent=5 // pred_fallthru
      _
    %p127 = scmp.lt.s32.totalorder %s10, 2
    // Predicated region
    $region17: #{_lambda_.13} parent=5 // pred_check
      %p128 = pneg %p127
    $region18: #{_lambda_.13} parent=5 // pred_check_branch
      %130 = sbr.rel (%p128) target = $region20
    $region19: #{_lambda_.13} parent=5 // pred_region
      // Predicated region
      $region21: #{_lambda_.13} parent=19 // pred_check
        %p131 = pneg %p30
      $region22: #{_lambda_.13} parent=19 // pred_check_branch
        %133 = sbr.rel (%p131) target = $region24
      $region23: #{_lambda_.13} parent=19 // pred_region
        %s134 = smul.u32 8, %s10
        %p135 = scmp.lt.s32.totalorder %s134, 15
        %s136 = scalar_select %p135, %s134, 15
        %s137 = smul.addr %s136, 3
        %s138 = smul.addr %s137, 4
        %s139 = scalar_lea.vmem %s0, %s138
        %s140 = smul.u32 8, %s10
      $region24: #{_lambda_.13} parent=19 // pred_fallthru
        _
    $region20: #{_lambda_.13} parent=5 // pred_fallthru
      _
    %p141 = scmp.le.s32.totalorder 1, %s10
    %p142 = scmp.lt.s32.totalorder %s10, 3
    %p143 = pnand %p141, %p142
    %p144 = pneg %p143
    // Predicated region
    $region25: #{_lambda_.13} parent=5 // pred_check
      _
    $region26: #{_lambda_.13} parent=5 // pred_check_branch
      %146 = sbr.rel (%p143) target = $region28
    $region27: #{_lambda_.13} parent=5 // pred_region
      %s147 = ssub.s32 %s10, 1
      %s148 = smul.u32 8, %s15
      %p149 = scmp.lt.s32.totalorder %s148, 15
      %s150 = scalar_select %p149, %s148, 15
      %s151 = smul.addr %s150, 3
      %s152 = smul.addr %s151, 4
      %s153 = scalar_lea.vmem %s0, %s152
      %p154 = pneg %p36
      %p155 = pneg %p33
      %p156 = pneg %p57
      %p157 = pneg %p54
      %p158 = pneg %p83
      %p159 = pneg %p80
      %s160 = smul.u32 8, %s15
      %p161 = scmp.lt.s32.totalorder %s160, 15
      %s162 = scalar_select %p161, %s160, 15
      %s163 = smul.addr %s162, 4
      %s164 = scalar_lea.vmem %s2, %s163
      %p165 = pneg %p109
      %p166 = pneg %p106
      %p167 = scmp.lt.s32.totalorder %s15, 1
      %s168 = scalar_select %p167, %s15, 1
      %s169 = smul.addr %s168, 8
      %s170 = scalar_lea.vmem %s3, %s169
      %s171 = smul.u32 8, %s15
      %p172 = scmp.lt.s32.totalorder %s171, 15
      %s173 = scalar_select %p172, %s171, 15
      %s174 = smul.addr %s173, 3
      %s175 = smul.addr %s174, 4
      %s176 = scalar_lea.vmem %s0, %s175
      %s177 = smul.u32 8, %s15
      %s178 = smul.u32 8, %s15
      %p179 = scmp.lt.s32.totalorder %s178, 15
      %s180 = scalar_select %p179, %s178, 15
      %s181 = smul.addr %s180, 4
      %s182 = scalar_lea.vmem %s2, %s181
      %s183 = smul.u32 8, %s15
      %p184 = scmp.lt.s32.totalorder %s15, 1
      %s185 = scalar_select %p184, %s15, 1
      %s186 = smul.addr %s185, 8
      %s187 = scalar_lea.vmem %s3, %s186
      %v189 = vld [vmem:[%s176] sm:$0xff]
      %v190 = vld [vmem:[%s176 + $0x8] sm:$0xf]
      %v191 = vld [vmem:[%s176 + $0xc] sm:$0xff]
      %v192 = vld [vmem:[%s176 + $0x14] sm:$0xf]
      %v193 = vld [vmem:[%s176 + $0x18] sm:$0xff]
      %v194 = vld [vmem:[%s176 + $0x20] sm:$0xf]
      %v195 = vld [vmem:[%s176 + $0x24] sm:$0xff]
      %v196 = vld [vmem:[%s176 + $0x2c] sm:$0xf]
      %v197 = vld [vmem:[%s176 + $0x30] sm:$0xff]
      %v198 = vld [vmem:[%s176 + $0x38] sm:$0xf]
      %v199 = vld [vmem:[%s176 + $0x3c] sm:$0xff]
      %v200 = vld [vmem:[%s176 + $0x44] sm:$0xf]
      %v201 = vld [vmem:[%s176 + $0x48] sm:$0xff]
      %v202 = vld [vmem:[%s176 + $0x50] sm:$0xf]
      %v203 = vld [vmem:[%s176 + $0x54] sm:$0xff]
      %v204 = vld [vmem:[%s176 + $0x5c] sm:$0xf]
      %v205 = vld [vmem:[%s1] sm:$0xf]
      %v206 = vld [vmem:[%s1 + $0x4] sm:$0xf]
      %v207 = vld [vmem:[%s1 + $0x8] sm:$0xf]
      %v208 = vld [vmem:[%s1 + $0xc] sm:$0xf]
      %v209 = vld [vmem:[%s1 + $0x10] sm:$0xf]
      %v210 = vld [vmem:[%s1 + $0x14] sm:$0xf]
      %v211 = vld [vmem:[%s1 + $0x18] sm:$0xf]
      %v212 = vld [vmem:[%s1 + $0x1c] sm:$0xf]
      %v213 = vld [vmem:[%s1 + $0x20] sm:$0xf]
      %v214 = vld [vmem:[%s1 + $0x24] sm:$0xf]
      %v215 = vld [vmem:[%s1 + $0x28] sm:$0xf]
      %v216 = vld [vmem:[%s1 + $0x2c] sm:$0xf]
      %v217 = vld [vmem:[%s1 + $0x30] sm:$0xf]
      %v218 = vld [vmem:[%s1 + $0x34] sm:$0xf]
      %v219 = vld [vmem:[%s1 + $0x38] sm:$0xf]
      %v220 = vld [vmem:[%s1 + $0x3c] sm:$0xf]
      %v221 = vld [vmem:[%s1 + $0x40] sm:$0xf]
      %v222 = vld [vmem:[%s1 + $0x44] sm:$0xf]
      %v223 = vld [vmem:[%s1 + $0x48] sm:$0xf]
      %v224 = vld [vmem:[%s1 + $0x4c] sm:$0xf]
      %v225 = vld [vmem:[%s1 + $0x50] sm:$0xf]
      %v226 = vld [vmem:[%s1 + $0x54] sm:$0xf]
      %v227 = vld [vmem:[%s1 + $0x58] sm:$0xf]
      %v228 = vld [vmem:[%s1 + $0x5c] sm:$0xf]
      %v229 = vld [vmem:[%s1 + $0x60] sm:$0xf]
      %v230 = vld [vmem:[%s1 + $0x64] sm:$0xf]
      %v231 = vld [vmem:[%s1 + $0x68] sm:$0xf]
      %v232 = vld [vmem:[%s1 + $0x6c] sm:$0xf]
      %v233 = vld [vmem:[%s1 + $0x70] sm:$0xf]
      %v234 = vld [vmem:[%s1 + $0x74] sm:$0xf]
      %v235 = vld [vmem:[%s1 + $0x78] sm:$0xf]
      %v236 = vld [vmem:[%s1 + $0x7c] sm:$0xf]
      %v237 = vld [vmem:[%s1 + $0x80] sm:$0xf]
      %v238 = vld [vmem:[%s1 + $0x84] sm:$0xf]
      %v239 = vld [vmem:[%s1 + $0x88] sm:$0xf]
      %v240 = vld [vmem:[%s1 + $0x8c] sm:$0xf]
      %v257 = vunpack.c.l.b16 %v189
      %v258 = vunpack.c.h.b16 %v189
      %v259 = vunpack.c.l.b16 %v190
      %v260 = vunpack.c.l.b16 %v191
      %v261 = vunpack.c.h.b16 %v191
      %v262 = vunpack.c.l.b16 %v192
      %v263 = vunpack.c.l.b16 %v193
      %v264 = vunpack.c.h.b16 %v193
      %v265 = vunpack.c.l.b16 %v194
      %v266 = vunpack.c.l.b16 %v195
      %v267 = vunpack.c.h.b16 %v195
      %v268 = vunpack.c.l.b16 %v196
      %v269 = vunpack.c.l.b16 %v197
      %v270 = vunpack.c.h.b16 %v197
      %v271 = vunpack.c.l.b16 %v198
      %v272 = vunpack.c.l.b16 %v199
      %v273 = vunpack.c.h.b16 %v199
      %v274 = vunpack.c.l.b16 %v200
      %v275 = vunpack.c.l.b16 %v201
      %v276 = vunpack.c.h.b16 %v201
      %v277 = vunpack.c.l.b16 %v202
      %v278 = vunpack.c.l.b16 %v203
      %v279 = vunpack.c.h.b16 %v203
      %v280 = vunpack.c.l.b16 %v204
      %v281 = vpack.c.b16 %v260, %v257
      %v282 = vpack.c.b16 %v261, %v258
      %v283 = vpack.c.b16 %v262, %v259
      %v284 = vpack.c.b16 %v266, %v263
      %v285 = vpack.c.b16 %v267, %v264
      %v286 = vpack.c.b16 %v268, %v265
      %v287 = vpack.c.b16 %v272, %v269
      %v288 = vpack.c.b16 %v273, %v270
      %v289 = vpack.c.b16 %v274, %v271
      %v290 = vpack.c.b16 %v278, %v275
      %v291 = vpack.c.b16 %v279, %v276
      %v292 = vpack.c.b16 %v280, %v277
      %v337 = vunpack.c.l.b16 %v205
      %v338 = vunpack.c.l.b16 %v206
      %v339 = vunpack.c.l.b16 %v207
      %v340 = vunpack.c.l.b16 %v208
      %v341 = vunpack.c.l.b16 %v209
      %v342 = vunpack.c.l.b16 %v210
      %v343 = vunpack.c.l.b16 %v211
      %v344 = vunpack.c.l.b16 %v212
      %v345 = vunpack.c.l.b16 %v213
      %v346 = vunpack.c.l.b16 %v214
      %v347 = vunpack.c.l.b16 %v215
      %v348 = vunpack.c.l.b16 %v216
      %v349 = vunpack.c.l.b16 %v217
      %v350 = vunpack.c.l.b16 %v218
      %v351 = vunpack.c.l.b16 %v219
      %v352 = vunpack.c.l.b16 %v220
      %v353 = vunpack.c.l.b16 %v221
      %v354 = vunpack.c.l.b16 %v222
      %v355 = vunpack.c.l.b16 %v223
      %v356 = vunpack.c.l.b16 %v224
      %v357 = vunpack.c.l.b16 %v225
      %v358 = vunpack.c.l.b16 %v226
      %v359 = vunpack.c.l.b16 %v227
      %v360 = vunpack.c.l.b16 %v228
      %v361 = vunpack.c.l.b16 %v229
      %v362 = vunpack.c.l.b16 %v230
      %v363 = vunpack.c.l.b16 %v231
      %v364 = vunpack.c.l.b16 %v232
      %v365 = vunpack.c.l.b16 %v233
      %v366 = vunpack.c.l.b16 %v234
      %v367 = vunpack.c.l.b16 %v235
      %v368 = vunpack.c.l.b16 %v236
      %v369 = vunpack.c.l.b16 %v237
      %v370 = vunpack.c.l.b16 %v238
      %v371 = vunpack.c.l.b16 %v239
      %v372 = vunpack.c.l.b16 %v240
      %v373 = vpack.c.b16 %v338, %v337
      %v374 = vpack.c.b16 %v340, %v339
      %v375 = vpack.c.b16 %v342, %v341
      %v376 = vpack.c.b16 %v344, %v343
      %v377 = vpack.c.b16 %v346, %v345
      %v378 = vpack.c.b16 %v348, %v347
      %v379 = vpack.c.b16 %v350, %v349
      %v380 = vpack.c.b16 %v352, %v351
      %v381 = vpack.c.b16 %v354, %v353
      %v382 = vpack.c.b16 %v356, %v355
      %v383 = vpack.c.b16 %v358, %v357
      %v384 = vpack.c.b16 %v360, %v359
      %v385 = vpack.c.b16 %v362, %v361
      %v386 = vpack.c.b16 %v364, %v363
      %v387 = vpack.c.b16 %v366, %v365
      %v388 = vpack.c.b16 %v368, %v367
      %v389 = vpack.c.b16 %v370, %v369
      %v390 = vpack.c.b16 %v372, %v371
      %vm409 = vcmask 261120
      %v411 = vsel %vm409, %v283, 0
      %v414 = vsel %vm409, %v286, 0
      %v417 = vsel %vm409, %v289, 0
      %v420 = vsel %vm409, %v292, 0
      %422 = vmatpush.bf16.msra.mxu0 %v380
      %423 = vmatpush.bf16.msra.mxu0 %v379
      %424 = vmatpush.bf16.msra.mxu0 %v378
      %425 = vmatpush.bf16.msra.mxu0 %v377
      %426 = vmatpush.bf16.msra.mxu0 %v376
      %427 = vmatpush.bf16.msra.mxu0 %v375
      %428 = vmatpush.bf16.msra.mxu0 %v374
      %429 = vmatpush.bf16.msra.mxu0 %v373
      %430 = vmatmul.bf16.gmra.mxu0 %v281
      %v431 = vpop.f32.mrf.mxu0
      %v432 = vadd.f32 0.0, %v431
      %v433 = vpop.f32.mrf.mxu0
      %v434 = vadd.f32 0.0, %v433
      %435 = vmatmul.bf16.gmra.mxu0 %v284
      %v436 = vpop.f32.mrf.mxu0
      %v437 = vadd.f32 0.0, %v436
      %v438 = vpop.f32.mrf.mxu0
      %v439 = vadd.f32 0.0, %v438
      %440 = vmatmul.bf16.gmra.mxu0 %v287
      %v441 = vpop.f32.mrf.mxu0
      %v442 = vadd.f32 0.0, %v441
      %v443 = vpop.f32.mrf.mxu0
      %v444 = vadd.f32 0.0, %v443
      %445 = vmatmul.bf16.gmra.mxu0 %v290
      %v446 = vpop.f32.mrf.mxu0
      %v447 = vadd.f32 0.0, %v446
      %v448 = vpop.f32.mrf.mxu0
      %v449 = vadd.f32 0.0, %v448
      %450 = vdwg.mxu0
      %451 = vmatpush.bf16.msra.mxu0 %v388
      %452 = vmatpush.bf16.msra.mxu0 %v387
      %453 = vmatpush.bf16.msra.mxu0 %v386
      %454 = vmatpush.bf16.msra.mxu0 %v385
      %455 = vmatpush.bf16.msra.mxu0 %v384
      %456 = vmatpush.bf16.msra.mxu0 %v383
      %457 = vmatpush.bf16.msra.mxu0 %v382
      %458 = vmatpush.bf16.msra.mxu0 %v381
      %459 = vmatmul.bf16.gmra.mxu0 %v282
      %v460 = vpop.f32.mrf.mxu0
      %v461 = vadd.f32 %v432, %v460
      %v462 = vpop.f32.mrf.mxu0
      %v463 = vadd.f32 %v434, %v462
      %464 = vmatmul.bf16.gmra.mxu0 %v285
      %v465 = vpop.f32.mrf.mxu0
      %v466 = vadd.f32 %v437, %v465
      %v467 = vpop.f32.mrf.mxu0
      %v468 = vadd.f32 %v439, %v467
      %469 = vmatmul.bf16.gmra.mxu0 %v288
      %v470 = vpop.f32.mrf.mxu0
      %v471 = vadd.f32 %v442, %v470
      %v472 = vpop.f32.mrf.mxu0
      %v473 = vadd.f32 %v444, %v472
      %474 = vmatmul.bf16.gmra.mxu0 %v291
      %v475 = vpop.f32.mrf.mxu0
      %v476 = vadd.f32 %v447, %v475
      %v477 = vpop.f32.mrf.mxu0
      %v478 = vadd.f32 %v449, %v477
      %479 = vdwg.mxu0
      %480 = vmatpush.bf16.msra.mxu0 0
      %481 = vmatpush.bf16.msra.mxu0 0
      %482 = vmatpush.bf16.msra.mxu0 0
      %483 = vmatpush.bf16.msra.mxu0 0
      %484 = vmatpush.bf16.msra.mxu0 0
      %485 = vmatpush.bf16.msra.mxu0 0
      %486 = vmatpush.bf16.msra.mxu0 %v390
      %487 = vmatpush.bf16.msra.mxu0 %v389
      %488 = vmatmul.bf16.gmra.mxu0 %v411
      %v489 = vpop.f32.mrf.mxu0
      %v490 = vadd.f32 %v461, %v489
      %v491 = vpop.f32.mrf.mxu0
      %v492 = vadd.f32 %v463, %v491
      %493 = vmatmul.bf16.gmra.mxu0 %v414
      %v494 = vpop.f32.mrf.mxu0
      %v495 = vadd.f32 %v466, %v494
      %v496 = vpop.f32.mrf.mxu0
      %v497 = vadd.f32 %v468, %v496
      %498 = vmatmul.bf16.gmra.mxu0 %v417
      %v499 = vpop.f32.mrf.mxu0
      %v500 = vadd.f32 %v471, %v499
      %v501 = vpop.f32.mrf.mxu0
      %v502 = vadd.f32 %v473, %v501
      %503 = vmatmul.bf16.gmra.mxu0 %v420
      %v504 = vpop.f32.mrf.mxu0
      %v505 = vadd.f32 %v476, %v504
      %v506 = vpop.f32.mrf.mxu0
      %v507 = vadd.f32 %v478, %v506
      %508 = vdwg.mxu0
      %v509 = vpack.c.bf16 %v490, %v490
      %v510 = vpack.c.bf16 %v492, %v492
      %v511 = vpack.c.bf16 %v495, %v495
      %v512 = vpack.c.bf16 %v497, %v497
      %v513 = vpack.c.bf16 %v500, %v500
      %v514 = vpack.c.bf16 %v502, %v502
      %v515 = vpack.c.bf16 %v505, %v505
      %v516 = vpack.c.bf16 %v507, %v507
      %517 = vst [vmem:[%s182] sm:$0xf] %v509
      %518 = vst [vmem:[%s182 + $0x4] sm:$0xf] %v510
      %519 = vst [vmem:[%s182 + $0x8] sm:$0xf] %v511
      %520 = vst [vmem:[%s182 + $0xc] sm:$0xf] %v512
      %521 = vst [vmem:[%s182 + $0x10] sm:$0xf] %v513
      %522 = vst [vmem:[%s182 + $0x14] sm:$0xf] %v514
      %523 = vst [vmem:[%s182 + $0x18] sm:$0xf] %v515
      %524 = vst [vmem:[%s182 + $0x1c] sm:$0xf] %v516
      %v525 = vadd.f32 %v490, %v492
      %v526 = vadd.f32 %v525, %v495
      %v527 = vadd.f32 %v526, %v497
      %v528 = vadd.f32 %v527, %v500
      %v529 = vadd.f32 %v528, %v502
      %v530 = vadd.f32 %v529, %v505
      %v531 = vadd.f32 %v530, %v507
      %v532 = vrot.slane %v531, 4
      %v533 = vadd.f32 %v531, %v532
      %v534 = vrot.slane %v533, 2
      %v535 = vadd.f32 %v533, %v534
      %v536 = vrot.slane %v535, 1
      %v537 = vadd.f32 %v535, %v536
      %v538 = vmul.f32 %v490, %v490
      %v539 = vmul.f32 %v492, %v492
      %v540 = vmul.f32 %v495, %v495
      %v541 = vmul.f32 %v497, %v497
      %v542 = vmul.f32 %v500, %v500
      %v543 = vmul.f32 %v502, %v502
      %v544 = vmul.f32 %v505, %v505
      %v545 = vmul.f32 %v507, %v507
      %v546 = vadd.f32 %v538, %v539
      %v547 = vadd.f32 %v546, %v540
      %v548 = vadd.f32 %v547, %v541
      %v549 = vadd.f32 %v548, %v542
      %v550 = vadd.f32 %v549, %v543
      %v551 = vadd.f32 %v550, %v544
      %v552 = vadd.f32 %v551, %v545
      %v553 = vrot.slane %v552, 4
      %v554 = vadd.f32 %v552, %v553
      %v555 = vrot.slane %v554, 2
      %v556 = vadd.f32 %v554, %v555
      %v557 = vrot.slane %v556, 1
      %v558 = vadd.f32 %v556, %v557
      %v559 = vlaneseq
      %v560 = vshrl.u32 %v559, 7
      %vm561 = vcmp.lt.s32.totalorder %v560, 4
      %v562 = vsel %vm561, %v537, %v558
      %563 = vst [vmem:[%s187] sm:$0xff] %v562
      %s564 = smul.u32 8, %s15
      %p565 = scmp.lt.s32.totalorder %s564, 15
      %s566 = scalar_select %p565, %s564, 15
      %s567 = smul.addr %s566, 4
      %s568 = scalar_lea.vmem %s2, %s567
      %p569 = scmp.lt.s32.totalorder %s15, 1
      %s570 = scalar_select %p569, %s15, 1
      %s571 = smul.addr %s570, 8
      %s572 = scalar_lea.vmem %s3, %s571
      // Predicated region
      $region29: #{_lambda_.13} parent=27 // pred_check
        %p573 = pneg %p80
      $region30: #{_lambda_.13} parent=27 // pred_check_branch
        %575 = sbr.rel (%p573) target = $region32
      $region31: #{_lambda_.13} parent=27 // pred_region
        %s576 = smul.u32 8, %s15
      $region32: #{_lambda_.13} parent=27 // pred_fallthru
        _
      // Predicated region
      $region33: #{_lambda_.13} parent=27 // pred_check
        %p577 = pneg %p106
      $region34: #{_lambda_.13} parent=27 // pred_check_branch
        %579 = sbr.rel (%p577) target = $region36
      $region35: #{_lambda_.13} parent=27 // pred_region
        _
      $region36: #{_lambda_.13} parent=27 // pred_fallthru
        _
    $region28: #{_lambda_.13} parent=5 // pred_fallthru
      _
    %p580 = scmp.le.s32.totalorder 2, %s10
    // Predicated region
    $region37: #{_lambda_.13} parent=5 // pred_check
      %p581 = pneg %p580
    $region38: #{_lambda_.13} parent=5 // pred_check_branch
      %583 = sbr.rel (%p581) target = $region40
    $region39: #{_lambda_.13} parent=5 // pred_region
      %s584 = ssub.s32 %s10, 2
      // Predicated region
      $region41: #{_lambda_.13} parent=39 // pred_check
        %p585 = pneg %p86
      $region42: #{_lambda_.13} parent=39 // pred_check_branch
        %587 = sbr.rel (%p585) target = $region44
      $region43: #{_lambda_.13} parent=39 // pred_region
        %s588 = smul.u32 8, %s16
        %p589 = scmp.lt.s32.totalorder %s588, 15
        %s590 = scalar_select %p589, %s588, 15
        %s591 = smul.addr %s590, 4
        %s592 = scalar_lea.vmem %s2, %s591
      $region44: #{_lambda_.13} parent=39 // pred_fallthru
        _
      // Predicated region
      $region45: #{_lambda_.13} parent=39 // pred_check
        %p593 = pneg %p112
      $region46: #{_lambda_.13} parent=39 // pred_check_branch
        %595 = sbr.rel (%p593) target = $region48
      $region47: #{_lambda_.13} parent=39 // pred_region
        %p596 = scmp.lt.s32.totalorder %s16, 1
        %s597 = scalar_select %p596, %s16, 1
        %s598 = smul.addr %s597, 8
        %s599 = scalar_lea.vmem %s3, %s598
      $region48: #{_lambda_.13} parent=39 // pred_fallthru
        _
    $region40: #{_lambda_.13} parent=5 // pred_fallthru
      _
  $region6: #{_lambda_.13} parent=0 // loop_footer
    %s14 = sadd.s32 1, %s10
  $region7: #{_lambda_.13} parent=0 // loop_footer_branch
    %9 = sbr.rel target = $region3
  $region8: #{_lambda_.13} parent=0 // loop_exit
    _

// kernel: _lambda_.14
$region0: #{_lambda_.14}
  #allocation0 [shape = 'u32[]', space=smem, size = 0x4, offset = 0x4, fixed_abs, tag = 'smem constant byte address 0x4 - core index']
  #allocation1 [shape = 'u32[72,128]{1,0:T(1,128)}', space=vmem, size = 0x9000, scoped, tag = 'internal scratch']
  %s0 = inlined_call_operand.vmem [shape: bf16[128,128], index: 0, kind: input, shape index: {}]
  %s1 = inlined_call_operand.vmem [shape: f32[1,128], index: 1, kind: input, shape index: {}]
  %s2 = inlined_call_operand.vmem [shape: f32[1,128], index: 2, kind: input, shape index: {}]
  %s3 = inlined_call_operand.vmem [shape: bf16[128,128], index: 3, kind: output, shape index: {}]
  %s4 = sld [smem:[#allocation0]]
  $region45: #{_lambda_.14} parent=0
    _
  %s6 = ssub.s32 1, %s4
  %s7 = scalar_select 0, %s6, %s4
  loop: start=0, step=1, limit=4
  $region2: #{_lambda_.14} parent=0 // loop_pre_header
    _
  $region3: #{_lambda_.14} parent=0 // loop_header
    %s9 = sphi 0, %s13
    %p10 = scmp.ge.s32.totalorder %s9, 4
    %s19 = sphi 0, %s21
    %s22 = sphi 0, %s19
    %s23 = sphi 0, %s22
    %s39 = sphi 0, %s23
    %s43 = sphi 0, %s43
    %s45 = sphi 0, %s43
    %s46 = sphi 0, %s45
    %s60 = sphi 0, %s46
    %s64 = sphi 0, %s64
    %s66 = sphi 0, %s64
    %s67 = sphi 0, %s66
    %s81 = sphi 0, %s67
    %s87 = sphi 0, %s89
    %s90 = sphi 0, %s87
    %s91 = sphi 0, %s90
    %s107 = sphi 0, %s91
  $region4: #{_lambda_.14} parent=0 // loop_header_branch
    %12 = sbr.rel (%p10) target = $region8
  $region5: #{_lambda_.14} parent=0 // loop_body
    %s14 = ssub.s32 %s9, 1
    %s15 = ssub.s32 %s9, 2
    %s16 = sadd.s32 %s9, 1
    %s17 = ssub.s32 %s9, %s16
    %p18 = scmp.eq.s32.totalorder %s17, 0
    %s20 = sadd.s32 %s19, 1
    %s21 = scalar_select %p18, %s19, %s20
    %p24 = pneg %p18
    %p25 = scmp.eq.s32.totalorder %s9, 1
    %p26 = por %p24, %p25
    %p27 = scmp.ne.s32.totalorder %s19, %s22
    %p28 = scmp.eq.s32.totalorder %s9, 0
    %p29 = por %p27, %p28
    %p30 = scmp.ne.s32.totalorder %s19, %s22
    %p31 = scmp.eq.s32.totalorder %s14, 1
    %p32 = por %p30, %p31
    %p33 = scmp.ne.s32.totalorder %s22, %s23
    %p34 = scmp.eq.s32.totalorder %s14, 0
    %p35 = por %p33, %p34
    %p36 = scmp.ne.s32.totalorder %s22, %s23
    %p37 = scmp.eq.s32.totalorder %s15, 1
    %p38 = por %p36, %p37
    %p40 = scmp.ne.s32.totalorder %s23, %s39
    %p41 = scmp.eq.s32.totalorder %s15, 0
    %p42 = por %p40, %p41
    %s44 = sadd.s32 %s43, 1
    %p47 = scmp.eq.s32.totalorder %s9, 1
    %p48 = scmp.ne.s32.totalorder %s43, %s45
    %p49 = scmp.eq.s32.totalorder %s9, 0
    %p50 = por %p48, %p49
    %p51 = scmp.ne.s32.totalorder %s43, %s45
    %p52 = scmp.eq.s32.totalorder %s14, 1
    %p53 = por %p51, %p52
    %p54 = scmp.ne.s32.totalorder %s45, %s46
    %p55 = scmp.eq.s32.totalorder %s14, 0
    %p56 = por %p54, %p55
    %p57 = scmp.ne.s32.totalorder %s45, %s46
    %p58 = scmp.eq.s32.totalorder %s15, 1
    %p59 = por %p57, %p58
    %p61 = scmp.ne.s32.totalorder %s46, %s60
    %p62 = scmp.eq.s32.totalorder %s15, 0
    %p63 = por %p61, %p62
    %s65 = sadd.s32 %s64, 1
    %p68 = scmp.eq.s32.totalorder %s9, 1
    %p69 = scmp.ne.s32.totalorder %s64, %s66
    %p70 = scmp.eq.s32.totalorder %s9, 0
    %p71 = por %p69, %p70
    %p72 = scmp.ne.s32.totalorder %s64, %s66
    %p73 = scmp.eq.s32.totalorder %s14, 1
    %p74 = por %p72, %p73
    %p75 = scmp.ne.s32.totalorder %s66, %s67
    %p76 = scmp.eq.s32.totalorder %s14, 0
    %p77 = por %p75, %p76
    %p78 = scmp.ne.s32.totalorder %s66, %s67
    %p79 = scmp.eq.s32.totalorder %s15, 1
    %p80 = por %p78, %p79
    %p82 = scmp.ne.s32.totalorder %s67, %s81
    %p83 = scmp.eq.s32.totalorder %s15, 0
    %p84 = por %p82, %p83
    %s85 = ssub.s32 %s9, %s16
    %p86 = scmp.eq.s32.totalorder %s85, 0
    %s88 = sadd.s32 %s87, 1
    %s89 = scalar_select %p86, %s87, %s88
    %p92 = pneg %p86
    %p93 = scmp.eq.s32.totalorder %s9, 1
    %p94 = por %p92, %p93
    %p95 = scmp.ne.s32.totalorder %s87, %s90
    %p96 = scmp.eq.s32.totalorder %s9, 0
    %p97 = por %p95, %p96
    %p98 = scmp.ne.s32.totalorder %s87, %s90
    %p99 = scmp.eq.s32.totalorder %s14, 1
    %p100 = por %p98, %p99
    %p101 = scmp.ne.s32.totalorder %s90, %s91
    %p102 = scmp.eq.s32.totalorder %s14, 0
    %p103 = por %p101, %p102
    %p104 = scmp.ne.s32.totalorder %s90, %s91
    %p105 = scmp.eq.s32.totalorder %s15, 1
    %p106 = por %p104, %p105
    %p108 = scmp.ne.s32.totalorder %s91, %s107
    %p109 = scmp.eq.s32.totalorder %s15, 0
    %p110 = por %p108, %p109
    %p111 = scmp.le.s32.totalorder 1, %s9
    %p112 = scmp.lt.s32.totalorder %s9, 3
    %p113 = pnand %p111, %p112
    %p114 = pneg %p113
    // Predicated region
    $region9: #{_lambda_.14} parent=5 // pred_check
      _
    $region10: #{_lambda_.14} parent=5 // pred_check_branch
      %116 = sbr.rel (%p113) target = $region12
    $region11: #{_lambda_.14} parent=5 // pred_region
      %s117 = ssub.s32 %s9, 1
      // Predicated region
      $region13: #{_lambda_.14} parent=11 // pred_check
        %p118 = pneg %p56
      $region14: #{_lambda_.14} parent=11 // pred_check_branch
        %120 = sbr.rel (%p118) target = $region16
      $region15: #{_lambda_.14} parent=11 // pred_region
        _
      $region16: #{_lambda_.14} parent=11 // pred_fallthru
        _
      // Predicated region
      $region17: #{_lambda_.14} parent=11 // pred_check
        %p121 = pneg %p77
      $region18: #{_lambda_.14} parent=11 // pred_check_branch
        %123 = sbr.rel (%p121) target = $region20
      $region19: #{_lambda_.14} parent=11 // pred_region
        _
      $region20: #{_lambda_.14} parent=11 // pred_fallthru
        _
    $region12: #{_lambda_.14} parent=5 // pred_fallthru
      _
    %p124 = scmp.lt.s32.totalorder %s9, 2
    // Predicated region
    $region21: #{_lambda_.14} parent=5 // pred_check
      %p125 = pneg %p124
    $region22: #{_lambda_.14} parent=5 // pred_check_branch
      %127 = sbr.rel (%p125) target = $region24
    $region23: #{_lambda_.14} parent=5 // pred_region
      // Predicated region
      $region25: #{_lambda_.14} parent=23 // pred_check
        %p128 = pneg %p29
      $region26: #{_lambda_.14} parent=23 // pred_check_branch
        %130 = sbr.rel (%p128) target = $region28
      $region27: #{_lambda_.14} parent=23 // pred_region
        %s131 = smul.u32 8, %s9
        %p132 = scmp.lt.s32.totalorder %s131, 15
        %s133 = scalar_select %p132, %s131, 15
        %s134 = smul.addr %s133, 4
        %s135 = scalar_lea.vmem %s0, %s134
        %s136 = smul.u32 8, %s9
      $region28: #{_lambda_.14} parent=23 // pred_fallthru
        _
    $region24: #{_lambda_.14} parent=5 // pred_fallthru
      _
    %p137 = scmp.le.s32.totalorder 1, %s9
    %p138 = scmp.lt.s32.totalorder %s9, 3
    %p139 = pnand %p137, %p138
    %p140 = pneg %p139
    // Predicated region
    $region29: #{_lambda_.14} parent=5 // pred_check
      _
    $region30: #{_lambda_.14} parent=5 // pred_check_branch
      %142 = sbr.rel (%p139) target = $region32
    $region31: #{_lambda_.14} parent=5 // pred_region
      %s143 = ssub.s32 %s9, 1
      %s144 = smul.u32 8, %s14
      %p145 = scmp.lt.s32.totalorder %s144, 15
      %s146 = scalar_select %p145, %s144, 15
      %s147 = smul.addr %s146, 4
      %s148 = scalar_lea.vmem %s0, %s147
      %p149 = pneg %p35
      %p150 = pneg %p32
      %p151 = pneg %p56
      %p152 = pneg %p53
      %p153 = pneg %p77
      %p154 = pneg %p74
      %p155 = pneg %p103
      %p156 = pneg %p100
      %s157 = smul.u32 8, %s14
      %p158 = scmp.lt.s32.totalorder %s157, 15
      %s159 = scalar_select %p158, %s157, 15
      %s160 = smul.addr %s159, 4
      %s161 = scalar_lea.vmem %s3, %s160
      %s162 = smul.u32 8, %s14
      %p163 = scmp.lt.s32.totalorder %s162, 15
      %s164 = scalar_select %p163, %s162, 15
      %s165 = smul.addr %s164, 4
      %s166 = scalar_lea.vmem %s0, %s165
      %s167 = smul.u32 8, %s14
      %s168 = smul.u32 8, %s14
      %p169 = scmp.lt.s32.totalorder %s168, 15
      %s170 = scalar_select %p169, %s168, 15
      %s171 = smul.addr %s170, 4
      %s172 = scalar_lea.vmem %s3, %s171
      %s173 = smul.u32 8, %s14
      %v174 = vld [vmem:[%s166] sm:$0xf]
      %v175 = vld [vmem:[%s166 + $0x4] sm:$0xf]
      %v176 = vld [vmem:[%s166 + $0x8] sm:$0xf]
      %v177 = vld [vmem:[%s166 + $0xc] sm:$0xf]
      %v178 = vld [vmem:[%s166 + $0x10] sm:$0xf]
      %v179 = vld [vmem:[%s166 + $0x14] sm:$0xf]
      %v180 = vld [vmem:[%s166 + $0x18] sm:$0xf]
      %v181 = vld [vmem:[%s166 + $0x1c] sm:$0xf]
      %v182 = vunpack.c.l.bf16 %v174
      %v183 = vunpack.c.l.bf16 %v175
      %v184 = vunpack.c.l.bf16 %v176
      %v185 = vunpack.c.l.bf16 %v177
      %v186 = vunpack.c.l.bf16 %v178
      %v187 = vunpack.c.l.bf16 %v179
      %v188 = vunpack.c.l.bf16 %v180
      %v189 = vunpack.c.l.bf16 %v181
      %v190 = vld [vmem:[%s1] sm:$0x1]
      %v192 = vperm.slane %v190, 0
      %v194 = vmul.f32 %v182, %v192
      %v195 = vmul.f32 %v183, %v192
      %v196 = vmul.f32 %v184, %v192
      %v197 = vmul.f32 %v185, %v192
      %v198 = vmul.f32 %v186, %v192
      %v199 = vmul.f32 %v187, %v192
      %v200 = vmul.f32 %v188, %v192
      %v201 = vmul.f32 %v189, %v192
      %v202 = vld [vmem:[%s2] sm:$0x1]
      %v204 = vperm.slane %v202, 0
      %v206 = vadd.f32 %v194, %v204
      %v207 = vadd.f32 %v195, %v204
      %v208 = vadd.f32 %v196, %v204
      %v209 = vadd.f32 %v197, %v204
      %v210 = vadd.f32 %v198, %v204
      %v211 = vadd.f32 %v199, %v204
      %v212 = vadd.f32 %v200, %v204
      %v213 = vadd.f32 %v201, %v204
      %v214 = vmax.f32 %v206, 0.0
      %v215 = vmax.f32 %v207, 0.0
      %v216 = vmax.f32 %v208, 0.0
      %v217 = vmax.f32 %v209, 0.0
      %v218 = vmax.f32 %v210, 0.0
      %v219 = vmax.f32 %v211, 0.0
      %v220 = vmax.f32 %v212, 0.0
      %v221 = vmax.f32 %v213, 0.0
      %v222 = vpack.c.bf16 %v214, %v214
      %v223 = vpack.c.bf16 %v215, %v215
      %v224 = vpack.c.bf16 %v216, %v216
      %v225 = vpack.c.bf16 %v217, %v217
      %v226 = vpack.c.bf16 %v218, %v218
      %v227 = vpack.c.bf16 %v219, %v219
      %v228 = vpack.c.bf16 %v220, %v220
      %v229 = vpack.c.bf16 %v221, %v221
      %230 = vst [vmem:[%s172] sm:$0xf] %v222
      %231 = vst [vmem:[%s172 + $0x4] sm:$0xf] %v223
      %232 = vst [vmem:[%s172 + $0x8] sm:$0xf] %v224
      %233 = vst [vmem:[%s172 + $0xc] sm:$0xf] %v225
      %234 = vst [vmem:[%s172 + $0x10] sm:$0xf] %v226
      %235 = vst [vmem:[%s172 + $0x14] sm:$0xf] %v227
      %236 = vst [vmem:[%s172 + $0x18] sm:$0xf] %v228
      %237 = vst [vmem:[%s172 + $0x1c] sm:$0xf] %v229
      %s238 = smul.u32 8, %s14
      %p239 = scmp.lt.s32.totalorder %s238, 15
      %s240 = scalar_select %p239, %s238, 15
      %s241 = smul.addr %s240, 4
      %s242 = scalar_lea.vmem %s3, %s241
      // Predicated region
      $region33: #{_lambda_.14} parent=31 // pred_check
        %p243 = pneg %p100
      $region34: #{_lambda_.14} parent=31 // pred_check_branch
        %245 = sbr.rel (%p243) target = $region36
      $region35: #{_lambda_.14} parent=31 // pred_region
        %s246 = smul.u32 8, %s14
      $region36: #{_lambda_.14} parent=31 // pred_fallthru
        _
    $region32: #{_lambda_.14} parent=5 // pred_fallthru
      _
    %p247 = scmp.le.s32.totalorder 2, %s9
    // Predicated region
    $region37: #{_lambda_.14} parent=5 // pred_check
      %p248 = pneg %p247
    $region38: #{_lambda_.14} parent=5 // pred_check_branch
      %250 = sbr.rel (%p248) target = $region40
    $region39: #{_lambda_.14} parent=5 // pred_region
      %s251 = ssub.s32 %s9, 2
      // Predicated region
      $region41: #{_lambda_.14} parent=39 // pred_check
        %p252 = pneg %p106
      $region42: #{_lambda_.14} parent=39 // pred_check_branch
        %254 = sbr.rel (%p252) target = $region44
      $region43: #{_lambda_.14} parent=39 // pred_region
        %s255 = smul.u32 8, %s15
        %p256 = scmp.lt.s32.totalorder %s255, 15
        %s257 = scalar_select %p256, %s255, 15
        %s258 = smul.addr %s257, 4
        %s259 = scalar_lea.vmem %s3, %s258
      $region44: #{_lambda_.14} parent=39 // pred_fallthru
        _
    $region40: #{_lambda_.14} parent=5 // pred_fallthru
      _
  $region6: #{_lambda_.14} parent=0 // loop_footer
    %s13 = sadd.s32 1, %s9
  $region7: #{_lambda_.14} parent=0 // loop_footer_branch
    %8 = sbr.rel target = $region3
  $region8: #{_lambda_.14} parent=0 // loop_exit
    _

// kernel: tile.58
$region0: #{tile.58}
  #allocation0 [shape = 's32[1]{0}', space=sflag, size = 0x4, scoped, tag = 'scoped memory for tile.58']
  %s0 = inlined_call_operand.vmem [shape: f32[8], index: 0, kind: input, shape index: {}]
  %s1 = inlined_call_operand.vmem [shape: f32[4,8], index: 1, kind: output, shape index: {}]
  // Predicated region
  $region2: #{tile.58} parent=0 // pred_check
    _
  $region3: #{tile.58} parent=0 // pred_check_branch
    %3 = sbr.rel (0) target = $region5
  $region4: #{tile.58} parent=0 // pred_region
    _
  $region5: #{tile.58} parent=0 // pred_fallthru
    _
  %v4 = vld [vmem:[%s0] ss:$0 sm:$0xff]
  %5 = vst [vmem:[%s1] sm:$0xf] %v4

// kernel: tile.59
$region0: #{tile.59}
  %s0 = inlined_call_operand.vmem [shape: f32[4,8], index: 0, kind: input, shape index: {}]
  %s1 = inlined_call_operand.vmem [shape: f32[32], index: 1, kind: output, shape index: {}]
  $region1: #{tile.59} parent=0
    #allocation0 [shape = 'u8[4096]{0}', space=vmem, size = 0x1000, scoped, tag = 'scoped mem for output reshape']
    #allocation1 [shape = 'u8[4096]{0}', space=vmem, size = 0x1000, scoped, tag = 'scoped mem for input reshape']
    %s3 = ssub.s32 16, 1
    %v4 = vld [vmem:[%s0] sm:%s3]
    %5 = vst [vmem:[#allocation1] sm:%s3] %v4
    %v6 = vld [vmem:[#allocation1] sm:$0x1]
    %vm7 = vcmask 64512
    %8 = vst.msk [vmem:[#allocation0] sm:$0x1] %vm7, %v6
    %s9 = scalar_lea.vmem [#allocation1], 3
    %v10 = vld [vmem:[%s9] sm:$0x1]
    %11 = vrot.lane.b32.xlu0 %v10, 24
    %v12 = vpop.permute.xlu0 %11
    %vm13 = vcmask 261312
    %14 = vst.msk [vmem:[#allocation0] sm:$0x1] %vm13, %v12
    %s15 = scalar_lea.vmem [#allocation1], 2
    %v16 = vld [vmem:[%s15] sm:$0x1]
    %17 = vrot.lane.b32.xlu0 %v16, 16
    %v18 = vpop.permute.xlu0 %17
    %vm19 = vcmask 195712
    %20 = vst.msk [vmem:[#allocation0] sm:$0x1] %vm19, %v18
    %s21 = scalar_lea.vmem [#allocation1], 1
    %v22 = vld [vmem:[%s21] sm:$0x1]
    %23 = vrot.lane.b32.xlu0 %v22, 8
    %v24 = vpop.permute.xlu0 %23
    %vm25 = vcmask 130112
    %26 = vst.msk [vmem:[#allocation0] sm:$0x1] %vm25, %v24
    %s28 = ssub.s32 2, 1
    %v29 = vld [vmem:[#allocation0] sm:%s28]
    %s31 = ssub.s32 2, 1
    %32 = vst [vmem:[%s1] sm:%s31] %v29

// kernel: _lambda_.15
$region0: #{_lambda_.15}
  #allocation0 [shape = 'u32[]', space=smem, size = 0x4, offset = 0x4, fixed_abs, tag = 'smem constant byte address 0x4 - core index']
  #allocation1 [shape = 'u32[72,128]{1,0:T(1,128)}', space=vmem, size = 0x9000, scoped, tag = 'internal scratch']
  %s0 = inlined_call_operand.vmem [shape: bf16[512,144], index: 0, kind: input, shape index: {}]
  %s1 = inlined_call_operand.vmem [shape: bf16[144,128], index: 1, kind: input, shape index: {}]
  %s2 = inlined_call_operand.vmem [shape: bf16[512,128], index: 2, kind: output, shape index: {0}]
  %s3 = inlined_call_operand.vmem [shape: f32[16,128], index: 3, kind: output, shape index: {1}]
  %4 = xla_tuple %s2, %s3
  %s5 = sld [smem:[#allocation0]]
  $region49: #{_lambda_.15} parent=0
    _
  %s7 = ssub.s32 1, %s5
  %s8 = scalar_select 0, %s7, %s5
  loop: start=0, step=1, limit=4
  $region2: #{_lambda_.15} parent=0 // loop_pre_header
    _
  $region3: #{_lambda_.15} parent=0 // loop_header
    %s10 = sphi 0, %s14
    %p11 = scmp.ge.s32.totalorder %s10, 4
    %s20 = sphi 0, %s22
    %s23 = sphi 0, %s20
    %s24 = sphi 0, %s23
    %s40 = sphi 0, %s24
    %s44 = sphi 0, %s44
    %s46 = sphi 0, %s44
    %s47 = sphi 0, %s46
    %s61 = sphi 0, %s47
    %s67 = sphi 0, %s69
    %s70 = sphi 0, %s67
    %s71 = sphi 0, %s70
    %s87 = sphi 0, %s71
    %s93 = sphi 0, %s95
    %s96 = sphi 0, %s93
    %s97 = sphi 0, %s96
    %s113 = sphi 0, %s97
  $region4: #{_lambda_.15} parent=0 // loop_header_branch
    %13 = sbr.rel (%p11) target = $region8
  $region5: #{_lambda_.15} parent=0 // loop_body
    %s15 = ssub.s32 %s10, 1
    %s16 = ssub.s32 %s10, 2
    %s17 = sadd.s32 %s10, 1
    %s18 = ssub.s32 %s10, %s17
    %p19 = scmp.eq.s32.totalorder %s18, 0
    %s21 = sadd.s32 %s20, 1
    %s22 = scalar_select %p19, %s20, %s21
    %p25 = pneg %p19
    %p26 = scmp.eq.s32.totalorder %s10, 1
    %p27 = por %p25, %p26
    %p28 = scmp.ne.s32.totalorder %s20, %s23
    %p29 = scmp.eq.s32.totalorder %s10, 0
    %p30 = por %p28, %p29
    %p31 = scmp.ne.s32.totalorder %s20, %s23
    %p32 = scmp.eq.s32.totalorder %s15, 1
    %p33 = por %p31, %p32
    %p34 = scmp.ne.s32.totalorder %s23, %s24
    %p35 = scmp.eq.s32.totalorder %s15, 0
    %p36 = por %p34, %p35
    %p37 = scmp.ne.s32.totalorder %s23, %s24
    %p38 = scmp.eq.s32.totalorder %s16, 1
    %p39 = por %p37, %p38
    %p41 = scmp.ne.s32.totalorder %s24, %s40
    %p42 = scmp.eq.s32.totalorder %s16, 0
    %p43 = por %p41, %p42
    %s45 = sadd.s32 %s44, 1
    %p48 = scmp.eq.s32.totalorder %s10, 1
    %p49 = scmp.ne.s32.totalorder %s44, %s46
    %p50 = scmp.eq.s32.totalorder %s10, 0
    %p51 = por %p49, %p50
    %p52 = scmp.ne.s32.totalorder %s44, %s46
    %p53 = scmp.eq.s32.totalorder %s15, 1
    %p54 = por %p52, %p53
    %p55 = scmp.ne.s32.totalorder %s46, %s47
    %p56 = scmp.eq.s32.totalorder %s15, 0
    %p57 = por %p55, %p56
    %p58 = scmp.ne.s32.totalorder %s46, %s47
    %p59 = scmp.eq.s32.totalorder %s16, 1
    %p60 = por %p58, %p59
    %p62 = scmp.ne.s32.totalorder %s47, %s61
    %p63 = scmp.eq.s32.totalorder %s16, 0
    %p64 = por %p62, %p63
    %s65 = ssub.s32 %s10, %s17
    %p66 = scmp.eq.s32.totalorder %s65, 0
    %s68 = sadd.s32 %s67, 1
    %s69 = scalar_select %p66, %s67, %s68
    %p72 = pneg %p66
    %p73 = scmp.eq.s32.totalorder %s10, 1
    %p74 = por %p72, %p73
    %p75 = scmp.ne.s32.totalorder %s67, %s70
    %p76 = scmp.eq.s32.totalorder %s10, 0
    %p77 = por %p75, %p76
    %p78 = scmp.ne.s32.totalorder %s67, %s70
    %p79 = scmp.eq.s32.totalorder %s15, 1
    %p80 = por %p78, %p79
    %p81 = scmp.ne.s32.totalorder %s70, %s71
    %p82 = scmp.eq.s32.totalorder %s15, 0
    %p83 = por %p81, %p82
    %p84 = scmp.ne.s32.totalorder %s70, %s71
    %p85 = scmp.eq.s32.totalorder %s16, 1
    %p86 = por %p84, %p85
    %p88 = scmp.ne.s32.totalorder %s71, %s87
    %p89 = scmp.eq.s32.totalorder %s16, 0
    %p90 = por %p88, %p89
    %s91 = ssub.s32 %s10, %s17
    %p92 = scmp.eq.s32.totalorder %s91, 0
    %s94 = sadd.s32 %s93, 1
    %s95 = scalar_select %p92, %s93, %s94
    %p98 = pneg %p92
    %p99 = scmp.eq.s32.totalorder %s10, 1
    %p100 = por %p98, %p99
    %p101 = scmp.ne.s32.totalorder %s93, %s96
    %p102 = scmp.eq.s32.totalorder %s10, 0
    %p103 = por %p101, %p102
    %p104 = scmp.ne.s32.totalorder %s93, %s96
    %p105 = scmp.eq.s32.totalorder %s15, 1
    %p106 = por %p104, %p105
    %p107 = scmp.ne.s32.totalorder %s96, %s97
    %p108 = scmp.eq.s32.totalorder %s15, 0
    %p109 = por %p107, %p108
    %p110 = scmp.ne.s32.totalorder %s96, %s97
    %p111 = scmp.eq.s32.totalorder %s16, 1
    %p112 = por %p110, %p111
    %p114 = scmp.ne.s32.totalorder %s97, %s113
    %p115 = scmp.eq.s32.totalorder %s16, 0
    %p116 = por %p114, %p115
    %p117 = scmp.le.s32.totalorder 1, %s10
    %p118 = scmp.lt.s32.totalorder %s10, 3
    %p119 = pnand %p117, %p118
    %p120 = pneg %p119
    // Predicated region
    $region9: #{_lambda_.15} parent=5 // pred_check
      _
    $region10: #{_lambda_.15} parent=5 // pred_check_branch
      %122 = sbr.rel (%p119) target = $region12
    $region11: #{_lambda_.15} parent=5 // pred_region
      %s123 = ssub.s32 %s10, 1
      // Predicated region
      $region13: #{_lambda_.15} parent=11 // pred_check
        %p124 = pneg %p57
      $region14: #{_lambda_.15} parent=11 // pred_check_branch
        %126 = sbr.rel (%p124) target = $region16
      $region15: #{_lambda_.15} parent=11 // pred_region
        _
      $region16: #{_lambda_.15} parent=11 // pred_fallthru
        _
    $region12: #{_lambda_.15} parent=5 // pred_fallthru
      _
    %p127 = scmp.lt.s32.totalorder %s10, 2
    // Predicated region
    $region17: #{_lambda_.15} parent=5 // pred_check
      %p128 = pneg %p127
    $region18: #{_lambda_.15} parent=5 // pred_check_branch
      %130 = sbr.rel (%p128) target = $region20
    $region19: #{_lambda_.15} parent=5 // pred_region
      // Predicated region
      $region21: #{_lambda_.15} parent=19 // pred_check
        %p131 = pneg %p30
      $region22: #{_lambda_.15} parent=19 // pred_check_branch
        %133 = sbr.rel (%p131) target = $region24
      $region23: #{_lambda_.15} parent=19 // pred_region
        %s134 = smul.u32 32, %s10
        %p135 = scmp.lt.s32.totalorder %s134, 63
        %s136 = scalar_select %p135, %s134, 63
        %s137 = smul.addr %s136, 2
        %s138 = smul.addr %s137, 4
        %s139 = scalar_lea.vmem %s0, %s138
        %s140 = smul.u32 32, %s10
      $region24: #{_lambda_.15} parent=19 // pred_fallthru
        _
    $region20: #{_lambda_.15} parent=5 // pred_fallthru
      _
    %p141 = scmp.le.s32.totalorder 1, %s10
    %p142 = scmp.lt.s32.totalorder %s10, 3
    %p143 = pnand %p141, %p142
    %p144 = pneg %p143
    // Predicated region
    $region25: #{_lambda_.15} parent=5 // pred_check
      _
    $region26: #{_lambda_.15} parent=5 // pred_check_branch
      %146 = sbr.rel (%p143) target = $region28
    $region27: #{_lambda_.15} parent=5 // pred_region
      %s147 = ssub.s32 %s10, 1
      %s148 = smul.u32 32, %s15
      %p149 = scmp.lt.s32.totalorder %s148, 63
      %s150 = scalar_select %p149, %s148, 63
      %s151 = smul.addr %s150, 2
      %s152 = smul.addr %s151, 4
      %s153 = scalar_lea.vmem %s0, %s152
      %p154 = pneg %p36
      %p155 = pneg %p33
      %p156 = pneg %p57
      %p157 = pneg %p54
      %p158 = pneg %p83
      %p159 = pneg %p80
      %s160 = smul.u32 32, %s15
      %p161 = scmp.lt.s32.totalorder %s160, 63
      %s162 = scalar_select %p161, %s160, 63
      %s163 = smul.addr %s162, 4
      %s164 = scalar_lea.vmem %s2, %s163
      %p165 = pneg %p109
      %p166 = pneg %p106
      %p167 = scmp.lt.s32.totalorder %s15, 1
      %s168 = scalar_select %p167, %s15, 1
      %s169 = smul.addr %s168, 8
      %s170 = scalar_lea.vmem %s3, %s169
      %s171 = smul.u32 32, %s15
      %p172 = scmp.lt.s32.totalorder %s171, 63
      %s173 = scalar_select %p172, %s171, 63
      %s174 = smul.addr %s173, 2
      %s175 = smul.addr %s174, 4
      %s176 = scalar_lea.vmem %s0, %s175
      %s177 = smul.u32 32, %s15
      %s178 = smul.u32 32, %s15
      %p179 = scmp.lt.s32.totalorder %s178, 63
      %s180 = scalar_select %p179, %s178, 63
      %s181 = smul.addr %s180, 4
      %s182 = scalar_lea.vmem %s2, %s181
      %s183 = smul.u32 32, %s15
      %p184 = scmp.lt.s32.totalorder %s15, 1
      %s185 = scalar_select %p184, %s15, 1
      %s186 = smul.addr %s185, 8
      %s187 = scalar_lea.vmem %s3, %s186
      %v189 = vld [vmem:[%s176] sm:$0xff]
      %v190 = vld [vmem:[%s176 + $0x8] sm:$0xff]
      %v191 = vld [vmem:[%s176 + $0x10] sm:$0xff]
      %v192 = vld [vmem:[%s176 + $0x18] sm:$0xff]
      %v193 = vld [vmem:[%s176 + $0x20] sm:$0xff]
      %v194 = vld [vmem:[%s176 + $0x28] sm:$0xff]
      %v195 = vld [vmem:[%s176 + $0x30] sm:$0xff]
      %v196 = vld [vmem:[%s176 + $0x38] sm:$0xff]
      %v197 = vld [vmem:[%s176 + $0x40] sm:$0xff]
      %v198 = vld [vmem:[%s176 + $0x48] sm:$0xff]
      %v199 = vld [vmem:[%s176 + $0x50] sm:$0xff]
      %v200 = vld [vmem:[%s176 + $0x58] sm:$0xff]
      %v201 = vld [vmem:[%s176 + $0x60] sm:$0xff]
      %v202 = vld [vmem:[%s176 + $0x68] sm:$0xff]
      %v203 = vld [vmem:[%s176 + $0x70] sm:$0xff]
      %v204 = vld [vmem:[%s176 + $0x78] sm:$0xff]
      %v205 = vld [vmem:[%s176 + $0x80] sm:$0xff]
      %v206 = vld [vmem:[%s176 + $0x88] sm:$0xff]
      %v207 = vld [vmem:[%s176 + $0x90] sm:$0xff]
      %v208 = vld [vmem:[%s176 + $0x98] sm:$0xff]
      %v209 = vld [vmem:[%s176 + $0xa0] sm:$0xff]
      %v210 = vld [vmem:[%s176 + $0xa8] sm:$0xff]
      %v211 = vld [vmem:[%s176 + $0xb0] sm:$0xff]
      %v212 = vld [vmem:[%s176 + $0xb8] sm:$0xff]
      %v213 = vld [vmem:[%s176 + $0xc0] sm:$0xff]
      %v214 = vld [vmem:[%s176 + $0xc8] sm:$0xff]
      %v215 = vld [vmem:[%s176 + $0xd0] sm:$0xff]
      %v216 = vld [vmem:[%s176 + $0xd8] sm:$0xff]
      %v217 = vld [vmem:[%s176 + $0xe0] sm:$0xff]
      %v218 = vld [vmem:[%s176 + $0xe8] sm:$0xff]
      %v219 = vld [vmem:[%s176 + $0xf0] sm:$0xff]
      %v220 = vld [vmem:[%s176 + $0xf8] sm:$0xff]
      %v221 = vld [vmem:[%s1] sm:$0xf]
      %v222 = vld [vmem:[%s1 + $0x4] sm:$0xf]
      %v223 = vld [vmem:[%s1 + $0x8] sm:$0xf]
      %v224 = vld [vmem:[%s1 + $0xc] sm:$0xf]
      %v225 = vld [vmem:[%s1 + $0x10] sm:$0xf]
      %v226 = vld [vmem:[%s1 + $0x14] sm:$0xf]
      %v227 = vld [vmem:[%s1 + $0x18] sm:$0xf]
      %v228 = vld [vmem:[%s1 + $0x1c] sm:$0xf]
      %v229 = vld [vmem:[%s1 + $0x20] sm:$0xf]
      %v230 = vld [vmem:[%s1 + $0x24] sm:$0xf]
      %v231 = vld [vmem:[%s1 + $0x28] sm:$0xf]
      %v232 = vld [vmem:[%s1 + $0x2c] sm:$0xf]
      %v233 = vld [vmem:[%s1 + $0x30] sm:$0xf]
      %v234 = vld [vmem:[%s1 + $0x34] sm:$0xf]
      %v235 = vld [vmem:[%s1 + $0x38] sm:$0xf]
      %v236 = vld [vmem:[%s1 + $0x3c] sm:$0xf]
      %v237 = vld [vmem:[%s1 + $0x40] sm:$0xf]
      %v238 = vld [vmem:[%s1 + $0x44] sm:$0xf]
      %v271 = vunpack.c.l.b16 %v189
      %v272 = vunpack.c.h.b16 %v189
      %v273 = vunpack.c.l.b16 %v190
      %v274 = vunpack.c.h.b16 %v190
      %v275 = vunpack.c.l.b16 %v191
      %v276 = vunpack.c.h.b16 %v191
      %v277 = vunpack.c.l.b16 %v192
      %v278 = vunpack.c.h.b16 %v192
      %v279 = vunpack.c.l.b16 %v193
      %v280 = vunpack.c.h.b16 %v193
      %v281 = vunpack.c.l.b16 %v194
      %v282 = vunpack.c.h.b16 %v194
      %v283 = vunpack.c.l.b16 %v195
      %v284 = vunpack.c.h.b16 %v195
      %v285 = vunpack.c.l.b16 %v196
      %v286 = vunpack.c.h.b16 %v196
      %v287 = vunpack.c.l.b16 %v197
      %v288 = vunpack.c.h.b16 %v197
      %v289 = vunpack.c.l.b16 %v198
      %v290 = vunpack.c.h.b16 %v198
      %v291 = vunpack.c.l.b16 %v199
      %v292 = vunpack.c.h.b16 %v199
      %v293 = vunpack.c.l.b16 %v200
      %v294 = vunpack.c.h.b16 %v200
      %v295 = vunpack.c.l.b16 %v201
      %v296 = vunpack.c.h.b16 %v201
      %v297 = vunpack.c.l.b16 %v202
      %v298 = vunpack.c.h.b16 %v202
      %v299 = vunpack.c.l.b16 %v203
      %v300 = vunpack.c.h.b16 %v203
      %v301 = vunpack.c.l.b16 %v204
      %v302 = vunpack.c.h.b16 %v204
      %v303 = vunpack.c.l.b16 %v205
      %v304 = vunpack.c.h.b16 %v205
      %v305 = vunpack.c.l.b16 %v206
      %v306 = vunpack.c.h.b16 %v206
      %v307 = vunpack.c.l.b16 %v207
      %v308 = vunpack.c.h.b16 %v207
      %v309 = vunpack.c.l.b16 %v208
      %v310 = vunpack.c.h.b16 %v208
      %v311 = vunpack.c.l.b16 %v209
      %v312 = vunpack.c.h.b16 %v209
      %v313 = vunpack.c.l.b16 %v210
      %v314 = vunpack.c.h.b16 %v210
      %v315 = vunpack.c.l.b16 %v211
      %v316 = vunpack.c.h.b16 %v211
      %v317 = vunpack.c.l.b16 %v212
      %v318 = vunpack.c.h.b16 %v212
      %v319 = vunpack.c.l.b16 %v213
      %v320 = vunpack.c.h.b16 %v213
      %v321 = vunpack.c.l.b16 %v214
      %v322 = vunpack.c.h.b16 %v214
      %v323 = vunpack.c.l.b16 %v215
      %v324 = vunpack.c.h.b16 %v215
      %v325 = vunpack.c.l.b16 %v216
      %v326 = vunpack.c.h.b16 %v216
      %v327 = vunpack.c.l.b16 %v217
      %v328 = vunpack.c.h.b16 %v217
      %v329 = vunpack.c.l.b16 %v218
      %v330 = vunpack.c.h.b16 %v218
      %v331 = vunpack.c.l.b16 %v219
      %v332 = vunpack.c.h.b16 %v219
      %v333 = vunpack.c.l.b16 %v220
      %v334 = vunpack.c.h.b16 %v220
      %v335 = vpack.c.b16 %v273, %v271
      %v336 = vpack.c.b16 %v274, %v272
      %v337 = vpack.c.b16 %v277, %v275
      %v338 = vpack.c.b16 %v278, %v276
      %v339 = vpack.c.b16 %v281, %v279
      %v340 = vpack.c.b16 %v282, %v280
      %v341 = vpack.c.b16 %v285, %v283
      %v342 = vpack.c.b16 %v286, %v284
      %v343 = vpack.c.b16 %v289, %v287
      %v344 = vpack.c.b16 %v290, %v288
      %v345 = vpack.c.b16 %v293, %v291
      %v346 = vpack.c.b16 %v294, %v292
      %v347 = vpack.c.b16 %v297, %v295
      %v348 = vpack.c.b16 %v298, %v296
      %v349 = vpack.c.b16 %v301, %v299
      %v350 = vpack.c.b16 %v302, %v300
      %v351 = vpack.c.b16 %v305, %v303
      %v352 = vpack.c.b16 %v306, %v304
      %v353 = vpack.c.b16 %v309, %v307
      %v354 = vpack.c.b16 %v310, %v308
      %v355 = vpack.c.b16 %v313, %v311
      %v356 = vpack.c.b16 %v314, %v312
      %v357 = vpack.c.b16 %v317, %v315
      %v358 = vpack.c.b16 %v318, %v316
      %v359 = vpack.c.b16 %v321, %v319
      %v360 = vpack.c.b16 %v322, %v320
      %v361 = vpack.c.b16 %v325, %v323
      %v362 = vpack.c.b16 %v326, %v324
      %v363 = vpack.c.b16 %v329, %v327
      %v364 = vpack.c.b16 %v330, %v328
      %v365 = vpack.c.b16 %v333, %v331
      %v366 = vpack.c.b16 %v334, %v332
      %v401 = vunpack.c.l.b16 %v221
      %v402 = vunpack.c.l.b16 %v222
      %v403 = vunpack.c.l.b16 %v223
      %v404 = vunpack.c.l.b16 %v224
      %v405 = vunpack.c.l.b16 %v225
      %v406 = vunpack.c.l.b16 %v226
      %v407 = vunpack.c.l.b16 %v227
      %v408 = vunpack.c.l.b16 %v228
      %v409 = vunpack.c.l.b16 %v229
      %v410 = vunpack.c.l.b16 %v230
      %v411 = vunpack.c.l.b16 %v231
      %v412 = vunpack.c.l.b16 %v232
      %v413 = vunpack.c.l.b16 %v233
      %v414 = vunpack.c.l.b16 %v234
      %v415 = vunpack.c.l.b16 %v235
      %v416 = vunpack.c.l.b16 %v236
      %v417 = vunpack.c.l.b16 %v237
      %v418 = vunpack.c.l.b16 %v238
      %v419 = vpack.c.b16 %v402, %v401
      %v420 = vpack.c.b16 %v404, %v403
      %v421 = vpack.c.b16 %v406, %v405
      %v422 = vpack.c.b16 %v408, %v407
      %v423 = vpack.c.b16 %v410, %v409
      %v424 = vpack.c.b16 %v412, %v411
      %v425 = vpack.c.b16 %v414, %v413
      %v426 = vpack.c.b16 %v416, %v415
      %v427 = vpack.c.b16 %v418, %v417
      %vm437 = vcmask 130048
      %v439 = vsel %vm437, %v336, 0
      %v442 = vsel %vm437, %v338, 0
      %v445 = vsel %vm437, %v340, 0
      %v448 = vsel %vm437, %v342, 0
      %v451 = vsel %vm437, %v344, 0
      %v454 = vsel %vm437, %v346, 0
      %v457 = vsel %vm437, %v348, 0
      %v460 = vsel %vm437, %v350, 0
      %v463 = vsel %vm437, %v352, 0
      %v466 = vsel %vm437, %v354, 0
      %v469 = vsel %vm437, %v356, 0
      %v472 = vsel %vm437, %v358, 0
      %v475 = vsel %vm437, %v360, 0
      %v478 = vsel %vm437, %v362, 0
      %v481 = vsel %vm437, %v364, 0
      %v484 = vsel %vm437, %v366, 0
      %486 = vmatpush.bf16.msra.mxu0 %v426
      %487 = vmatpush.bf16.msra.mxu0 %v425
      %488 = vmatpush.bf16.msra.mxu0 %v424
      %489 = vmatpush.bf16.msra.mxu0 %v423
      %490 = vmatpush.bf16.msra.mxu0 %v422
      %491 = vmatpush.bf16.msra.mxu0 %v421
      %492 = vmatpush.bf16.msra.mxu0 %v420
      %493 = vmatpush.bf16.msra.mxu0 %v419
      %494 = vmatmul.bf16.gmra.mxu0 %v335
      %v495 = vpop.f32.mrf.mxu0
      %v496 = vadd.f32 0.0, %v495
      %v497 = vpop.f32.mrf.mxu0
      %v498 = vadd.f32 0.0, %v497
      %499 = vmatmul.bf16.gmra.mxu0 %v337
      %v500 = vpop.f32.mrf.mxu0
      %v501 = vadd.f32 0.0, %v500
      %v502 = vpop.f32.mrf.mxu0
      %v503 = vadd.f32 0.0, %v502
      %504 = vmatmul.bf16.gmra.mxu0 %v339
      %v505 = vpop.f32.mrf.mxu0
      %v506 = vadd.f32 0.0, %v505
      %v507 = vpop.f32.mrf.mxu0
      %v508 = vadd.f32 0.0, %v507
      %509 = vmatmul.bf16.gmra.mxu0 %v341
      %v510 = vpop.f32.mrf.mxu0
      %v511 = vadd.f32 0.0, %v510
      %v512 = vpop.f32.mrf.mxu0
      %v513 = vadd.f32 0.0, %v512
      %514 = vmatmul.bf16.gmra.mxu0 %v343
      %v515 = vpop.f32.mrf.mxu0
      %v516 = vadd.f32 0.0, %v515
      %v517 = vpop.f32.mrf.mxu0
      %v518 = vadd.f32 0.0, %v517
      %519 = vmatmul.bf16.gmra.mxu0 %v345
      %v520 = vpop.f32.mrf.mxu0
      %v521 = vadd.f32 0.0, %v520
      %v522 = vpop.f32.mrf.mxu0
      %v523 = vadd.f32 0.0, %v522
      %524 = vmatmul.bf16.gmra.mxu0 %v347
      %v525 = vpop.f32.mrf.mxu0
      %v526 = vadd.f32 0.0, %v525
      %v527 = vpop.f32.mrf.mxu0
      %v528 = vadd.f32 0.0, %v527
      %529 = vmatmul.bf16.gmra.mxu0 %v349
      %v530 = vpop.f32.mrf.mxu0
      %v531 = vadd.f32 0.0, %v530
      %v532 = vpop.f32.mrf.mxu0
      %v533 = vadd.f32 0.0, %v532
      %534 = vmatmul.bf16.gmra.mxu0 %v351
      %v535 = vpop.f32.mrf.mxu0
      %v536 = vadd.f32 0.0, %v535
      %v537 = vpop.f32.mrf.mxu0
      %v538 = vadd.f32 0.0, %v537
      %539 = vmatmul.bf16.gmra.mxu0 %v353
      %v540 = vpop.f32.mrf.mxu0
      %v541 = vadd.f32 0.0, %v540
      %v542 = vpop.f32.mrf.mxu0
      %v543 = vadd.f32 0.0, %v542
      %544 = vmatmul.bf16.gmra.mxu0 %v355
      %v545 = vpop.f32.mrf.mxu0
      %v546 = vadd.f32 0.0, %v545
      %v547 = vpop.f32.mrf.mxu0
      %v548 = vadd.f32 0.0, %v547
      %549 = vmatmul.bf16.gmra.mxu0 %v357
      %v550 = vpop.f32.mrf.mxu0
      %v551 = vadd.f32 0.0, %v550
      %v552 = vpop.f32.mrf.mxu0
      %v553 = vadd.f32 0.0, %v552
      %554 = vmatmul.bf16.gmra.mxu0 %v359
      %v555 = vpop.f32.mrf.mxu0
      %v556 = vadd.f32 0.0, %v555
      %v557 = vpop.f32.mrf.mxu0
      %v558 = vadd.f32 0.0, %v557
      %559 = vmatmul.bf16.gmra.mxu0 %v361
      %v560 = vpop.f32.mrf.mxu0
      %v561 = vadd.f32 0.0, %v560
      %v562 = vpop.f32.mrf.mxu0
      %v563 = vadd.f32 0.0, %v562
      %564 = vmatmul.bf16.gmra.mxu0 %v363
      %v565 = vpop.f32.mrf.mxu0
      %v566 = vadd.f32 0.0, %v565
      %v567 = vpop.f32.mrf.mxu0
      %v568 = vadd.f32 0.0, %v567
      %569 = vmatmul.bf16.gmra.mxu0 %v365
      %v570 = vpop.f32.mrf.mxu0
      %v571 = vadd.f32 0.0, %v570
      %v572 = vpop.f32.mrf.mxu0
      %v573 = vadd.f32 0.0, %v572
      %574 = vdwg.mxu0
      %575 = vmatpush.bf16.msra.mxu0 0
      %576 = vmatpush.bf16.msra.mxu0 0
      %577 = vmatpush.bf16.msra.mxu0 0
      %578 = vmatpush.bf16.msra.mxu0 0
      %579 = vmatpush.bf16.msra.mxu0 0
      %580 = vmatpush.bf16.msra.mxu0 0
      %581 = vmatpush.bf16.msra.mxu0 0
      %582 = vmatpush.bf16.msra.mxu0 %v427
      %583 = vmatmul.bf16.gmra.mxu0 %v439
      %v584 = vpop.f32.mrf.mxu0
      %v585 = vadd.f32 %v496, %v584
      %v586 = vpop.f32.mrf.mxu0
      %v587 = vadd.f32 %v498, %v586
      %588 = vmatmul.bf16.gmra.mxu0 %v442
      %v589 = vpop.f32.mrf.mxu0
      %v590 = vadd.f32 %v501, %v589
      %v591 = vpop.f32.mrf.mxu0
      %v592 = vadd.f32 %v503, %v591
      %593 = vmatmul.bf16.gmra.mxu0 %v445
      %v594 = vpop.f32.mrf.mxu0
      %v595 = vadd.f32 %v506, %v594
      %v596 = vpop.f32.mrf.mxu0
      %v597 = vadd.f32 %v508, %v596
      %598 = vmatmul.bf16.gmra.mxu0 %v448
      %v599 = vpop.f32.mrf.mxu0
      %v600 = vadd.f32 %v511, %v599
      %v601 = vpop.f32.mrf.mxu0
      %v602 = vadd.f32 %v513, %v601
      %603 = vmatmul.bf16.gmra.mxu0 %v451
      %v604 = vpop.f32.mrf.mxu0
      %v605 = vadd.f32 %v516, %v604
      %v606 = vpop.f32.mrf.mxu0
      %v607 = vadd.f32 %v518, %v606
      %608 = vmatmul.bf16.gmra.mxu0 %v454
      %v609 = vpop.f32.mrf.mxu0
      %v610 = vadd.f32 %v521, %v609
      %v611 = vpop.f32.mrf.mxu0
      %v612 = vadd.f32 %v523, %v611
      %613 = vmatmul.bf16.gmra.mxu0 %v457
      %v614 = vpop.f32.mrf.mxu0
      %v615 = vadd.f32 %v526, %v614
      %v616 = vpop.f32.mrf.mxu0
      %v617 = vadd.f32 %v528, %v616
      %618 = vmatmul.bf16.gmra.mxu0 %v460
      %v619 = vpop.f32.mrf.mxu0
      %v620 = vadd.f32 %v531, %v619
      %v621 = vpop.f32.mrf.mxu0
      %v622 = vadd.f32 %v533, %v621
      %623 = vmatmul.bf16.gmra.mxu0 %v463
      %v624 = vpop.f32.mrf.mxu0
      %v625 = vadd.f32 %v536, %v624
      %v626 = vpop.f32.mrf.mxu0
      %v627 = vadd.f32 %v538, %v626
      %628 = vmatmul.bf16.gmra.mxu0 %v466
      %v629 = vpop.f32.mrf.mxu0
      %v630 = vadd.f32 %v541, %v629
      %v631 = vpop.f32.mrf.mxu0
      %v632 = vadd.f32 %v543, %v631
      %633 = vmatmul.bf16.gmra.mxu0 %v469
      %v634 = vpop.f32.mrf.mxu0
      %v635 = vadd.f32 %v546, %v634
      %v636 = vpop.f32.mrf.mxu0
      %v637 = vadd.f32 %v548, %v636
      %638 = vmatmul.bf16.gmra.mxu0 %v472
      %v639 = vpop.f32.mrf.mxu0
      %v640 = vadd.f32 %v551, %v639
      %v641 = vpop.f32.mrf.mxu0
      %v642 = vadd.f32 %v553, %v641
      %643 = vmatmul.bf16.gmra.mxu0 %v475
      %v644 = vpop.f32.mrf.mxu0
      %v645 = vadd.f32 %v556, %v644
      %v646 = vpop.f32.mrf.mxu0
      %v647 = vadd.f32 %v558, %v646
      %648 = vmatmul.bf16.gmra.mxu0 %v478
      %v649 = vpop.f32.mrf.mxu0
      %v650 = vadd.f32 %v561, %v649
      %v651 = vpop.f32.mrf.mxu0
      %v652 = vadd.f32 %v563, %v651
      %653 = vmatmul.bf16.gmra.mxu0 %v481
      %v654 = vpop.f32.mrf.mxu0
      %v655 = vadd.f32 %v566, %v654
      %v656 = vpop.f32.mrf.mxu0
      %v657 = vadd.f32 %v568, %v656
      %658 = vmatmul.bf16.gmra.mxu0 %v484
      %v659 = vpop.f32.mrf.mxu0
      %v660 = vadd.f32 %v571, %v659
      %v661 = vpop.f32.mrf.mxu0
      %v662 = vadd.f32 %v573, %v661
      %663 = vdwg.mxu0
      %v664 = vpack.c.bf16 %v585, %v585
      %v665 = vpack.c.bf16 %v587, %v587
      %v666 = vpack.c.bf16 %v590, %v590
      %v667 = vpack.c.bf16 %v592, %v592
      %v668 = vpack.c.bf16 %v595, %v595
      %v669 = vpack.c.bf16 %v597, %v597
      %v670 = vpack.c.bf16 %v600, %v600
      %v671 = vpack.c.bf16 %v602, %v602
      %v672 = vpack.c.bf16 %v605, %v605
      %v673 = vpack.c.bf16 %v607, %v607
      %v674 = vpack.c.bf16 %v610, %v610
      %v675 = vpack.c.bf16 %v612, %v612
      %v676 = vpack.c.bf16 %v615, %v615
      %v677 = vpack.c.bf16 %v617, %v617
      %v678 = vpack.c.bf16 %v620, %v620
      %v679 = vpack.c.bf16 %v622, %v622
      %v680 = vpack.c.bf16 %v625, %v625
      %v681 = vpack.c.bf16 %v627, %v627
      %v682 = vpack.c.bf16 %v630, %v630
      %v683 = vpack.c.bf16 %v632, %v632
      %v684 = vpack.c.bf16 %v635, %v635
      %v685 = vpack.c.bf16 %v637, %v637
      %v686 = vpack.c.bf16 %v640, %v640
      %v687 = vpack.c.bf16 %v642, %v642
      %v688 = vpack.c.bf16 %v645, %v645
      %v689 = vpack.c.bf16 %v647, %v647
      %v690 = vpack.c.bf16 %v650, %v650
      %v691 = vpack.c.bf16 %v652, %v652
      %v692 = vpack.c.bf16 %v655, %v655
      %v693 = vpack.c.bf16 %v657, %v657
      %v694 = vpack.c.bf16 %v660, %v660
      %v695 = vpack.c.bf16 %v662, %v662
      %696 = vst [vmem:[%s182] sm:$0xf] %v664
      %697 = vst [vmem:[%s182 + $0x4] sm:$0xf] %v665
      %698 = vst [vmem:[%s182 + $0x8] sm:$0xf] %v666
      %699 = vst [vmem:[%s182 + $0xc] sm:$0xf] %v667
      %700 = vst [vmem:[%s182 + $0x10] sm:$0xf] %v668
      %701 = vst [vmem:[%s182 + $0x14] sm:$0xf] %v669
      %702 = vst [vmem:[%s182 + $0x18] sm:$0xf] %v670
      %703 = vst [vmem:[%s182 + $0x1c] sm:$0xf] %v671
      %704 = vst [vmem:[%s182 + $0x20] sm:$0xf] %v672
      %705 = vst [vmem:[%s182 + $0x24] sm:$0xf] %v673
      %706 = vst [vmem:[%s182 + $0x28] sm:$0xf] %v674
      %707 = vst [vmem:[%s182 + $0x2c] sm:$0xf] %v675
      %708 = vst [vmem:[%s182 + $0x30] sm:$0xf] %v676
      %709 = vst [vmem:[%s182 + $0x34] sm:$0xf] %v677
      %710 = vst [vmem:[%s182 + $0x38] sm:$0xf] %v678
      %711 = vst [vmem:[%s182 + $0x3c] sm:$0xf] %v679
      %712 = vst [vmem:[%s182 + $0x40] sm:$0xf] %v680
      %713 = vst [vmem:[%s182 + $0x44] sm:$0xf] %v681
      %714 = vst [vmem:[%s182 + $0x48] sm:$0xf] %v682
      %715 = vst [vmem:[%s182 + $0x4c] sm:$0xf] %v683
      %716 = vst [vmem:[%s182 + $0x50] sm:$0xf] %v684
      %717 = vst [vmem:[%s182 + $0x54] sm:$0xf] %v685
      %718 = vst [vmem:[%s182 + $0x58] sm:$0xf] %v686
      %719 = vst [vmem:[%s182 + $0x5c] sm:$0xf] %v687
      %720 = vst [vmem:[%s182 + $0x60] sm:$0xf] %v688
      %721 = vst [vmem:[%s182 + $0x64] sm:$0xf] %v689
      %722 = vst [vmem:[%s182 + $0x68] sm:$0xf] %v690
      %723 = vst [vmem:[%s182 + $0x6c] sm:$0xf] %v691
      %724 = vst [vmem:[%s182 + $0x70] sm:$0xf] %v692
      %725 = vst [vmem:[%s182 + $0x74] sm:$0xf] %v693
      %726 = vst [vmem:[%s182 + $0x78] sm:$0xf] %v694
      %727 = vst [vmem:[%s182 + $0x7c] sm:$0xf] %v695
      %v728 = vadd.f32 %v585, %v587
      %v729 = vadd.f32 %v728, %v590
      %v730 = vadd.f32 %v729, %v592
      %v731 = vadd.f32 %v730, %v595
      %v732 = vadd.f32 %v731, %v597
      %v733 = vadd.f32 %v732, %v600
      %v734 = vadd.f32 %v733, %v602
      %v735 = vadd.f32 %v734, %v605
      %v736 = vadd.f32 %v735, %v607
      %v737 = vadd.f32 %v736, %v610
      %v738 = vadd.f32 %v737, %v612
      %v739 = vadd.f32 %v738, %v615
      %v740 = vadd.f32 %v739, %v617
      %v741 = vadd.f32 %v740, %v620
      %v742 = vadd.f32 %v741, %v622
      %v743 = vadd.f32 %v742, %v625
      %v744 = vadd.f32 %v743, %v627
      %v745 = vadd.f32 %v744, %v630
      %v746 = vadd.f32 %v745, %v632
      %v747 = vadd.f32 %v746, %v635
      %v748 = vadd.f32 %v747, %v637
      %v749 = vadd.f32 %v748, %v640
      %v750 = vadd.f32 %v749, %v642
      %v751 = vadd.f32 %v750, %v645
      %v752 = vadd.f32 %v751, %v647
      %v753 = vadd.f32 %v752, %v650
      %v754 = vadd.f32 %v753, %v652
      %v755 = vadd.f32 %v754, %v655
      %v756 = vadd.f32 %v755, %v657
      %v757 = vadd.f32 %v756, %v660
      %v758 = vadd.f32 %v757, %v662
      %v759 = vrot.slane %v758, 4
      %v760 = vadd.f32 %v758, %v759
      %v761 = vrot.slane %v760, 2
      %v762 = vadd.f32 %v760, %v761
      %v763 = vrot.slane %v762, 1
      %v764 = vadd.f32 %v762, %v763
      %v765 = vmul.f32 %v585, %v585
      %v766 = vmul.f32 %v587, %v587
      %v767 = vmul.f32 %v590, %v590
      %v768 = vmul.f32 %v592, %v592
      %v769 = vmul.f32 %v595, %v595
      %v770 = vmul.f32 %v597, %v597
      %v771 = vmul.f32 %v600, %v600
      %v772 = vmul.f32 %v602, %v602
      %v773 = vmul.f32 %v605, %v605
      %v774 = vmul.f32 %v607, %v607
      %v775 = vmul.f32 %v610, %v610
      %v776 = vmul.f32 %v612, %v612
      %v777 = vmul.f32 %v615, %v615
      %v778 = vmul.f32 %v617, %v617
      %v779 = vmul.f32 %v620, %v620
      %v780 = vmul.f32 %v622, %v622
      %v781 = vmul.f32 %v625, %v625
      %v782 = vmul.f32 %v627, %v627
      %v783 = vmul.f32 %v630, %v630
      %v784 = vmul.f32 %v632, %v632
      %v785 = vmul.f32 %v635, %v635
      %v786 = vmul.f32 %v637, %v637
      %v787 = vmul.f32 %v640, %v640
      %v788 = vmul.f32 %v642, %v642
      %v789 = vmul.f32 %v645, %v645
      %v790 = vmul.f32 %v647, %v647
      %v791 = vmul.f32 %v650, %v650
      %v792 = vmul.f32 %v652, %v652
      %v793 = vmul.f32 %v655, %v655
      %v794 = vmul.f32 %v657, %v657
      %v795 = vmul.f32 %v660, %v660
      %v796 = vmul.f32 %v662, %v662
      %v797 = vadd.f32 %v765, %v766
      %v798 = vadd.f32 %v797, %v767
      %v799 = vadd.f32 %v798, %v768
      %v800 = vadd.f32 %v799, %v769
      %v801 = vadd.f32 %v800, %v770
      %v802 = vadd.f32 %v801, %v771
      %v803 = vadd.f32 %v802, %v772
      %v804 = vadd.f32 %v803, %v773
      %v805 = vadd.f32 %v804, %v774
      %v806 = vadd.f32 %v805, %v775
      %v807 = vadd.f32 %v806, %v776
      %v808 = vadd.f32 %v807, %v777
      %v809 = vadd.f32 %v808, %v778
      %v810 = vadd.f32 %v809, %v779
      %v811 = vadd.f32 %v810, %v780
      %v812 = vadd.f32 %v811, %v781
      %v813 = vadd.f32 %v812, %v782
      %v814 = vadd.f32 %v813, %v783
      %v815 = vadd.f32 %v814, %v784
      %v816 = vadd.f32 %v815, %v785
      %v817 = vadd.f32 %v816, %v786
      %v818 = vadd.f32 %v817, %v787
      %v819 = vadd.f32 %v818, %v788
      %v820 = vadd.f32 %v819, %v789
      %v821 = vadd.f32 %v820, %v790
      %v822 = vadd.f32 %v821, %v791
      %v823 = vadd.f32 %v822, %v792
      %v824 = vadd.f32 %v823, %v793
      %v825 = vadd.f32 %v824, %v794
      %v826 = vadd.f32 %v825, %v795
      %v827 = vadd.f32 %v826, %v796
      %v828 = vrot.slane %v827, 4
      %v829 = vadd.f32 %v827, %v828
      %v830 = vrot.slane %v829, 2
      %v831 = vadd.f32 %v829, %v830
      %v832 = vrot.slane %v831, 1
      %v833 = vadd.f32 %v831, %v832
      %v834 = vlaneseq
      %v835 = vshrl.u32 %v834, 7
      %vm836 = vcmp.lt.s32.totalorder %v835, 4
      %v837 = vsel %vm836, %v764, %v833
      %838 = vst [vmem:[%s187] sm:$0xff] %v837
      %s839 = smul.u32 32, %s15
      %p840 = scmp.lt.s32.totalorder %s839, 63
      %s841 = scalar_select %p840, %s839, 63
      %s842 = smul.addr %s841, 4
      %s843 = scalar_lea.vmem %s2, %s842
      %p844 = scmp.lt.s32.totalorder %s15, 1
      %s845 = scalar_select %p844, %s15, 1
      %s846 = smul.addr %s845, 8
      %s847 = scalar_lea.vmem %s3, %s846
      // Predicated region
      $region29: #{_lambda_.15} parent=27 // pred_check
        %p848 = pneg %p80
      $region30: #{_lambda_.15} parent=27 // pred_check_branch
        %850 = sbr.rel (%p848) target = $region32
      $region31: #{_lambda_.15} parent=27 // pred_region
        %s851 = smul.u32 32, %s15
      $region32: #{_lambda_.15} parent=27 // pred_fallthru
        _
      // Predicated region
      $region33: #{_lambda_.15} parent=27 // pred_check
        %p852 = pneg %p106
      $region34: #{_lambda_.15} parent=27 // pred_check_branch
        %854 = sbr.rel (%p852) target = $region36
      $region35: #{_lambda_.15} parent=27 // pred_region
        _
      $region36: #{_lambda_.15} parent=27 // pred_fallthru
        _
    $region28: #{_lambda_.15} parent=5 // pred_fallthru
      _
    %p855 = scmp.le.s32.totalorder 2, %s10
    // Predicated region
    $region37: #{_lambda_.15} parent=5 // pred_check
      %p856 = pneg %p855
    $region38: #{_lambda_.15} parent=5 // pred_check_branch
      %858 = sbr.rel (%p856) target = $region40
    $region39: #{_lambda_.15} parent=5 // pred_region
      %s859 = ssub.s32 %s10, 2
      // Predicated region
      $region41: #{_lambda_.15} parent=39 // pred_check
        %p860 = pneg %p86
      $region42: #{_lambda_.15} parent=39 // pred_check_branch
        %862 = sbr.rel (%p860) target = $region44
      $region43: #{_lambda_.15} parent=39 // pred_region
        %s863 = smul.u32 32, %s16
        %p864 = scmp.lt.s32.totalorder %s863, 63
        %s865 = scalar_select %p864, %s863, 63
        %s866 = smul.addr %s865, 4
        %s867 = scalar_lea.vmem %s2, %s866
      $region44: #{_lambda_.15} parent=39 // pred_fallthru
        _
      // Predicated region
      $region45: #{_lambda_.15} parent=39 // pred_check
        %p868 = pneg %p112
      $region46: #{_lambda_.15} parent=39 // pred_check_branch
        %870 = sbr.rel (%p868) target = $region48
      $region47: #{_lambda_.15} parent=39 // pred_region
        %p871 = scmp.lt.s32.totalorder %s16, 1
        %s872 = scalar_select %p871, %s16, 1
        %s873 = smul.addr %s872, 8
        %s874 = scalar_lea.vmem %s3, %s873
      $region48: #{_lambda_.15} parent=39 // pred_fallthru
        _
    $region40: #{_lambda_.15} parent=5 // pred_fallthru
      _
  $region6: #{_lambda_.15} parent=0 // loop_footer
    %s14 = sadd.s32 1, %s10
  $region7: #{_lambda_.15} parent=0 // loop_footer_branch
    %9 = sbr.rel target = $region3
  $region8: #{_lambda_.15} parent=0 // loop_exit
    _

// kernel: _lambda_.16
$region0: #{_lambda_.16}
  #allocation0 [shape = 'u32[]', space=smem, size = 0x4, offset = 0x4, fixed_abs, tag = 'smem constant byte address 0x4 - core index']
  #allocation1 [shape = 'u32[72,128]{1,0:T(1,128)}', space=vmem, size = 0x9000, scoped, tag = 'internal scratch']
  %s0 = inlined_call_operand.vmem [shape: bf16[512,128], index: 0, kind: input, shape index: {}]
  %s1 = inlined_call_operand.vmem [shape: f32[1,128], index: 1, kind: input, shape index: {}]
  %s2 = inlined_call_operand.vmem [shape: f32[1,128], index: 2, kind: input, shape index: {}]
  %s3 = inlined_call_operand.vmem [shape: bf16[512,128], index: 3, kind: output, shape index: {}]
  %s4 = sld [smem:[#allocation0]]
  $region45: #{_lambda_.16} parent=0
    _
  %s6 = ssub.s32 1, %s4
  %s7 = scalar_select 0, %s6, %s4
  loop: start=0, step=1, limit=4
  $region2: #{_lambda_.16} parent=0 // loop_pre_header
    _
  $region3: #{_lambda_.16} parent=0 // loop_header
    %s9 = sphi 0, %s13
    %p10 = scmp.ge.s32.totalorder %s9, 4
    %s19 = sphi 0, %s21
    %s22 = sphi 0, %s19
    %s23 = sphi 0, %s22
    %s39 = sphi 0, %s23
    %s43 = sphi 0, %s43
    %s45 = sphi 0, %s43
    %s46 = sphi 0, %s45
    %s60 = sphi 0, %s46
    %s64 = sphi 0, %s64
    %s66 = sphi 0, %s64
    %s67 = sphi 0, %s66
    %s81 = sphi 0, %s67
    %s87 = sphi 0, %s89
    %s90 = sphi 0, %s87
    %s91 = sphi 0, %s90
    %s107 = sphi 0, %s91
  $region4: #{_lambda_.16} parent=0 // loop_header_branch
    %12 = sbr.rel (%p10) target = $region8
  $region5: #{_lambda_.16} parent=0 // loop_body
    %s14 = ssub.s32 %s9, 1
    %s15 = ssub.s32 %s9, 2
    %s16 = sadd.s32 %s9, 1
    %s17 = ssub.s32 %s9, %s16
    %p18 = scmp.eq.s32.totalorder %s17, 0
    %s20 = sadd.s32 %s19, 1
    %s21 = scalar_select %p18, %s19, %s20
    %p24 = pneg %p18
    %p25 = scmp.eq.s32.totalorder %s9, 1
    %p26 = por %p24, %p25
    %p27 = scmp.ne.s32.totalorder %s19, %s22
    %p28 = scmp.eq.s32.totalorder %s9, 0
    %p29 = por %p27, %p28
    %p30 = scmp.ne.s32.totalorder %s19, %s22
    %p31 = scmp.eq.s32.totalorder %s14, 1
    %p32 = por %p30, %p31
    %p33 = scmp.ne.s32.totalorder %s22, %s23
    %p34 = scmp.eq.s32.totalorder %s14, 0
    %p35 = por %p33, %p34
    %p36 = scmp.ne.s32.totalorder %s22, %s23
    %p37 = scmp.eq.s32.totalorder %s15, 1
    %p38 = por %p36, %p37
    %p40 = scmp.ne.s32.totalorder %s23, %s39
    %p41 = scmp.eq.s32.totalorder %s15, 0
    %p42 = por %p40, %p41
    %s44 = sadd.s32 %s43, 1
    %p47 = scmp.eq.s32.totalorder %s9, 1
    %p48 = scmp.ne.s32.totalorder %s43, %s45
    %p49 = scmp.eq.s32.totalorder %s9, 0
    %p50 = por %p48, %p49
    %p51 = scmp.ne.s32.totalorder %s43, %s45
    %p52 = scmp.eq.s32.totalorder %s14, 1
    %p53 = por %p51, %p52
    %p54 = scmp.ne.s32.totalorder %s45, %s46
    %p55 = scmp.eq.s32.totalorder %s14, 0
    %p56 = por %p54, %p55
    %p57 = scmp.ne.s32.totalorder %s45, %s46
    %p58 = scmp.eq.s32.totalorder %s15, 1
    %p59 = por %p57, %p58
    %p61 = scmp.ne.s32.totalorder %s46, %s60
    %p62 = scmp.eq.s32.totalorder %s15, 0
    %p63 = por %p61, %p62
    %s65 = sadd.s32 %s64, 1
    %p68 = scmp.eq.s32.totalorder %s9, 1
    %p69 = scmp.ne.s32.totalorder %s64, %s66
    %p70 = scmp.eq.s32.totalorder %s9, 0
    %p71 = por %p69, %p70
    %p72 = scmp.ne.s32.totalorder %s64, %s66
    %p73 = scmp.eq.s32.totalorder %s14, 1
    %p74 = por %p72, %p73
    %p75 = scmp.ne.s32.totalorder %s66, %s67
    %p76 = scmp.eq.s32.totalorder %s14, 0
    %p77 = por %p75, %p76
    %p78 = scmp.ne.s32.totalorder %s66, %s67
    %p79 = scmp.eq.s32.totalorder %s15, 1
    %p80 = por %p78, %p79
    %p82 = scmp.ne.s32.totalorder %s67, %s81
    %p83 = scmp.eq.s32.totalorder %s15, 0
    %p84 = por %p82, %p83
    %s85 = ssub.s32 %s9, %s16
    %p86 = scmp.eq.s32.totalorder %s85, 0
    %s88 = sadd.s32 %s87, 1
    %s89 = scalar_select %p86, %s87, %s88
    %p92 = pneg %p86
    %p93 = scmp.eq.s32.totalorder %s9, 1
    %p94 = por %p92, %p93
    %p95 = scmp.ne.s32.totalorder %s87, %s90
    %p96 = scmp.eq.s32.totalorder %s9, 0
    %p97 = por %p95, %p96
    %p98 = scmp.ne.s32.totalorder %s87, %s90
    %p99 = scmp.eq.s32.totalorder %s14, 1
    %p100 = por %p98, %p99
    %p101 = scmp.ne.s32.totalorder %s90, %s91
    %p102 = scmp.eq.s32.totalorder %s14, 0
    %p103 = por %p101, %p102
    %p104 = scmp.ne.s32.totalorder %s90, %s91
    %p105 = scmp.eq.s32.totalorder %s15, 1
    %p106 = por %p104, %p105
    %p108 = scmp.ne.s32.totalorder %s91, %s107
    %p109 = scmp.eq.s32.totalorder %s15, 0
    %p110 = por %p108, %p109
    %p111 = scmp.le.s32.totalorder 1, %s9
    %p112 = scmp.lt.s32.totalorder %s9, 3
    %p113 = pnand %p111, %p112
    %p114 = pneg %p113
    // Predicated region
    $region9: #{_lambda_.16} parent=5 // pred_check
      _
    $region10: #{_lambda_.16} parent=5 // pred_check_branch
      %116 = sbr.rel (%p113) target = $region12
    $region11: #{_lambda_.16} parent=5 // pred_region
      %s117 = ssub.s32 %s9, 1
      // Predicated region
      $region13: #{_lambda_.16} parent=11 // pred_check
        %p118 = pneg %p56
      $region14: #{_lambda_.16} parent=11 // pred_check_branch
        %120 = sbr.rel (%p118) target = $region16
      $region15: #{_lambda_.16} parent=11 // pred_region
        _
      $region16: #{_lambda_.16} parent=11 // pred_fallthru
        _
      // Predicated region
      $region17: #{_lambda_.16} parent=11 // pred_check
        %p121 = pneg %p77
      $region18: #{_lambda_.16} parent=11 // pred_check_branch
        %123 = sbr.rel (%p121) target = $region20
      $region19: #{_lambda_.16} parent=11 // pred_region
        _
      $region20: #{_lambda_.16} parent=11 // pred_fallthru
        _
    $region12: #{_lambda_.16} parent=5 // pred_fallthru
      _
    %p124 = scmp.lt.s32.totalorder %s9, 2
    // Predicated region
    $region21: #{_lambda_.16} parent=5 // pred_check
      %p125 = pneg %p124
    $region22: #{_lambda_.16} parent=5 // pred_check_branch
      %127 = sbr.rel (%p125) target = $region24
    $region23: #{_lambda_.16} parent=5 // pred_region
      // Predicated region
      $region25: #{_lambda_.16} parent=23 // pred_check
        %p128 = pneg %p29
      $region26: #{_lambda_.16} parent=23 // pred_check_branch
        %130 = sbr.rel (%p128) target = $region28
      $region27: #{_lambda_.16} parent=23 // pred_region
        %s131 = smul.u32 32, %s9
        %p132 = scmp.lt.s32.totalorder %s131, 63
        %s133 = scalar_select %p132, %s131, 63
        %s134 = smul.addr %s133, 4
        %s135 = scalar_lea.vmem %s0, %s134
        %s136 = smul.u32 32, %s9
      $region28: #{_lambda_.16} parent=23 // pred_fallthru
        _
    $region24: #{_lambda_.16} parent=5 // pred_fallthru
      _
    %p137 = scmp.le.s32.totalorder 1, %s9
    %p138 = scmp.lt.s32.totalorder %s9, 3
    %p139 = pnand %p137, %p138
    %p140 = pneg %p139
    // Predicated region
    $region29: #{_lambda_.16} parent=5 // pred_check
      _
    $region30: #{_lambda_.16} parent=5 // pred_check_branch
      %142 = sbr.rel (%p139) target = $region32
    $region31: #{_lambda_.16} parent=5 // pred_region
      %s143 = ssub.s32 %s9, 1
      %s144 = smul.u32 32, %s14
      %p145 = scmp.lt.s32.totalorder %s144, 63
      %s146 = scalar_select %p145, %s144, 63
      %s147 = smul.addr %s146, 4
      %s148 = scalar_lea.vmem %s0, %s147
      %p149 = pneg %p35
      %p150 = pneg %p32
      %p151 = pneg %p56
      %p152 = pneg %p53
      %p153 = pneg %p77
      %p154 = pneg %p74
      %p155 = pneg %p103
      %p156 = pneg %p100
      %s157 = smul.u32 32, %s14
      %p158 = scmp.lt.s32.totalorder %s157, 63
      %s159 = scalar_select %p158, %s157, 63
      %s160 = smul.addr %s159, 4
      %s161 = scalar_lea.vmem %s3, %s160
      %s162 = smul.u32 32, %s14
      %p163 = scmp.lt.s32.totalorder %s162, 63
      %s164 = scalar_select %p163, %s162, 63
      %s165 = smul.addr %s164, 4
      %s166 = scalar_lea.vmem %s0, %s165
      %s167 = smul.u32 32, %s14
      %s168 = smul.u32 32, %s14
      %p169 = scmp.lt.s32.totalorder %s168, 63
      %s170 = scalar_select %p169, %s168, 63
      %s171 = smul.addr %s170, 4
      %s172 = scalar_lea.vmem %s3, %s171
      %s173 = smul.u32 32, %s14
      %v174 = vld [vmem:[%s166] sm:$0xf]
      %v175 = vld [vmem:[%s166 + $0x4] sm:$0xf]
      %v176 = vld [vmem:[%s166 + $0x8] sm:$0xf]
      %v177 = vld [vmem:[%s166 + $0xc] sm:$0xf]
      %v178 = vld [vmem:[%s166 + $0x10] sm:$0xf]
      %v179 = vld [vmem:[%s166 + $0x14] sm:$0xf]
      %v180 = vld [vmem:[%s166 + $0x18] sm:$0xf]
      %v181 = vld [vmem:[%s166 + $0x1c] sm:$0xf]
      %v182 = vld [vmem:[%s166 + $0x20] sm:$0xf]
      %v183 = vld [vmem:[%s166 + $0x24] sm:$0xf]
      %v184 = vld [vmem:[%s166 + $0x28] sm:$0xf]
      %v185 = vld [vmem:[%s166 + $0x2c] sm:$0xf]
      %v186 = vld [vmem:[%s166 + $0x30] sm:$0xf]
      %v187 = vld [vmem:[%s166 + $0x34] sm:$0xf]
      %v188 = vld [vmem:[%s166 + $0x38] sm:$0xf]
      %v189 = vld [vmem:[%s166 + $0x3c] sm:$0xf]
      %v190 = vld [vmem:[%s166 + $0x40] sm:$0xf]
      %v191 = vld [vmem:[%s166 + $0x44] sm:$0xf]
      %v192 = vld [vmem:[%s166 + $0x48] sm:$0xf]
      %v193 = vld [vmem:[%s166 + $0x4c] sm:$0xf]
      %v194 = vld [vmem:[%s166 + $0x50] sm:$0xf]
      %v195 = vld [vmem:[%s166 + $0x54] sm:$0xf]
      %v196 = vld [vmem:[%s166 + $0x58] sm:$0xf]
      %v197 = vld [vmem:[%s166 + $0x5c] sm:$0xf]
      %v198 = vld [vmem:[%s166 + $0x60] sm:$0xf]
      %v199 = vld [vmem:[%s166 + $0x64] sm:$0xf]
      %v200 = vld [vmem:[%s166 + $0x68] sm:$0xf]
      %v201 = vld [vmem:[%s166 + $0x6c] sm:$0xf]
      %v202 = vld [vmem:[%s166 + $0x70] sm:$0xf]
      %v203 = vld [vmem:[%s166 + $0x74] sm:$0xf]
      %v204 = vld [vmem:[%s166 + $0x78] sm:$0xf]
      %v205 = vld [vmem:[%s166 + $0x7c] sm:$0xf]
      %v206 = vunpack.c.l.bf16 %v174
      %v207 = vunpack.c.l.bf16 %v175
      %v208 = vunpack.c.l.bf16 %v176
      %v209 = vunpack.c.l.bf16 %v177
      %v210 = vunpack.c.l.bf16 %v178
      %v211 = vunpack.c.l.bf16 %v179
      %v212 = vunpack.c.l.bf16 %v180
      %v213 = vunpack.c.l.bf16 %v181
      %v214 = vunpack.c.l.bf16 %v182
      %v215 = vunpack.c.l.bf16 %v183
      %v216 = vunpack.c.l.bf16 %v184
      %v217 = vunpack.c.l.bf16 %v185
      %v218 = vunpack.c.l.bf16 %v186
      %v219 = vunpack.c.l.bf16 %v187
      %v220 = vunpack.c.l.bf16 %v188
      %v221 = vunpack.c.l.bf16 %v189
      %v222 = vunpack.c.l.bf16 %v190
      %v223 = vunpack.c.l.bf16 %v191
      %v224 = vunpack.c.l.bf16 %v192
      %v225 = vunpack.c.l.bf16 %v193
      %v226 = vunpack.c.l.bf16 %v194
      %v227 = vunpack.c.l.bf16 %v195
      %v228 = vunpack.c.l.bf16 %v196
      %v229 = vunpack.c.l.bf16 %v197
      %v230 = vunpack.c.l.bf16 %v198
      %v231 = vunpack.c.l.bf16 %v199
      %v232 = vunpack.c.l.bf16 %v200
      %v233 = vunpack.c.l.bf16 %v201
      %v234 = vunpack.c.l.bf16 %v202
      %v235 = vunpack.c.l.bf16 %v203
      %v236 = vunpack.c.l.bf16 %v204
      %v237 = vunpack.c.l.bf16 %v205
      %v238 = vld [vmem:[%s1] sm:$0x1]
      %v240 = vperm.slane %v238, 0
      %v242 = vmul.f32 %v206, %v240
      %v243 = vmul.f32 %v207, %v240
      %v244 = vmul.f32 %v208, %v240
      %v245 = vmul.f32 %v209, %v240
      %v246 = vmul.f32 %v210, %v240
      %v247 = vmul.f32 %v211, %v240
      %v248 = vmul.f32 %v212, %v240
      %v249 = vmul.f32 %v213, %v240
      %v250 = vmul.f32 %v214, %v240
      %v251 = vmul.f32 %v215, %v240
      %v252 = vmul.f32 %v216, %v240
      %v253 = vmul.f32 %v217, %v240
      %v254 = vmul.f32 %v218, %v240
      %v255 = vmul.f32 %v219, %v240
      %v256 = vmul.f32 %v220, %v240
      %v257 = vmul.f32 %v221, %v240
      %v258 = vmul.f32 %v222, %v240
      %v259 = vmul.f32 %v223, %v240
      %v260 = vmul.f32 %v224, %v240
      %v261 = vmul.f32 %v225, %v240
      %v262 = vmul.f32 %v226, %v240
      %v263 = vmul.f32 %v227, %v240
      %v264 = vmul.f32 %v228, %v240
      %v265 = vmul.f32 %v229, %v240
      %v266 = vmul.f32 %v230, %v240
      %v267 = vmul.f32 %v231, %v240
      %v268 = vmul.f32 %v232, %v240
      %v269 = vmul.f32 %v233, %v240
      %v270 = vmul.f32 %v234, %v240
      %v271 = vmul.f32 %v235, %v240
      %v272 = vmul.f32 %v236, %v240
      %v273 = vmul.f32 %v237, %v240
      %v274 = vld [vmem:[%s2] sm:$0x1]
      %v276 = vperm.slane %v274, 0
      %v278 = vadd.f32 %v242, %v276
      %v279 = vadd.f32 %v243, %v276
      %v280 = vadd.f32 %v244, %v276
      %v281 = vadd.f32 %v245, %v276
      %v282 = vadd.f32 %v246, %v276
      %v283 = vadd.f32 %v247, %v276
      %v284 = vadd.f32 %v248, %v276
      %v285 = vadd.f32 %v249, %v276
      %v286 = vadd.f32 %v250, %v276
      %v287 = vadd.f32 %v251, %v276
      %v288 = vadd.f32 %v252, %v276
      %v289 = vadd.f32 %v253, %v276
      %v290 = vadd.f32 %v254, %v276
      %v291 = vadd.f32 %v255, %v276
      %v292 = vadd.f32 %v256, %v276
      %v293 = vadd.f32 %v257, %v276
      %v294 = vadd.f32 %v258, %v276
      %v295 = vadd.f32 %v259, %v276
      %v296 = vadd.f32 %v260, %v276
      %v297 = vadd.f32 %v261, %v276
      %v298 = vadd.f32 %v262, %v276
      %v299 = vadd.f32 %v263, %v276
      %v300 = vadd.f32 %v264, %v276
      %v301 = vadd.f32 %v265, %v276
      %v302 = vadd.f32 %v266, %v276
      %v303 = vadd.f32 %v267, %v276
      %v304 = vadd.f32 %v268, %v276
      %v305 = vadd.f32 %v269, %v276
      %v306 = vadd.f32 %v270, %v276
      %v307 = vadd.f32 %v271, %v276
      %v308 = vadd.f32 %v272, %v276
      %v309 = vadd.f32 %v273, %v276
      %v310 = vmax.f32 %v278, 0.0
      %v311 = vmax.f32 %v279, 0.0
      %v312 = vmax.f32 %v280, 0.0
      %v313 = vmax.f32 %v281, 0.0
      %v314 = vmax.f32 %v282, 0.0
      %v315 = vmax.f32 %v283, 0.0
      %v316 = vmax.f32 %v284, 0.0
      %v317 = vmax.f32 %v285, 0.0
      %v318 = vmax.f32 %v286, 0.0
      %v319 = vmax.f32 %v287, 0.0
      %v320 = vmax.f32 %v288, 0.0
      %v321 = vmax.f32 %v289, 0.0
      %v322 = vmax.f32 %v290, 0.0
      %v323 = vmax.f32 %v291, 0.0
      %v324 = vmax.f32 %v292, 0.0
      %v325 = vmax.f32 %v293, 0.0
      %v326 = vmax.f32 %v294, 0.0
      %v327 = vmax.f32 %v295, 0.0
      %v328 = vmax.f32 %v296, 0.0
      %v329 = vmax.f32 %v297, 0.0
      %v330 = vmax.f32 %v298, 0.0
      %v331 = vmax.f32 %v299, 0.0
      %v332 = vmax.f32 %v300, 0.0
      %v333 = vmax.f32 %v301, 0.0
      %v334 = vmax.f32 %v302, 0.0
      %v335 = vmax.f32 %v303, 0.0
      %v336 = vmax.f32 %v304, 0.0
      %v337 = vmax.f32 %v305, 0.0
      %v338 = vmax.f32 %v306, 0.0
      %v339 = vmax.f32 %v307, 0.0
      %v340 = vmax.f32 %v308, 0.0
      %v341 = vmax.f32 %v309, 0.0
      %v342 = vpack.c.bf16 %v310, %v310
      %v343 = vpack.c.bf16 %v311, %v311
      %v344 = vpack.c.bf16 %v312, %v312
      %v345 = vpack.c.bf16 %v313, %v313
      %v346 = vpack.c.bf16 %v314, %v314
      %v347 = vpack.c.bf16 %v315, %v315
      %v348 = vpack.c.bf16 %v316, %v316
      %v349 = vpack.c.bf16 %v317, %v317
      %v350 = vpack.c.bf16 %v318, %v318
      %v351 = vpack.c.bf16 %v319, %v319
      %v352 = vpack.c.bf16 %v320, %v320
      %v353 = vpack.c.bf16 %v321, %v321
      %v354 = vpack.c.bf16 %v322, %v322
      %v355 = vpack.c.bf16 %v323, %v323
      %v356 = vpack.c.bf16 %v324, %v324
      %v357 = vpack.c.bf16 %v325, %v325
      %v358 = vpack.c.bf16 %v326, %v326
      %v359 = vpack.c.bf16 %v327, %v327
      %v360 = vpack.c.bf16 %v328, %v328
      %v361 = vpack.c.bf16 %v329, %v329
      %v362 = vpack.c.bf16 %v330, %v330
      %v363 = vpack.c.bf16 %v331, %v331
      %v364 = vpack.c.bf16 %v332, %v332
      %v365 = vpack.c.bf16 %v333, %v333
      %v366 = vpack.c.bf16 %v334, %v334
      %v367 = vpack.c.bf16 %v335, %v335
      %v368 = vpack.c.bf16 %v336, %v336
      %v369 = vpack.c.bf16 %v337, %v337
      %v370 = vpack.c.bf16 %v338, %v338
      %v371 = vpack.c.bf16 %v339, %v339
      %v372 = vpack.c.bf16 %v340, %v340
      %v373 = vpack.c.bf16 %v341, %v341
      %374 = vst [vmem:[%s172] sm:$0xf] %v342
      %375 = vst [vmem:[%s172 + $0x4] sm:$0xf] %v343
      %376 = vst [vmem:[%s172 + $0x8] sm:$0xf] %v344
      %377 = vst [vmem:[%s172 + $0xc] sm:$0xf] %v345
      %378 = vst [vmem:[%s172 + $0x10] sm:$0xf] %v346
      %379 = vst [vmem:[%s172 + $0x14] sm:$0xf] %v347
      %380 = vst [vmem:[%s172 + $0x18] sm:$0xf] %v348
      %381 = vst [vmem:[%s172 + $0x1c] sm:$0xf] %v349
      %382 = vst [vmem:[%s172 + $0x20] sm:$0xf] %v350
      %383 = vst [vmem:[%s172 + $0x24] sm:$0xf] %v351
      %384 = vst [vmem:[%s172 + $0x28] sm:$0xf] %v352
      %385 = vst [vmem:[%s172 + $0x2c] sm:$0xf] %v353
      %386 = vst [vmem:[%s172 + $0x30] sm:$0xf] %v354
      %387 = vst [vmem:[%s172 + $0x34] sm:$0xf] %v355
      %388 = vst [vmem:[%s172 + $0x38] sm:$0xf] %v356
      %389 = vst [vmem:[%s172 + $0x3c] sm:$0xf] %v357
      %390 = vst [vmem:[%s172 + $0x40] sm:$0xf] %v358
      %391 = vst [vmem:[%s172 + $0x44] sm:$0xf] %v359
      %392 = vst [vmem:[%s172 + $0x48] sm:$0xf] %v360
      %393 = vst [vmem:[%s172 + $0x4c] sm:$0xf] %v361
      %394 = vst [vmem:[%s172 + $0x50] sm:$0xf] %v362
      %395 = vst [vmem:[%s172 + $0x54] sm:$0xf] %v363
      %396 = vst [vmem:[%s172 + $0x58] sm:$0xf] %v364
      %397 = vst [vmem:[%s172 + $0x5c] sm:$0xf] %v365
      %398 = vst [vmem:[%s172 + $0x60] sm:$0xf] %v366
      %399 = vst [vmem:[%s172 + $0x64] sm:$0xf] %v367
      %400 = vst [vmem:[%s172 + $0x68] sm:$0xf] %v368
      %401 = vst [vmem:[%s172 + $0x6c] sm:$0xf] %v369
      %402 = vst [vmem:[%s172 + $0x70] sm:$0xf] %v370
      %403 = vst [vmem:[%s172 + $0x74] sm:$0xf] %v371
      %404 = vst [vmem:[%s172 + $0x78] sm:$0xf] %v372
      %405 = vst [vmem:[%s172 + $0x7c] sm:$0xf] %v373
      %s406 = smul.u32 32, %s14
      %p407 = scmp.lt.s32.totalorder %s406, 63
      %s408 = scalar_select %p407, %s406, 63
      %s409 = smul.addr %s408, 4
      %s410 = scalar_lea.vmem %s3, %s409
      // Predicated region
      $region33: #{_lambda_.16} parent=31 // pred_check
        %p411 = pneg %p100
      $region34: #{_lambda_.16} parent=31 // pred_check_branch
        %413 = sbr.rel (%p411) target = $region36
      $region35: #{_lambda_.16} parent=31 // pred_region
        %s414 = smul.u32 32, %s14
      $region36: #{_lambda_.16} parent=31 // pred_fallthru
        _
    $region32: #{_lambda_.16} parent=5 // pred_fallthru
      _
    %p415 = scmp.le.s32.totalorder 2, %s9
    // Predicated region
    $region37: #{_lambda_.16} parent=5 // pred_check
      %p416 = pneg %p415
    $region38: #{_lambda_.16} parent=5 // pred_check_branch
      %418 = sbr.rel (%p416) target = $region40
    $region39: #{_lambda_.16} parent=5 // pred_region
      %s419 = ssub.s32 %s9, 2
      // Predicated region
      $region41: #{_lambda_.16} parent=39 // pred_check
        %p420 = pneg %p106
      $region42: #{_lambda_.16} parent=39 // pred_check_branch
        %422 = sbr.rel (%p420) target = $region44
      $region43: #{_lambda_.16} parent=39 // pred_region
        %s423 = smul.u32 32, %s15
        %p424 = scmp.lt.s32.totalorder %s423, 63
        %s425 = scalar_select %p424, %s423, 63
        %s426 = smul.addr %s425, 4
        %s427 = scalar_lea.vmem %s3, %s426
      $region44: #{_lambda_.16} parent=39 // pred_fallthru
        _
    $region40: #{_lambda_.16} parent=5 // pred_fallthru
      _
  $region6: #{_lambda_.16} parent=0 // loop_footer
    %s13 = sadd.s32 1, %s9
  $region7: #{_lambda_.16} parent=0 // loop_footer_branch
    %8 = sbr.rel target = $region3
  $region8: #{_lambda_.16} parent=0 // loop_exit
    _

// kernel: _lambda_.17
$region0: #{_lambda_.17}
  #allocation0 [shape = 'u32[]', space=smem, size = 0x4, offset = 0x4, fixed_abs, tag = 'smem constant byte address 0x4 - core index']
  #allocation1 [shape = 'u32[72,128]{1,0:T(1,128)}', space=vmem, size = 0x9000, scoped, tag = 'internal scratch']
  %s0 = inlined_call_operand.vmem [shape: bf16[2048,80], index: 0, kind: input, shape index: {}]
  %s1 = inlined_call_operand.vmem [shape: bf16[80,128], index: 1, kind: input, shape index: {}]
  %s2 = inlined_call_operand.vmem [shape: f32[1,128], index: 2, kind: input, shape index: {}]
  %s3 = inlined_call_operand.vmem [shape: bf16[2048,128], index: 3, kind: output, shape index: {}]
  %s4 = sld [smem:[#allocation0]]
  $region45: #{_lambda_.17} parent=0
    _
  %s6 = ssub.s32 1, %s4
  %s7 = scalar_select 0, %s6, %s4
  loop: start=0, step=1, limit=6
  $region2: #{_lambda_.17} parent=0 // loop_pre_header
    _
  $region3: #{_lambda_.17} parent=0 // loop_header
    %s9 = sphi 0, %s13
    %p10 = scmp.ge.s32.totalorder %s9, 6
    %s19 = sphi 0, %s21
    %s22 = sphi 0, %s19
    %s23 = sphi 0, %s22
    %s39 = sphi 0, %s23
    %s43 = sphi 0, %s43
    %s45 = sphi 0, %s43
    %s46 = sphi 0, %s45
    %s60 = sphi 0, %s46
    %s64 = sphi 0, %s64
    %s66 = sphi 0, %s64
    %s67 = sphi 0, %s66
    %s81 = sphi 0, %s67
    %s87 = sphi 0, %s89
    %s90 = sphi 0, %s87
    %s91 = sphi 0, %s90
    %s107 = sphi 0, %s91
  $region4: #{_lambda_.17} parent=0 // loop_header_branch
    %12 = sbr.rel (%p10) target = $region8
  $region5: #{_lambda_.17} parent=0 // loop_body
    %s14 = ssub.s32 %s9, 1
    %s15 = ssub.s32 %s9, 2
    %s16 = sadd.s32 %s9, 1
    %s17 = ssub.s32 %s9, %s16
    %p18 = scmp.eq.s32.totalorder %s17, 0
    %s20 = sadd.s32 %s19, 1
    %s21 = scalar_select %p18, %s19, %s20
    %p24 = pneg %p18
    %p25 = scmp.eq.s32.totalorder %s9, 3
    %p26 = por %p24, %p25
    %p27 = scmp.ne.s32.totalorder %s19, %s22
    %p28 = scmp.eq.s32.totalorder %s9, 0
    %p29 = por %p27, %p28
    %p30 = scmp.ne.s32.totalorder %s19, %s22
    %p31 = scmp.eq.s32.totalorder %s14, 3
    %p32 = por %p30, %p31
    %p33 = scmp.ne.s32.totalorder %s22, %s23
    %p34 = scmp.eq.s32.totalorder %s14, 0
    %p35 = por %p33, %p34
    %p36 = scmp.ne.s32.totalorder %s22, %s23
    %p37 = scmp.eq.s32.totalorder %s15, 3
    %p38 = por %p36, %p37
    %p40 = scmp.ne.s32.totalorder %s23, %s39
    %p41 = scmp.eq.s32.totalorder %s15, 0
    %p42 = por %p40, %p41
    %s44 = sadd.s32 %s43, 1
    %p47 = scmp.eq.s32.totalorder %s9, 3
    %p48 = scmp.ne.s32.totalorder %s43, %s45
    %p49 = scmp.eq.s32.totalorder %s9, 0
    %p50 = por %p48, %p49
    %p51 = scmp.ne.s32.totalorder %s43, %s45
    %p52 = scmp.eq.s32.totalorder %s14, 3
    %p53 = por %p51, %p52
    %p54 = scmp.ne.s32.totalorder %s45, %s46
    %p55 = scmp.eq.s32.totalorder %s14, 0
    %p56 = por %p54, %p55
    %p57 = scmp.ne.s32.totalorder %s45, %s46
    %p58 = scmp.eq.s32.totalorder %s15, 3
    %p59 = por %p57, %p58
    %p61 = scmp.ne.s32.totalorder %s46, %s60
    %p62 = scmp.eq.s32.totalorder %s15, 0
    %p63 = por %p61, %p62
    %s65 = sadd.s32 %s64, 1
    %p68 = scmp.eq.s32.totalorder %s9, 3
    %p69 = scmp.ne.s32.totalorder %s64, %s66
    %p70 = scmp.eq.s32.totalorder %s9, 0
    %p71 = por %p69, %p70
    %p72 = scmp.ne.s32.totalorder %s64, %s66
    %p73 = scmp.eq.s32.totalorder %s14, 3
    %p74 = por %p72, %p73
    %p75 = scmp.ne.s32.totalorder %s66, %s67
    %p76 = scmp.eq.s32.totalorder %s14, 0
    %p77 = por %p75, %p76
    %p78 = scmp.ne.s32.totalorder %s66, %s67
    %p79 = scmp.eq.s32.totalorder %s15, 3
    %p80 = por %p78, %p79
    %p82 = scmp.ne.s32.totalorder %s67, %s81
    %p83 = scmp.eq.s32.totalorder %s15, 0
    %p84 = por %p82, %p83
    %s85 = ssub.s32 %s9, %s16
    %p86 = scmp.eq.s32.totalorder %s85, 0
    %s88 = sadd.s32 %s87, 1
    %s89 = scalar_select %p86, %s87, %s88
    %p92 = pneg %p86
    %p93 = scmp.eq.s32.totalorder %s9, 3
    %p94 = por %p92, %p93
    %p95 = scmp.ne.s32.totalorder %s87, %s90
    %p96 = scmp.eq.s32.totalorder %s9, 0
    %p97 = por %p95, %p96
    %p98 = scmp.ne.s32.totalorder %s87, %s90
    %p99 = scmp.eq.s32.totalorder %s14, 3
    %p100 = por %p98, %p99
    %p101 = scmp.ne.s32.totalorder %s90, %s91
    %p102 = scmp.eq.s32.totalorder %s14, 0
    %p103 = por %p101, %p102
    %p104 = scmp.ne.s32.totalorder %s90, %s91
    %p105 = scmp.eq.s32.totalorder %s15, 3
    %p106 = por %p104, %p105
    %p108 = scmp.ne.s32.totalorder %s91, %s107
    %p109 = scmp.eq.s32.totalorder %s15, 0
    %p110 = por %p108, %p109
    %p111 = scmp.le.s32.totalorder 1, %s9
    %p112 = scmp.lt.s32.totalorder %s9, 5
    %p113 = pnand %p111, %p112
    %p114 = pneg %p113
    // Predicated region
    $region9: #{_lambda_.17} parent=5 // pred_check
      _
    $region10: #{_lambda_.17} parent=5 // pred_check_branch
      %116 = sbr.rel (%p113) target = $region12
    $region11: #{_lambda_.17} parent=5 // pred_region
      %s117 = ssub.s32 %s9, 1
      // Predicated region
      $region13: #{_lambda_.17} parent=11 // pred_check
        %p118 = pneg %p56
      $region14: #{_lambda_.17} parent=11 // pred_check_branch
        %120 = sbr.rel (%p118) target = $region16
      $region15: #{_lambda_.17} parent=11 // pred_region
        _
      $region16: #{_lambda_.17} parent=11 // pred_fallthru
        _
      // Predicated region
      $region17: #{_lambda_.17} parent=11 // pred_check
        %p121 = pneg %p77
      $region18: #{_lambda_.17} parent=11 // pred_check_branch
        %123 = sbr.rel (%p121) target = $region20
      $region19: #{_lambda_.17} parent=11 // pred_region
        _
      $region20: #{_lambda_.17} parent=11 // pred_fallthru
        _
    $region12: #{_lambda_.17} parent=5 // pred_fallthru
      _
    %p124 = scmp.lt.s32.totalorder %s9, 4
    // Predicated region
    $region21: #{_lambda_.17} parent=5 // pred_check
      %p125 = pneg %p124
    $region22: #{_lambda_.17} parent=5 // pred_check_branch
      %127 = sbr.rel (%p125) target = $region24
    $region23: #{_lambda_.17} parent=5 // pred_region
      // Predicated region
      $region25: #{_lambda_.17} parent=23 // pred_check
        %p128 = pneg %p29
      $region26: #{_lambda_.17} parent=23 // pred_check_branch
        %130 = sbr.rel (%p128) target = $region28
      $region27: #{_lambda_.17} parent=23 // pred_region
        %s131 = smul.u32 64, %s9
        %p132 = scmp.lt.s32.totalorder %s131, 255
        %s133 = scalar_select %p132, %s131, 255
        %s134 = smul.addr %s133, 4
        %s135 = scalar_lea.vmem %s0, %s134
        %s136 = smul.u32 64, %s9
      $region28: #{_lambda_.17} parent=23 // pred_fallthru
        _
    $region24: #{_lambda_.17} parent=5 // pred_fallthru
      _
    %p137 = scmp.le.s32.totalorder 1, %s9
    %p138 = scmp.lt.s32.totalorder %s9, 5
    %p139 = pnand %p137, %p138
    %p140 = pneg %p139
    // Predicated region
    $region29: #{_lambda_.17} parent=5 // pred_check
      _
    $region30: #{_lambda_.17} parent=5 // pred_check_branch
      %142 = sbr.rel (%p139) target = $region32
    $region31: #{_lambda_.17} parent=5 // pred_region
      %s143 = ssub.s32 %s9, 1
      %s144 = smul.u32 64, %s14
      %p145 = scmp.lt.s32.totalorder %s144, 255
      %s146 = scalar_select %p145, %s144, 255
      %s147 = smul.addr %s146, 4
      %s148 = scalar_lea.vmem %s0, %s147
      %p149 = pneg %p35
      %p150 = pneg %p32
      %p151 = pneg %p56
      %p152 = pneg %p53
      %p153 = pneg %p77
      %p154 = pneg %p74
      %p155 = pneg %p103
      %p156 = pneg %p100
      %s157 = smul.u32 64, %s14
      %p158 = scmp.lt.s32.totalorder %s157, 255
      %s159 = scalar_select %p158, %s157, 255
      %s160 = smul.addr %s159, 4
      %s161 = scalar_lea.vmem %s3, %s160
      %s162 = smul.u32 64, %s14
      %p163 = scmp.lt.s32.totalorder %s162, 255
      %s164 = scalar_select %p163, %s162, 255
      %s165 = smul.addr %s164, 4
      %s166 = scalar_lea.vmem %s0, %s165
      %s167 = smul.u32 64, %s14
      %s168 = smul.u32 64, %s14
      %p169 = scmp.lt.s32.totalorder %s168, 255
      %s170 = scalar_select %p169, %s168, 255
      %s171 = smul.addr %s170, 4
      %s172 = scalar_lea.vmem %s3, %s171
      %s173 = smul.u32 64, %s14
      %v175 = vld [vmem:[%s166] sm:$0xf]
      %v176 = vld [vmem:[%s166 + $0x4] sm:$0xf]
      %v177 = vld [vmem:[%s166 + $0x8] sm:$0xf]
      %v178 = vld [vmem:[%s166 + $0xc] sm:$0xf]
      %v179 = vld [vmem:[%s166 + $0x10] sm:$0xf]
      %v180 = vld [vmem:[%s166 + $0x14] sm:$0xf]
      %v181 = vld [vmem:[%s166 + $0x18] sm:$0xf]
      %v182 = vld [vmem:[%s166 + $0x1c] sm:$0xf]
      %v183 = vld [vmem:[%s166 + $0x20] sm:$0xf]
      %v184 = vld [vmem:[%s166 + $0x24] sm:$0xf]
      %v185 = vld [vmem:[%s166 + $0x28] sm:$0xf]
      %v186 = vld [vmem:[%s166 + $0x2c] sm:$0xf]
      %v187 = vld [vmem:[%s166 + $0x30] sm:$0xf]
      %v188 = vld [vmem:[%s166 + $0x34] sm:$0xf]
      %v189 = vld [vmem:[%s166 + $0x38] sm:$0xf]
      %v190 = vld [vmem:[%s166 + $0x3c] sm:$0xf]
      %v191 = vld [vmem:[%s166 + $0x40] sm:$0xf]
      %v192 = vld [vmem:[%s166 + $0x44] sm:$0xf]
      %v193 = vld [vmem:[%s166 + $0x48] sm:$0xf]
      %v194 = vld [vmem:[%s166 + $0x4c] sm:$0xf]
      %v195 = vld [vmem:[%s166 + $0x50] sm:$0xf]
      %v196 = vld [vmem:[%s166 + $0x54] sm:$0xf]
      %v197 = vld [vmem:[%s166 + $0x58] sm:$0xf]
      %v198 = vld [vmem:[%s166 + $0x5c] sm:$0xf]
      %v199 = vld [vmem:[%s166 + $0x60] sm:$0xf]
      %v200 = vld [vmem:[%s166 + $0x64] sm:$0xf]
      %v201 = vld [vmem:[%s166 + $0x68] sm:$0xf]
      %v202 = vld [vmem:[%s166 + $0x6c] sm:$0xf]
      %v203 = vld [vmem:[%s166 + $0x70] sm:$0xf]
      %v204 = vld [vmem:[%s166 + $0x74] sm:$0xf]
      %v205 = vld [vmem:[%s166 + $0x78] sm:$0xf]
      %v206 = vld [vmem:[%s166 + $0x7c] sm:$0xf]
      %v207 = vld [vmem:[%s166 + $0x80] sm:$0xf]
      %v208 = vld [vmem:[%s166 + $0x84] sm:$0xf]
      %v209 = vld [vmem:[%s166 + $0x88] sm:$0xf]
      %v210 = vld [vmem:[%s166 + $0x8c] sm:$0xf]
      %v211 = vld [vmem:[%s166 + $0x90] sm:$0xf]
      %v212 = vld [vmem:[%s166 + $0x94] sm:$0xf]
      %v213 = vld [vmem:[%s166 + $0x98] sm:$0xf]
      %v214 = vld [vmem:[%s166 + $0x9c] sm:$0xf]
      %v215 = vld [vmem:[%s166 + $0xa0] sm:$0xf]
      %v216 = vld [vmem:[%s166 + $0xa4] sm:$0xf]
      %v217 = vld [vmem:[%s166 + $0xa8] sm:$0xf]
      %v218 = vld [vmem:[%s166 + $0xac] sm:$0xf]
      %v219 = vld [vmem:[%s166 + $0xb0] sm:$0xf]
      %v220 = vld [vmem:[%s166 + $0xb4] sm:$0xf]
      %v221 = vld [vmem:[%s166 + $0xb8] sm:$0xf]
      %v222 = vld [vmem:[%s166 + $0xbc] sm:$0xf]
      %v223 = vld [vmem:[%s166 + $0xc0] sm:$0xf]
      %v224 = vld [vmem:[%s166 + $0xc4] sm:$0xf]
      %v225 = vld [vmem:[%s166 + $0xc8] sm:$0xf]
      %v226 = vld [vmem:[%s166 + $0xcc] sm:$0xf]
      %v227 = vld [vmem:[%s166 + $0xd0] sm:$0xf]
      %v228 = vld [vmem:[%s166 + $0xd4] sm:$0xf]
      %v229 = vld [vmem:[%s166 + $0xd8] sm:$0xf]
      %v230 = vld [vmem:[%s166 + $0xdc] sm:$0xf]
      %v231 = vld [vmem:[%s166 + $0xe0] sm:$0xf]
      %v232 = vld [vmem:[%s166 + $0xe4] sm:$0xf]
      %v233 = vld [vmem:[%s166 + $0xe8] sm:$0xf]
      %v234 = vld [vmem:[%s166 + $0xec] sm:$0xf]
      %v235 = vld [vmem:[%s166 + $0xf0] sm:$0xf]
      %v236 = vld [vmem:[%s166 + $0xf4] sm:$0xf]
      %v237 = vld [vmem:[%s166 + $0xf8] sm:$0xf]
      %v238 = vld [vmem:[%s166 + $0xfc] sm:$0xf]
      %v239 = vld [vmem:[%s1] sm:$0xf]
      %v240 = vld [vmem:[%s1 + $0x4] sm:$0xf]
      %v241 = vld [vmem:[%s1 + $0x8] sm:$0xf]
      %v242 = vld [vmem:[%s1 + $0xc] sm:$0xf]
      %v243 = vld [vmem:[%s1 + $0x10] sm:$0xf]
      %v244 = vld [vmem:[%s1 + $0x14] sm:$0xf]
      %v245 = vld [vmem:[%s1 + $0x18] sm:$0xf]
      %v246 = vld [vmem:[%s1 + $0x1c] sm:$0xf]
      %v247 = vld [vmem:[%s1 + $0x20] sm:$0xf]
      %v248 = vld [vmem:[%s1 + $0x24] sm:$0xf]
      %v249 = vld [vmem:[%s2] sm:$0x1]
      %v251 = vperm.slane %v249, 0
      %v317 = vunpack.c.l.b16 %v175
      %v318 = vunpack.c.l.b16 %v176
      %v319 = vunpack.c.l.b16 %v177
      %v320 = vunpack.c.l.b16 %v178
      %v321 = vunpack.c.l.b16 %v179
      %v322 = vunpack.c.l.b16 %v180
      %v323 = vunpack.c.l.b16 %v181
      %v324 = vunpack.c.l.b16 %v182
      %v325 = vunpack.c.l.b16 %v183
      %v326 = vunpack.c.l.b16 %v184
      %v327 = vunpack.c.l.b16 %v185
      %v328 = vunpack.c.l.b16 %v186
      %v329 = vunpack.c.l.b16 %v187
      %v330 = vunpack.c.l.b16 %v188
      %v331 = vunpack.c.l.b16 %v189
      %v332 = vunpack.c.l.b16 %v190
      %v333 = vunpack.c.l.b16 %v191
      %v334 = vunpack.c.l.b16 %v192
      %v335 = vunpack.c.l.b16 %v193
      %v336 = vunpack.c.l.b16 %v194
      %v337 = vunpack.c.l.b16 %v195
      %v338 = vunpack.c.l.b16 %v196
      %v339 = vunpack.c.l.b16 %v197
      %v340 = vunpack.c.l.b16 %v198
      %v341 = vunpack.c.l.b16 %v199
      %v342 = vunpack.c.l.b16 %v200
      %v343 = vunpack.c.l.b16 %v201
      %v344 = vunpack.c.l.b16 %v202
      %v345 = vunpack.c.l.b16 %v203
      %v346 = vunpack.c.l.b16 %v204
      %v347 = vunpack.c.l.b16 %v205
      %v348 = vunpack.c.l.b16 %v206
      %v349 = vunpack.c.l.b16 %v207
      %v350 = vunpack.c.l.b16 %v208
      %v351 = vunpack.c.l.b16 %v209
      %v352 = vunpack.c.l.b16 %v210
      %v353 = vunpack.c.l.b16 %v211
      %v354 = vunpack.c.l.b16 %v212
      %v355 = vunpack.c.l.b16 %v213
      %v356 = vunpack.c.l.b16 %v214
      %v357 = vunpack.c.l.b16 %v215
      %v358 = vunpack.c.l.b16 %v216
      %v359 = vunpack.c.l.b16 %v217
      %v360 = vunpack.c.l.b16 %v218
      %v361 = vunpack.c.l.b16 %v219
      %v362 = vunpack.c.l.b16 %v220
      %v363 = vunpack.c.l.b16 %v221
      %v364 = vunpack.c.l.b16 %v222
      %v365 = vunpack.c.l.b16 %v223
      %v366 = vunpack.c.l.b16 %v224
      %v367 = vunpack.c.l.b16 %v225
      %v368 = vunpack.c.l.b16 %v226
      %v369 = vunpack.c.l.b16 %v227
      %v370 = vunpack.c.l.b16 %v228
      %v371 = vunpack.c.l.b16 %v229
      %v372 = vunpack.c.l.b16 %v230
      %v373 = vunpack.c.l.b16 %v231
      %v374 = vunpack.c.l.b16 %v232
      %v375 = vunpack.c.l.b16 %v233
      %v376 = vunpack.c.l.b16 %v234
      %v377 = vunpack.c.l.b16 %v235
      %v378 = vunpack.c.l.b16 %v236
      %v379 = vunpack.c.l.b16 %v237
      %v380 = vunpack.c.l.b16 %v238
      %v381 = vpack.c.b16 %v318, %v317
      %v382 = vpack.c.b16 %v320, %v319
      %v383 = vpack.c.b16 %v322, %v321
      %v384 = vpack.c.b16 %v324, %v323
      %v385 = vpack.c.b16 %v326, %v325
      %v386 = vpack.c.b16 %v328, %v327
      %v387 = vpack.c.b16 %v330, %v329
      %v388 = vpack.c.b16 %v332, %v331
      %v389 = vpack.c.b16 %v334, %v333
      %v390 = vpack.c.b16 %v336, %v335
      %v391 = vpack.c.b16 %v338, %v337
      %v392 = vpack.c.b16 %v340, %v339
      %v393 = vpack.c.b16 %v342, %v341
      %v394 = vpack.c.b16 %v344, %v343
      %v395 = vpack.c.b16 %v346, %v345
      %v396 = vpack.c.b16 %v348, %v347
      %v397 = vpack.c.b16 %v350, %v349
      %v398 = vpack.c.b16 %v352, %v351
      %v399 = vpack.c.b16 %v354, %v353
      %v400 = vpack.c.b16 %v356, %v355
      %v401 = vpack.c.b16 %v358, %v357
      %v402 = vpack.c.b16 %v360, %v359
      %v403 = vpack.c.b16 %v362, %v361
      %v404 = vpack.c.b16 %v364, %v363
      %v405 = vpack.c.b16 %v366, %v365
      %v406 = vpack.c.b16 %v368, %v367
      %v407 = vpack.c.b16 %v370, %v369
      %v408 = vpack.c.b16 %v372, %v371
      %v409 = vpack.c.b16 %v374, %v373
      %v410 = vpack.c.b16 %v376, %v375
      %v411 = vpack.c.b16 %v378, %v377
      %v412 = vpack.c.b16 %v380, %v379
      %v423 = vunpack.c.l.b16 %v239
      %v424 = vunpack.c.l.b16 %v240
      %v425 = vunpack.c.l.b16 %v241
      %v426 = vunpack.c.l.b16 %v242
      %v427 = vunpack.c.l.b16 %v243
      %v428 = vunpack.c.l.b16 %v244
      %v429 = vunpack.c.l.b16 %v245
      %v430 = vunpack.c.l.b16 %v246
      %v431 = vunpack.c.l.b16 %v247
      %v432 = vunpack.c.l.b16 %v248
      %v433 = vpack.c.b16 %v424, %v423
      %v434 = vpack.c.b16 %v426, %v425
      %v435 = vpack.c.b16 %v428, %v427
      %v436 = vpack.c.b16 %v430, %v429
      %v437 = vpack.c.b16 %v432, %v431
      %vm443 = vcmask 654336
      %v445 = vsel %vm443, %v381, 0
      %v448 = vsel %vm443, %v382, 0
      %v451 = vsel %vm443, %v383, 0
      %v454 = vsel %vm443, %v384, 0
      %v457 = vsel %vm443, %v385, 0
      %v460 = vsel %vm443, %v386, 0
      %v463 = vsel %vm443, %v387, 0
      %v466 = vsel %vm443, %v388, 0
      %v469 = vsel %vm443, %v389, 0
      %v472 = vsel %vm443, %v390, 0
      %v475 = vsel %vm443, %v391, 0
      %v478 = vsel %vm443, %v392, 0
      %v481 = vsel %vm443, %v393, 0
      %v484 = vsel %vm443, %v394, 0
      %v487 = vsel %vm443, %v395, 0
      %v490 = vsel %vm443, %v396, 0
      %v493 = vsel %vm443, %v397, 0
      %v496 = vsel %vm443, %v398, 0
      %v499 = vsel %vm443, %v399, 0
      %v502 = vsel %vm443, %v400, 0
      %v505 = vsel %vm443, %v401, 0
      %v508 = vsel %vm443, %v402, 0
      %v511 = vsel %vm443, %v403, 0
      %v514 = vsel %vm443, %v404, 0
      %v517 = vsel %vm443, %v405, 0
      %v520 = vsel %vm443, %v406, 0
      %v523 = vsel %vm443, %v407, 0
      %v526 = vsel %vm443, %v408, 0
      %v529 = vsel %vm443, %v409, 0
      %v532 = vsel %vm443, %v410, 0
      %v535 = vsel %vm443, %v411, 0
      %v538 = vsel %vm443, %v412, 0
      %540 = vmatpush.bf16.msra.mxu0 0
      %541 = vmatpush.bf16.msra.mxu0 0
      %542 = vmatpush.bf16.msra.mxu0 0
      %543 = vmatpush.bf16.msra.mxu0 %v437
      %544 = vmatpush.bf16.msra.mxu0 %v436
      %545 = vmatpush.bf16.msra.mxu0 %v435
      %546 = vmatpush.bf16.msra.mxu0 %v434
      %547 = vmatpush.bf16.msra.mxu0 %v433
      %548 = vmatmul.bf16.gmra.mxu0 %v445
      %v549 = vpop.f32.mrf.mxu0
      %v550 = vadd.f32 %v251, %v549
      %v551 = vpop.f32.mrf.mxu0
      %v552 = vadd.f32 %v251, %v551
      %553 = vmatmul.bf16.gmra.mxu0 %v448
      %v554 = vpop.f32.mrf.mxu0
      %v555 = vadd.f32 %v251, %v554
      %v556 = vpop.f32.mrf.mxu0
      %v557 = vadd.f32 %v251, %v556
      %558 = vmatmul.bf16.gmra.mxu0 %v451
      %v559 = vpop.f32.mrf.mxu0
      %v560 = vadd.f32 %v251, %v559
      %v561 = vpop.f32.mrf.mxu0
      %v562 = vadd.f32 %v251, %v561
      %563 = vmatmul.bf16.gmra.mxu0 %v454
      %v564 = vpop.f32.mrf.mxu0
      %v565 = vadd.f32 %v251, %v564
      %v566 = vpop.f32.mrf.mxu0
      %v567 = vadd.f32 %v251, %v566
      %568 = vmatmul.bf16.gmra.mxu0 %v457
      %v569 = vpop.f32.mrf.mxu0
      %v570 = vadd.f32 %v251, %v569
      %v571 = vpop.f32.mrf.mxu0
      %v572 = vadd.f32 %v251, %v571
      %573 = vmatmul.bf16.gmra.mxu0 %v460
      %v574 = vpop.f32.mrf.mxu0
      %v575 = vadd.f32 %v251, %v574
      %v576 = vpop.f32.mrf.mxu0
      %v577 = vadd.f32 %v251, %v576
      %578 = vmatmul.bf16.gmra.mxu0 %v463
      %v579 = vpop.f32.mrf.mxu0
      %v580 = vadd.f32 %v251, %v579
      %v581 = vpop.f32.mrf.mxu0
      %v582 = vadd.f32 %v251, %v581
      %583 = vmatmul.bf16.gmra.mxu0 %v466
      %v584 = vpop.f32.mrf.mxu0
      %v585 = vadd.f32 %v251, %v584
      %v586 = vpop.f32.mrf.mxu0
      %v587 = vadd.f32 %v251, %v586
      %588 = vmatmul.bf16.gmra.mxu0 %v469
      %v589 = vpop.f32.mrf.mxu0
      %v590 = vadd.f32 %v251, %v589
      %v591 = vpop.f32.mrf.mxu0
      %v592 = vadd.f32 %v251, %v591
      %593 = vmatmul.bf16.gmra.mxu0 %v472
      %v594 = vpop.f32.mrf.mxu0
      %v595 = vadd.f32 %v251, %v594
      %v596 = vpop.f32.mrf.mxu0
      %v597 = vadd.f32 %v251, %v596
      %598 = vmatmul.bf16.gmra.mxu0 %v475
      %v599 = vpop.f32.mrf.mxu0
      %v600 = vadd.f32 %v251, %v599
      %v601 = vpop.f32.mrf.mxu0
      %v602 = vadd.f32 %v251, %v601
      %603 = vmatmul.bf16.gmra.mxu0 %v478
      %v604 = vpop.f32.mrf.mxu0
      %v605 = vadd.f32 %v251, %v604
      %v606 = vpop.f32.mrf.mxu0
      %v607 = vadd.f32 %v251, %v606
      %608 = vmatmul.bf16.gmra.mxu0 %v481
      %v609 = vpop.f32.mrf.mxu0
      %v610 = vadd.f32 %v251, %v609
      %v611 = vpop.f32.mrf.mxu0
      %v612 = vadd.f32 %v251, %v611
      %613 = vmatmul.bf16.gmra.mxu0 %v484
      %v614 = vpop.f32.mrf.mxu0
      %v615 = vadd.f32 %v251, %v614
      %v616 = vpop.f32.mrf.mxu0
      %v617 = vadd.f32 %v251, %v616
      %618 = vmatmul.bf16.gmra.mxu0 %v487
      %v619 = vpop.f32.mrf.mxu0
      %v620 = vadd.f32 %v251, %v619
      %v621 = vpop.f32.mrf.mxu0
      %v622 = vadd.f32 %v251, %v621
      %623 = vmatmul.bf16.gmra.mxu0 %v490
      %v624 = vpop.f32.mrf.mxu0
      %v625 = vadd.f32 %v251, %v624
      %v626 = vpop.f32.mrf.mxu0
      %v627 = vadd.f32 %v251, %v626
      %628 = vmatmul.bf16.gmra.mxu0 %v493
      %v629 = vpop.f32.mrf.mxu0
      %v630 = vadd.f32 %v251, %v629
      %v631 = vpop.f32.mrf.mxu0
      %v632 = vadd.f32 %v251, %v631
      %633 = vmatmul.bf16.gmra.mxu0 %v496
      %v634 = vpop.f32.mrf.mxu0
      %v635 = vadd.f32 %v251, %v634
      %v636 = vpop.f32.mrf.mxu0
      %v637 = vadd.f32 %v251, %v636
      %638 = vmatmul.bf16.gmra.mxu0 %v499
      %v639 = vpop.f32.mrf.mxu0
      %v640 = vadd.f32 %v251, %v639
      %v641 = vpop.f32.mrf.mxu0
      %v642 = vadd.f32 %v251, %v641
      %643 = vmatmul.bf16.gmra.mxu0 %v502
      %v644 = vpop.f32.mrf.mxu0
      %v645 = vadd.f32 %v251, %v644
      %v646 = vpop.f32.mrf.mxu0
      %v647 = vadd.f32 %v251, %v646
      %648 = vmatmul.bf16.gmra.mxu0 %v505
      %v649 = vpop.f32.mrf.mxu0
      %v650 = vadd.f32 %v251, %v649
      %v651 = vpop.f32.mrf.mxu0
      %v652 = vadd.f32 %v251, %v651
      %653 = vmatmul.bf16.gmra.mxu0 %v508
      %v654 = vpop.f32.mrf.mxu0
      %v655 = vadd.f32 %v251, %v654
      %v656 = vpop.f32.mrf.mxu0
      %v657 = vadd.f32 %v251, %v656
      %658 = vmatmul.bf16.gmra.mxu0 %v511
      %v659 = vpop.f32.mrf.mxu0
      %v660 = vadd.f32 %v251, %v659
      %v661 = vpop.f32.mrf.mxu0
      %v662 = vadd.f32 %v251, %v661
      %663 = vmatmul.bf16.gmra.mxu0 %v514
      %v664 = vpop.f32.mrf.mxu0
      %v665 = vadd.f32 %v251, %v664
      %v666 = vpop.f32.mrf.mxu0
      %v667 = vadd.f32 %v251, %v666
      %668 = vmatmul.bf16.gmra.mxu0 %v517
      %v669 = vpop.f32.mrf.mxu0
      %v670 = vadd.f32 %v251, %v669
      %v671 = vpop.f32.mrf.mxu0
      %v672 = vadd.f32 %v251, %v671
      %673 = vmatmul.bf16.gmra.mxu0 %v520
      %v674 = vpop.f32.mrf.mxu0
      %v675 = vadd.f32 %v251, %v674
      %v676 = vpop.f32.mrf.mxu0
      %v677 = vadd.f32 %v251, %v676
      %678 = vmatmul.bf16.gmra.mxu0 %v523
      %v679 = vpop.f32.mrf.mxu0
      %v680 = vadd.f32 %v251, %v679
      %v681 = vpop.f32.mrf.mxu0
      %v682 = vadd.f32 %v251, %v681
      %683 = vmatmul.bf16.gmra.mxu0 %v526
      %v684 = vpop.f32.mrf.mxu0
      %v685 = vadd.f32 %v251, %v684
      %v686 = vpop.f32.mrf.mxu0
      %v687 = vadd.f32 %v251, %v686
      %688 = vmatmul.bf16.gmra.mxu0 %v529
      %v689 = vpop.f32.mrf.mxu0
      %v690 = vadd.f32 %v251, %v689
      %v691 = vpop.f32.mrf.mxu0
      %v692 = vadd.f32 %v251, %v691
      %693 = vmatmul.bf16.gmra.mxu0 %v532
      %v694 = vpop.f32.mrf.mxu0
      %v695 = vadd.f32 %v251, %v694
      %v696 = vpop.f32.mrf.mxu0
      %v697 = vadd.f32 %v251, %v696
      %698 = vmatmul.bf16.gmra.mxu0 %v535
      %v699 = vpop.f32.mrf.mxu0
      %v700 = vadd.f32 %v251, %v699
      %v701 = vpop.f32.mrf.mxu0
      %v702 = vadd.f32 %v251, %v701
      %703 = vmatmul.bf16.gmra.mxu0 %v538
      %v704 = vpop.f32.mrf.mxu0
      %v705 = vadd.f32 %v251, %v704
      %v706 = vpop.f32.mrf.mxu0
      %v707 = vadd.f32 %v251, %v706
      %708 = vdwg.mxu0
      %v709 = vtanh.pop %v550
      %v710 = vtanh.pop %v552
      %v711 = vtanh.pop %v555
      %v712 = vtanh.pop %v557
      %v713 = vtanh.pop %v560
      %v714 = vtanh.pop %v562
      %v715 = vtanh.pop %v565
      %v716 = vtanh.pop %v567
      %v717 = vtanh.pop %v570
      %v718 = vtanh.pop %v572
      %v719 = vtanh.pop %v575
      %v720 = vtanh.pop %v577
      %v721 = vtanh.pop %v580
      %v722 = vtanh.pop %v582
      %v723 = vtanh.pop %v585
      %v724 = vtanh.pop %v587
      %v725 = vtanh.pop %v590
      %v726 = vtanh.pop %v592
      %v727 = vtanh.pop %v595
      %v728 = vtanh.pop %v597
      %v729 = vtanh.pop %v600
      %v730 = vtanh.pop %v602
      %v731 = vtanh.pop %v605
      %v732 = vtanh.pop %v607
      %v733 = vtanh.pop %v610
      %v734 = vtanh.pop %v612
      %v735 = vtanh.pop %v615
      %v736 = vtanh.pop %v617
      %v737 = vtanh.pop %v620
      %v738 = vtanh.pop %v622
      %v739 = vtanh.pop %v625
      %v740 = vtanh.pop %v627
      %v741 = vtanh.pop %v630
      %v742 = vtanh.pop %v632
      %v743 = vtanh.pop %v635
      %v744 = vtanh.pop %v637
      %v745 = vtanh.pop %v640
      %v746 = vtanh.pop %v642
      %v747 = vtanh.pop %v645
      %v748 = vtanh.pop %v647
      %v749 = vtanh.pop %v650
      %v750 = vtanh.pop %v652
      %v751 = vtanh.pop %v655
      %v752 = vtanh.pop %v657
      %v753 = vtanh.pop %v660
      %v754 = vtanh.pop %v662
      %v755 = vtanh.pop %v665
      %v756 = vtanh.pop %v667
      %v757 = vtanh.pop %v670
      %v758 = vtanh.pop %v672
      %v759 = vtanh.pop %v675
      %v760 = vtanh.pop %v677
      %v761 = vtanh.pop %v680
      %v762 = vtanh.pop %v682
      %v763 = vtanh.pop %v685
      %v764 = vtanh.pop %v687
      %v765 = vtanh.pop %v690
      %v766 = vtanh.pop %v692
      %v767 = vtanh.pop %v695
      %v768 = vtanh.pop %v697
      %v769 = vtanh.pop %v700
      %v770 = vtanh.pop %v702
      %v771 = vtanh.pop %v705
      %v772 = vtanh.pop %v707
      %v773 = vpack.c.bf16 %v709, %v709
      %v774 = vpack.c.bf16 %v710, %v710
      %v775 = vpack.c.bf16 %v711, %v711
      %v776 = vpack.c.bf16 %v712, %v712
      %v777 = vpack.c.bf16 %v713, %v713
      %v778 = vpack.c.bf16 %v714, %v714
      %v779 = vpack.c.bf16 %v715, %v715
      %v780 = vpack.c.bf16 %v716, %v716
      %v781 = vpack.c.bf16 %v717, %v717
      %v782 = vpack.c.bf16 %v718, %v718
      %v783 = vpack.c.bf16 %v719, %v719
      %v784 = vpack.c.bf16 %v720, %v720
      %v785 = vpack.c.bf16 %v721, %v721
      %v786 = vpack.c.bf16 %v722, %v722
      %v787 = vpack.c.bf16 %v723, %v723
      %v788 = vpack.c.bf16 %v724, %v724
      %v789 = vpack.c.bf16 %v725, %v725
      %v790 = vpack.c.bf16 %v726, %v726
      %v791 = vpack.c.bf16 %v727, %v727
      %v792 = vpack.c.bf16 %v728, %v728
      %v793 = vpack.c.bf16 %v729, %v729
      %v794 = vpack.c.bf16 %v730, %v730
      %v795 = vpack.c.bf16 %v731, %v731
      %v796 = vpack.c.bf16 %v732, %v732
      %v797 = vpack.c.bf16 %v733, %v733
      %v798 = vpack.c.bf16 %v734, %v734
      %v799 = vpack.c.bf16 %v735, %v735
      %v800 = vpack.c.bf16 %v736, %v736
      %v801 = vpack.c.bf16 %v737, %v737
      %v802 = vpack.c.bf16 %v738, %v738
      %v803 = vpack.c.bf16 %v739, %v739
      %v804 = vpack.c.bf16 %v740, %v740
      %v805 = vpack.c.bf16 %v741, %v741
      %v806 = vpack.c.bf16 %v742, %v742
      %v807 = vpack.c.bf16 %v743, %v743
      %v808 = vpack.c.bf16 %v744, %v744
      %v809 = vpack.c.bf16 %v745, %v745
      %v810 = vpack.c.bf16 %v746, %v746
      %v811 = vpack.c.bf16 %v747, %v747
      %v812 = vpack.c.bf16 %v748, %v748
      %v813 = vpack.c.bf16 %v749, %v749
      %v814 = vpack.c.bf16 %v750, %v750
      %v815 = vpack.c.bf16 %v751, %v751
      %v816 = vpack.c.bf16 %v752, %v752
      %v817 = vpack.c.bf16 %v753, %v753
      %v818 = vpack.c.bf16 %v754, %v754
      %v819 = vpack.c.bf16 %v755, %v755
      %v820 = vpack.c.bf16 %v756, %v756
      %v821 = vpack.c.bf16 %v757, %v757
      %v822 = vpack.c.bf16 %v758, %v758
      %v823 = vpack.c.bf16 %v759, %v759
      %v824 = vpack.c.bf16 %v760, %v760
      %v825 = vpack.c.bf16 %v761, %v761
      %v826 = vpack.c.bf16 %v762, %v762
      %v827 = vpack.c.bf16 %v763, %v763
      %v828 = vpack.c.bf16 %v764, %v764
      %v829 = vpack.c.bf16 %v765, %v765
      %v830 = vpack.c.bf16 %v766, %v766
      %v831 = vpack.c.bf16 %v767, %v767
      %v832 = vpack.c.bf16 %v768, %v768
      %v833 = vpack.c.bf16 %v769, %v769
      %v834 = vpack.c.bf16 %v770, %v770
      %v835 = vpack.c.bf16 %v771, %v771
      %v836 = vpack.c.bf16 %v772, %v772
      %837 = vst [vmem:[%s172] sm:$0xf] %v773
      %838 = vst [vmem:[%s172 + $0x4] sm:$0xf] %v774
      %839 = vst [vmem:[%s172 + $0x8] sm:$0xf] %v775
      %840 = vst [vmem:[%s172 + $0xc] sm:$0xf] %v776
      %841 = vst [vmem:[%s172 + $0x10] sm:$0xf] %v777
      %842 = vst [vmem:[%s172 + $0x14] sm:$0xf] %v778
      %843 = vst [vmem:[%s172 + $0x18] sm:$0xf] %v779
      %844 = vst [vmem:[%s172 + $0x1c] sm:$0xf] %v780
      %845 = vst [vmem:[%s172 + $0x20] sm:$0xf] %v781
      %846 = vst [vmem:[%s172 + $0x24] sm:$0xf] %v782
      %847 = vst [vmem:[%s172 + $0x28] sm:$0xf] %v783
      %848 = vst [vmem:[%s172 + $0x2c] sm:$0xf] %v784
      %849 = vst [vmem:[%s172 + $0x30] sm:$0xf] %v785
      %850 = vst [vmem:[%s172 + $0x34] sm:$0xf] %v786
      %851 = vst [vmem:[%s172 + $0x38] sm:$0xf] %v787
      %852 = vst [vmem:[%s172 + $0x3c] sm:$0xf] %v788
      %853 = vst [vmem:[%s172 + $0x40] sm:$0xf] %v789
      %854 = vst [vmem:[%s172 + $0x44] sm:$0xf] %v790
      %855 = vst [vmem:[%s172 + $0x48] sm:$0xf] %v791
      %856 = vst [vmem:[%s172 + $0x4c] sm:$0xf] %v792
      %857 = vst [vmem:[%s172 + $0x50] sm:$0xf] %v793
      %858 = vst [vmem:[%s172 + $0x54] sm:$0xf] %v794
      %859 = vst [vmem:[%s172 + $0x58] sm:$0xf] %v795
      %860 = vst [vmem:[%s172 + $0x5c] sm:$0xf] %v796
      %861 = vst [vmem:[%s172 + $0x60] sm:$0xf] %v797
      %862 = vst [vmem:[%s172 + $0x64] sm:$0xf] %v798
      %863 = vst [vmem:[%s172 + $0x68] sm:$0xf] %v799
      %864 = vst [vmem:[%s172 + $0x6c] sm:$0xf] %v800
      %865 = vst [vmem:[%s172 + $0x70] sm:$0xf] %v801
      %866 = vst [vmem:[%s172 + $0x74] sm:$0xf] %v802
      %867 = vst [vmem:[%s172 + $0x78] sm:$0xf] %v803
      %868 = vst [vmem:[%s172 + $0x7c] sm:$0xf] %v804
      %869 = vst [vmem:[%s172 + $0x80] sm:$0xf] %v805
      %870 = vst [vmem:[%s172 + $0x84] sm:$0xf] %v806
      %871 = vst [vmem:[%s172 + $0x88] sm:$0xf] %v807
      %872 = vst [vmem:[%s172 + $0x8c] sm:$0xf] %v808
      %873 = vst [vmem:[%s172 + $0x90] sm:$0xf] %v809
      %874 = vst [vmem:[%s172 + $0x94] sm:$0xf] %v810
      %875 = vst [vmem:[%s172 + $0x98] sm:$0xf] %v811
      %876 = vst [vmem:[%s172 + $0x9c] sm:$0xf] %v812
      %877 = vst [vmem:[%s172 + $0xa0] sm:$0xf] %v813
      %878 = vst [vmem:[%s172 + $0xa4] sm:$0xf] %v814
      %879 = vst [vmem:[%s172 + $0xa8] sm:$0xf] %v815
      %880 = vst [vmem:[%s172 + $0xac] sm:$0xf] %v816
      %881 = vst [vmem:[%s172 + $0xb0] sm:$0xf] %v817
      %882 = vst [vmem:[%s172 + $0xb4] sm:$0xf] %v818
      %883 = vst [vmem:[%s172 + $0xb8] sm:$0xf] %v819
      %884 = vst [vmem:[%s172 + $0xbc] sm:$0xf] %v820
      %885 = vst [vmem:[%s172 + $0xc0] sm:$0xf] %v821
      %886 = vst [vmem:[%s172 + $0xc4] sm:$0xf] %v822
      %887 = vst [vmem:[%s172 + $0xc8] sm:$0xf] %v823
      %888 = vst [vmem:[%s172 + $0xcc] sm:$0xf] %v824
      %889 = vst [vmem:[%s172 + $0xd0] sm:$0xf] %v825
      %890 = vst [vmem:[%s172 + $0xd4] sm:$0xf] %v826
      %891 = vst [vmem:[%s172 + $0xd8] sm:$0xf] %v827
      %892 = vst [vmem:[%s172 + $0xdc] sm:$0xf] %v828
      %893 = vst [vmem:[%s172 + $0xe0] sm:$0xf] %v829
      %894 = vst [vmem:[%s172 + $0xe4] sm:$0xf] %v830
      %895 = vst [vmem:[%s172 + $0xe8] sm:$0xf] %v831
      %896 = vst [vmem:[%s172 + $0xec] sm:$0xf] %v832
      %897 = vst [vmem:[%s172 + $0xf0] sm:$0xf] %v833
      %898 = vst [vmem:[%s172 + $0xf4] sm:$0xf] %v834
      %899 = vst [vmem:[%s172 + $0xf8] sm:$0xf] %v835
      %900 = vst [vmem:[%s172 + $0xfc] sm:$0xf] %v836
      %s901 = smul.u32 64, %s14
      %p902 = scmp.lt.s32.totalorder %s901, 255
      %s903 = scalar_select %p902, %s901, 255
      %s904 = smul.addr %s903, 4
      %s905 = scalar_lea.vmem %s3, %s904
      // Predicated region
      $region33: #{_lambda_.17} parent=31 // pred_check
        %p906 = pneg %p100
      $region34: #{_lambda_.17} parent=31 // pred_check_branch
        %908 = sbr.rel (%p906) target = $region36
      $region35: #{_lambda_.17} parent=31 // pred_region
        %s909 = smul.u32 64, %s14
      $region36: #{_lambda_.17} parent=31 // pred_fallthru
        _
    $region32: #{_lambda_.17} parent=5 // pred_fallthru
      _
    %p910 = scmp.le.s32.totalorder 2, %s9
    // Predicated region
    $region37: #{_lambda_.17} parent=5 // pred_check
      %p911 = pneg %p910
    $region38: #{_lambda_.17} parent=5 // pred_check_branch
      %913 = sbr.rel (%p911) target = $region40
    $region39: #{_lambda_.17} parent=5 // pred_region
      %s914 = ssub.s32 %s9, 2
      // Predicated region
      $region41: #{_lambda_.17} parent=39 // pred_check
        %p915 = pneg %p106
      $region42: #{_lambda_.17} parent=39 // pred_check_branch
        %917 = sbr.rel (%p915) target = $region44
      $region43: #{_lambda_.17} parent=39 // pred_region
        %s918 = smul.u32 64, %s15
        %p919 = scmp.lt.s32.totalorder %s918, 255
        %s920 = scalar_select %p919, %s918, 255
        %s921 = smul.addr %s920, 4
        %s922 = scalar_lea.vmem %s3, %s921
      $region44: #{_lambda_.17} parent=39 // pred_fallthru
        _
    $region40: #{_lambda_.17} parent=5 // pred_fallthru
      _
  $region6: #{_lambda_.17} parent=0 // loop_footer
    %s13 = sadd.s32 1, %s9
  $region7: #{_lambda_.17} parent=0 // loop_footer_branch
    %8 = sbr.rel target = $region3
  $region8: #{_lambda_.17} parent=0 // loop_exit
    _

</llo_original>
